<compile_context>
chip_gen: v7x
topology: tpu7x:2x2x1
jax: 0.10.0
libtpu: 0.0.40
codegen_flags: <defaults>
</compile_context>

<pallas_src>
import functools

import jax
import jax.numpy as jnp
from jax.experimental import pallas as pl
from jax.experimental.pallas import tpu as pltpu


def _round_up(v, m):
    return (v + m - 1) // m * m


def _pick_row_tile(h, wpad, cin_p, max_rows=2048, max_bytes=4 << 20):
    """Largest divisor of h whose halo'd bf16 activation tile stays small in VMEM."""
    best = 1
    for th in range(1, h + 1):
        if h % th:
            continue
        if th * wpad <= max_rows and (th + 3) * wpad * cin_p * 2 <= max_bytes:
            best = th
    return best


def fold_bn(gamma, beta, mean, var, eps=1e-5):
    scale = gamma / jnp.sqrt(var + eps)
    bias = beta - mean * scale
    return scale, bias


# ----------------------------------------------------------------------------
# Fused Bottleneck kernel
#   grid = (g, j):  g = batch*row-tile ("parallel"), j = Cout tile ("arbitrary")
# ----------------------------------------------------------------------------
def _bottleneck_kernel(x_ref, w1_ref, w2_ref, b2_ref, w3_ref, b3_ref, r_ref,
                       o_ref, y1_ref, y2_ref, *, th, wpad):
    l_out = th * wpad

    # conv1 + conv2 are computed once per row tile (j == 0) and cached in VMEM.
    @pl.when(pl.program_id(1) == 0)
    def _():
        # conv1 (1x1) + bn1 + relu.  bn1 scale folded into w1; bn1 bias rides on
        # the constant indicator channel so spatial zero-padding stays exactly 0.
        a1 = jnp.dot(x_ref[0], w1_ref[...], preferred_element_type=jnp.float32)
        y1_ref[...] = jnp.maximum(a1, 0.0).astype(y1_ref.dtype)

        # conv2 (3x3, pad=1) + bn2 + relu: nine shifted matmuls over the flat
        # (rows * padded_width) layout.  Out-of-image columns produce garbage
        # values that the wrapper slices away.
        acc = jnp.dot(y1_ref[pl.ds(0, l_out), :], w2_ref[0],
                      preferred_element_type=jnp.float32)
        for ky in range(3):
            for kx in range(3):
                if ky == 0 and kx == 0:
                    continue
                s = ky * wpad + kx
                acc = acc + jnp.dot(y1_ref[pl.ds(s, l_out), :],
                                    w2_ref[ky * 3 + kx],
                                    preferred_element_type=jnp.float32)
        y2_ref[...] = jnp.maximum(acc + b2_ref[...], 0.0).astype(y2_ref.dtype)

    # conv3 (1x1) + bn3 + residual + relu for this Cout tile.
    a3 = jnp.dot(y2_ref[...], w3_ref[...], preferred_element_type=jnp.float32)
    out = a3 + b3_ref[...] + r_ref[0]
    o_ref[0] = jnp.maximum(out, 0.0).astype(o_ref.dtype)


# ----------------------------------------------------------------------------
# Wrapper: layout prep (NCHW->NHWC, channel/spatial padding, halo'd row tiles),
# BN folding, and the single pallas_call.
# ----------------------------------------------------------------------------
def bottleneck_forward(x_nchw, params):
    N, Cin, H, W = x_nchw.shape

    w1 = params["w1_oihw"][:, :, 0, 0].T                    # (Cin, width)
    w2 = jnp.transpose(params["w2_oihw"], (2, 3, 1, 0))     # (ky, kx, width, width)
    w3 = params["w3_oihw"][:, :, 0, 0].T                    # (width, Cout)
    width = w1.shape[1]
    Cout = w3.shape[1]

    # TODO(synk): stride>1 / dilation>1 / groups>1 and the explicit downsample
    # branch are not implemented (default Bottleneck ctor path needs Cin == 4*planes).
    if Cin != Cout:
        raise NotImplementedError("downsample branch (Cin != expansion*planes)")

    s1, b1 = fold_bn(*params["bn1"])
    s2, b2 = fold_bn(*params["bn2"])
    s3, b3 = fold_bn(*params["bn3"])

    cin_p = _round_up(Cin + 1, 128)      # +1 indicator channel (carries bn1 bias)
    wid_p = _round_up(width, 128)
    cout_p = _round_up(Cout, 128)
    wpad = W + 2                          # 1 col zero-pad each side for the 3x3
    th = _pick_row_tile(H, wpad, cin_p)
    nt = H // th
    G = N * nt
    l_in = (th + 3) * wpad               # halo'd tile rows (1 top, 2 bottom slack)
    l_out = th * wpad

    # ---- weights: fold BN scale, pad to lane-dense shapes, cast to bf16 ----
    w1f = jnp.zeros((cin_p, wid_p), jnp.float32)
    w1f = w1f.at[:Cin, :width].set(w1 * s1[None, :])
    w1f = w1f.at[Cin, :width].set(b1)                 # bias via indicator channel
    w1b = w1f.astype(jnp.bfloat16)

    w2f = jnp.zeros((9, wid_p, wid_p), jnp.float32)
    w2f = w2f.at[:, :width, :width].set(
        w2.reshape(9, width, width) * s2[None, None, :])
    w2b = w2f.astype(jnp.bfloat16)
    b2f = jnp.zeros((1, wid_p), jnp.float32).at[0, :width].set(b2)

    w3f = jnp.zeros((wid_p, cout_p), jnp.float32)
    w3f = w3f.at[:width, :Cout].set(w3 * s3[None, :])
    w3b = w3f.astype(jnp.bfloat16)
    b3f = jnp.zeros((1, cout_p), jnp.float32).at[0, :Cout].set(b3)

    # ---- activations: NHWC, indicator channel, spatial pad, halo'd row tiles ----
    x_nhwc = jnp.transpose(x_nchw, (0, 2, 3, 1)).astype(jnp.float32)
    ind = jnp.ones((N, H, W, 1), jnp.float32)
    x_aug = jnp.concatenate([x_nhwc, ind], axis=-1)
    x_aug = jnp.pad(x_aug, ((0, 0), (1, 2), (1, 1), (0, cin_p - (Cin + 1))))
    x_tiles = jnp.concatenate(
        [x_aug[:, i * th:i * th + th + 3][:, None] for i in range(nt)], axis=1)
    x_tiles = x_tiles.reshape(G, l_in, cin_p).astype(jnp.bfloat16)

    # residual laid out like the kernel's flat output (garbage cols ignored later)
    res = jnp.pad(x_nhwc, ((0, 0), (0, 0), (0, wpad - W), (0, cout_p - Cin)))
    res = res.reshape(G, l_out, cout_p)

    tn = 256 if cout_p % 256 == 0 else 128
    nj = cout_p // tn

    kernel = functools.partial(_bottleneck_kernel, th=th, wpad=wpad)
    out_flat = pl.pallas_call(
        kernel,
        out_shape=jax.ShapeDtypeStruct((G, l_out, cout_p), jnp.float32),
        grid_spec=pltpu.PrefetchScalarGridSpec(
            num_scalar_prefetch=0,
            grid=(G, nj),
            in_specs=[
                pl.BlockSpec((1, l_in, cin_p), lambda g, j: (g, 0, 0)),   # x tile (halo'd)
                pl.BlockSpec((cin_p, wid_p), lambda g, j: (0, 0)),        # w1*s1 (+b1 row)
                pl.BlockSpec((9, wid_p, wid_p), lambda g, j: (0, 0, 0)),  # w2*s2
                pl.BlockSpec((1, wid_p), lambda g, j: (0, 0)),            # b2
                pl.BlockSpec((wid_p, tn), lambda g, j: (0, j)),           # w3*s3 (Cout tile)
                pl.BlockSpec((1, tn), lambda g, j: (0, j)),               # b3
                pl.BlockSpec((1, l_out, tn), lambda g, j: (g, 0, j)),     # residual
            ],
            out_specs=pl.BlockSpec((1, l_out, tn), lambda g, j: (g, 0, j)),
            scratch_shapes=[
                pltpu.VMEM((l_in, wid_p), jnp.bfloat16),   # conv1 activation (+halo)
                pltpu.VMEM((l_out, wid_p), jnp.bfloat16),  # conv2 activation (cached)
            ],
        ),
        compiler_params=pltpu.CompilerParams(
            dimension_semantics=("parallel", "arbitrary"),
            vmem_limit_bytes=32 * 1024 * 1024,
        ),
    )(x_tiles, w1b, w2b, b2f, w3b, b3f, res)

    out = out_flat.reshape(N, H, wpad, cout_p)[:, :, :W, :Cout]
    return jnp.transpose(out, (0, 3, 1, 2))                  # NHWC -> NCHW


# ----------------------------------------------------------------------------
# Reference (plain JAX f32 convolutions) for verification
# ----------------------------------------------------------------------------
def bottleneck_reference(x_nchw, params):
    def bn(y, p):
        g, b, m, v = p
        g = g.reshape(1, -1, 1, 1); b = b.reshape(1, -1, 1, 1)
        m = m.reshape(1, -1, 1, 1); v = v.reshape(1, -1, 1, 1)
        return g * (y - m) / jnp.sqrt(v + 1e-5) + b

    def conv(y, w_oihw, pad):
        return jax.lax.conv_general_dilated(
            y, w_oihw, window_strides=(1, 1), padding=pad,
            dimension_numbers=("NCHW", "OIHW", "NCHW"))

    identity = x_nchw
    out = jax.nn.relu(bn(conv(x_nchw, params["w1_oihw"], "VALID"), params["bn1"]))
    out = jax.nn.relu(bn(conv(out, params["w2_oihw"], "SAME"), params["bn2"]))
    out = bn(conv(out, params["w3_oihw"], "VALID"), params["bn3"])
    return jax.nn.relu(out + identity)


# ----------------------------------------------------------------------------
# Deterministic parameter construction
# ----------------------------------------------------------------------------
def make_params(key, in_planes, planes, base_width=64, groups=1):
    width = int(planes * (base_width / 64.0)) * groups
    out_planes = planes * 4  # expansion
    ks = jax.random.split(key, 6)

    def bn_params(k, c):
        k1, k2, k3, k4 = jax.random.split(k, 4)
        gamma = 0.5 + jax.random.uniform(k1, (c,), jnp.float32)
        beta = 0.1 * jax.random.normal(k2, (c,), jnp.float32)
        mean = 0.1 * jax.random.normal(k3, (c,), jnp.float32)
        var = 0.5 + jax.random.uniform(k4, (c,), jnp.float32)
        return (gamma, beta, mean, var)

    return {
        "w1_oihw": 0.2 * jax.random.normal(ks[0], (width, in_planes, 1, 1), jnp.float32),
        "w2_oihw": 0.2 * jax.random.normal(ks[1], (width, width, 3, 3), jnp.float32),
        "w3_oihw": 0.2 * jax.random.normal(ks[2], (out_planes, width, 1, 1), jnp.float32),
        "bn1": bn_params(ks[3], width),
        "bn2": bn_params(ks[4], width),
        "bn3": bn_params(ks[5], out_planes),
    }


if __name__ == "__main__":
    key = jax.random.PRNGKey(0)
    k_x, k_p = jax.random.split(key)

    # Bottleneck(in_planes=16, planes=4): width=4, out_planes=16, so the residual
    # add is valid with downsample=None, stride=1.
    N, C, H, W = 2, 16, 16, 16
    x = jax.random.normal(k_x, (N, C, H, W), jnp.float32)
    params = make_params(k_p, in_planes=C, planes=4)

    out = jax.block_until_ready(bottleneck_forward(x, params))
    ref = jax.block_until_ready(bottleneck_reference(x, params))

    assert out.shape == ref.shape == (N, 16, H, W)
    max_err = float(jnp.max(jnp.abs(out - ref)))
    assert jnp.allclose(out, ref, atol=1e-1, rtol=1e-1), max_err
    print("KERNEL_OK")
</pallas_src>

<mosaic_0001>
module attributes {stable_mosaic.version = 11 : i64} {
  func.func @_bottleneck_kernel(%arg0: i32, %arg1: i32, %arg2: memref<1x342x128xbf16, #tpu.memory_space<vmem>>, %arg3: memref<128x128xbf16, #tpu.memory_space<vmem>>, %arg4: memref<9x128x128xbf16, #tpu.memory_space<vmem>>, %arg5: memref<1x128xf32, #tpu.memory_space<vmem>>, %arg6: memref<128x128xbf16, #tpu.memory_space<vmem>>, %arg7: memref<1x128xf32, #tpu.memory_space<vmem>>, %arg8: memref<1x288x128xf32, #tpu.memory_space<vmem>>, %arg9: memref<1x288x128xf32, #tpu.memory_space<vmem>>, %arg10: memref<342x128xbf16, #tpu.memory_space<vmem>>, %arg11: memref<288x128xbf16, #tpu.memory_space<vmem>>) attributes {dimension_semantics = [#tpu.dimension_semantics<parallel>, #tpu.dimension_semantics<arbitrary>], iteration_bounds = array<i64: 2, 1>, scalar_prefetch = 0 : i64, scratch_operands = 2 : i64, tpu.core_type = #tpu.core_type<tc>, window_params = [{transform_indices = @transform_0, window_bounds = array<i64: 1, 342, 128>}, {pipeline_mode = #tpu.pipeline_mode<synchronous>, transform_indices = @transform_1, window_bounds = array<i64: 128, 128>}, {pipeline_mode = #tpu.pipeline_mode<synchronous>, transform_indices = @transform_2, window_bounds = array<i64: 9, 128, 128>}, {pipeline_mode = #tpu.pipeline_mode<synchronous>, transform_indices = @transform_3, window_bounds = array<i64: 1, 128>}, {transform_indices = @transform_4, window_bounds = array<i64: 128, 128>}, {transform_indices = @transform_5, window_bounds = array<i64: 1, 128>}, {transform_indices = @transform_6, window_bounds = array<i64: 1, 288, 128>}, {transform_indices = @transform_7, window_bounds = array<i64: 1, 288, 128>}]} {
    %c0_i32 = arith.constant 0 : i32
    %0 = arith.cmpi eq, %arg1, %c0_i32 : i32
    %1 = arith.extui %0 : i1 to i32
    %c0_i32_0 = arith.constant 0 : i32
    %2 = arith.cmpi ne, %1, %c0_i32_0 : i32
    scf.if %2 {
      %c0_13 = arith.constant 0 : index
      %c0_14 = arith.constant 0 : index
      %c0_15 = arith.constant 0 : index
      %17 = vector.load %arg2[%c0_13, %c0_14, %c0_15] : memref<1x342x128xbf16, #tpu.memory_space<vmem>>, vector<1x342x128xbf16>
      %18 = vector.shape_cast %17 : vector<1x342x128xbf16> to vector<342x128xbf16>
      %c0_16 = arith.constant 0 : index
      %c0_17 = arith.constant 0 : index
      %19 = vector.load %arg3[%c0_16, %c0_17] : memref<128x128xbf16, #tpu.memory_space<vmem>>, vector<128x128xbf16>
      %cst_18 = arith.constant dense<0.000000e+00> : vector<342x128xf32>
      %20 = tpu.matmul %18, %19, %cst_18 {dimension_numbers = #tpu.dot_dimension_numbers<[1], [0], [0], [1], [0, 0, 1, 1], [], []>} : vector<342x128xbf16>, vector<128x128xbf16>, vector<342x128xf32> -> vector<342x128xf32>
      %cst_19 = arith.constant 0.000000e+00 : f32
      %21 = vector.broadcast %cst_19 : f32 to vector<342x128xf32>
      %22 = arith.maximumf %20, %21 : vector<342x128xf32>
      %23 = arith.truncf %22 : vector<342x128xf32> to vector<342x128xbf16>
      %c0_20 = arith.constant 0 : index
      %c0_21 = arith.constant 0 : index
      %24 = vector.load %arg10[%c0_20, %c0_21] : memref<342x128xbf16, #tpu.memory_space<vmem>>, vector<342x128xbf16>
      tpu.vector_store %arg10[%c0_20, %c0_21], %23 {strides = array<i32>} : memref<342x128xbf16, #tpu.memory_space<vmem>>, vector<342x128xbf16>,
      %c0_22 = arith.constant 0 : index
      %c0_23 = arith.constant 0 : index
      %25 = vector.load %arg10[%c0_22, %c0_23] : memref<342x128xbf16, #tpu.memory_space<vmem>>, vector<288x128xbf16>
      %c0_24 = arith.constant 0 : index
      %c0_25 = arith.constant 0 : index
      %c0_26 = arith.constant 0 : index
      %26 = vector.load %arg4[%c0_24, %c0_25, %c0_26] : memref<9x128x128xbf16, #tpu.memory_space<vmem>>, vector<1x128x128xbf16>
      %27 = vector.shape_cast %26 : vector<1x128x128xbf16> to vector<128x128xbf16>
      %cst_27 = arith.constant dense<0.000000e+00> : vector<288x128xf32>
      %28 = tpu.matmul %25, %27, %cst_27 {dimension_numbers = #tpu.dot_dimension_numbers<[1], [0], [0], [1], [0, 0, 1, 1], [], []>} : vector<288x128xbf16>, vector<128x128xbf16>, vector<288x128xf32> -> vector<288x128xf32>
      %c1 = arith.constant 1 : index
      %c0_28 = arith.constant 0 : index
      %29 = vector.load %arg10[%c1, %c0_28] : memref<342x128xbf16, #tpu.memory_space<vmem>>, vector<288x128xbf16>
      %c1_29 = arith.constant 1 : index
      %c0_30 = arith.constant 0 : index
      %c0_31 = arith.constant 0 : index
      %30 = vector.load %arg4[%c1_29, %c0_30, %c0_31] : memref<9x128x128xbf16, #tpu.memory_space<vmem>>, vector<1x128x128xbf16>
      %31 = vector.shape_cast %30 : vector<1x128x128xbf16> to vector<128x128xbf16>
      %cst_32 = arith.constant dense<0.000000e+00> : vector<288x128xf32>
      %32 = tpu.matmul %29, %31, %cst_32 {dimension_numbers = #tpu.dot_dimension_numbers<[1], [0], [0], [1], [0, 0, 1, 1], [], []>} : vector<288x128xbf16>, vector<128x128xbf16>, vector<288x128xf32> -> vector<288x128xf32>
      %33 = arith.addf %28, %32 : vector<288x128xf32>
      %c2 = arith.constant 2 : index
      %c0_33 = arith.constant 0 : index
      %34 = vector.load %arg10[%c2, %c0_33] : memref<342x128xbf16, #tpu.memory_space<vmem>>, vector<288x128xbf16>
      %c2_34 = arith.constant 2 : index
      %c0_35 = arith.constant 0 : index
      %c0_36 = arith.constant 0 : index
      %35 = vector.load %arg4[%c2_34, %c0_35, %c0_36] : memref<9x128x128xbf16, #tpu.memory_space<vmem>>, vector<1x128x128xbf16>
      %36 = vector.shape_cast %35 : vector<1x128x128xbf16> to vector<128x128xbf16>
      %cst_37 = arith.constant dense<0.000000e+00> : vector<288x128xf32>
      %37 = tpu.matmul %34, %36, %cst_37 {dimension_numbers = #tpu.dot_dimension_numbers<[1], [0], [0], [1], [0, 0, 1, 1], [], []>} : vector<288x128xbf16>, vector<128x128xbf16>, vector<288x128xf32> -> vector<288x128xf32>
      %38 = arith.addf %33, %37 : vector<288x128xf32>
      %c18 = arith.constant 18 : index
      %c0_38 = arith.constant 0 : index
      %39 = vector.load %arg10[%c18, %c0_38] : memref<342x128xbf16, #tpu.memory_space<vmem>>, vector<288x128xbf16>
      %c3 = arith.constant 3 : index
      %c0_39 = arith.constant 0 : index
      %c0_40 = arith.constant 0 : index
      %40 = vector.load %arg4[%c3, %c0_39, %c0_40] : memref<9x128x128xbf16, #tpu.memory_space<vmem>>, vector<1x128x128xbf16>
      %41 = vector.shape_cast %40 : vector<1x128x128xbf16> to vector<128x128xbf16>
      %cst_41 = arith.constant dense<0.000000e+00> : vector<288x128xf32>
      %42 = tpu.matmul %39, %41, %cst_41 {dimension_numbers = #tpu.dot_dimension_numbers<[1], [0], [0], [1], [0, 0, 1, 1], [], []>} : vector<288x128xbf16>, vector<128x128xbf16>, vector<288x128xf32> -> vector<288x128xf32>
      %43 = arith.addf %38, %42 : vector<288x128xf32>
      %c19 = arith.constant 19 : index
      %c0_42 = arith.constant 0 : index
      %44 = vector.load %arg10[%c19, %c0_42] : memref<342x128xbf16, #tpu.memory_space<vmem>>, vector<288x128xbf16>
      %c4 = arith.constant 4 : index
      %c0_43 = arith.constant 0 : index
      %c0_44 = arith.constant 0 : index
      %45 = vector.load %arg4[%c4, %c0_43, %c0_44] : memref<9x128x128xbf16, #tpu.memory_space<vmem>>, vector<1x128x128xbf16>
      %46 = vector.shape_cast %45 : vector<1x128x128xbf16> to vector<128x128xbf16>
      %cst_45 = arith.constant dense<0.000000e+00> : vector<288x128xf32>
      %47 = tpu.matmul %44, %46, %cst_45 {dimension_numbers = #tpu.dot_dimension_numbers<[1], [0], [0], [1], [0, 0, 1, 1], [], []>} : vector<288x128xbf16>, vector<128x128xbf16>, vector<288x128xf32> -> vector<288x128xf32>
      %48 = arith.addf %43, %47 : vector<288x128xf32>
      %c20 = arith.constant 20 : index
      %c0_46 = arith.constant 0 : index
      %49 = vector.load %arg10[%c20, %c0_46] : memref<342x128xbf16, #tpu.memory_space<vmem>>, vector<288x128xbf16>
      %c5 = arith.constant 5 : index
      %c0_47 = arith.constant 0 : index
      %c0_48 = arith.constant 0 : index
      %50 = vector.load %arg4[%c5, %c0_47, %c0_48] : memref<9x128x128xbf16, #tpu.memory_space<vmem>>, vector<1x128x128xbf16>
      %51 = vector.shape_cast %50 : vector<1x128x128xbf16> to vector<128x128xbf16>
      %cst_49 = arith.constant dense<0.000000e+00> : vector<288x128xf32>
      %52 = tpu.matmul %49, %51, %cst_49 {dimension_numbers = #tpu.dot_dimension_numbers<[1], [0], [0], [1], [0, 0, 1, 1], [], []>} : vector<288x128xbf16>, vector<128x128xbf16>, vector<288x128xf32> -> vector<288x128xf32>
      %53 = arith.addf %48, %52 : vector<288x128xf32>
      %c36 = arith.constant 36 : index
      %c0_50 = arith.constant 0 : index
      %54 = vector.load %arg10[%c36, %c0_50] : memref<342x128xbf16, #tpu.memory_space<vmem>>, vector<288x128xbf16>
      %c6 = arith.constant 6 : index
      %c0_51 = arith.constant 0 : index
      %c0_52 = arith.constant 0 : index
      %55 = vector.load %arg4[%c6, %c0_51, %c0_52] : memref<9x128x128xbf16, #tpu.memory_space<vmem>>, vector<1x128x128xbf16>
      %56 = vector.shape_cast %55 : vector<1x128x128xbf16> to vector<128x128xbf16>
      %cst_53 = arith.constant dense<0.000000e+00> : vector<288x128xf32>
      %57 = tpu.matmul %54, %56, %cst_53 {dimension_numbers = #tpu.dot_dimension_numbers<[1], [0], [0], [1], [0, 0, 1, 1], [], []>} : vector<288x128xbf16>, vector<128x128xbf16>, vector<288x128xf32> -> vector<288x128xf32>
      %58 = arith.addf %53, %57 : vector<288x128xf32>
      %c37 = arith.constant 37 : index
      %c0_54 = arith.constant 0 : index
      %59 = vector.load %arg10[%c37, %c0_54] : memref<342x128xbf16, #tpu.memory_space<vmem>>, vector<288x128xbf16>
      %c7 = arith.constant 7 : index
      %c0_55 = arith.constant 0 : index
      %c0_56 = arith.constant 0 : index
      %60 = vector.load %arg4[%c7, %c0_55, %c0_56] : memref<9x128x128xbf16, #tpu.memory_space<vmem>>, vector<1x128x128xbf16>
      %61 = vector.shape_cast %60 : vector<1x128x128xbf16> to vector<128x128xbf16>
      %cst_57 = arith.constant dense<0.000000e+00> : vector<288x128xf32>
      %62 = tpu.matmul %59, %61, %cst_57 {dimension_numbers = #tpu.dot_dimension_numbers<[1], [0], [0], [1], [0, 0, 1, 1], [], []>} : vector<288x128xbf16>, vector<128x128xbf16>, vector<288x128xf32> -> vector<288x128xf32>
      %63 = arith.addf %58, %62 : vector<288x128xf32>
      %c38 = arith.constant 38 : index
      %c0_58 = arith.constant 0 : index
      %64 = vector.load %arg10[%c38, %c0_58] : memref<342x128xbf16, #tpu.memory_space<vmem>>, vector<288x128xbf16>
      %c8 = arith.constant 8 : index
      %c0_59 = arith.constant 0 : index
      %c0_60 = arith.constant 0 : index
      %65 = vector.load %arg4[%c8, %c0_59, %c0_60] : memref<9x128x128xbf16, #tpu.memory_space<vmem>>, vector<1x128x128xbf16>
      %66 = vector.shape_cast %65 : vector<1x128x128xbf16> to vector<128x128xbf16>
      %cst_61 = arith.constant dense<0.000000e+00> : vector<288x128xf32>
      %67 = tpu.matmul %64, %66, %cst_61 {dimension_numbers = #tpu.dot_dimension_numbers<[1], [0], [0], [1], [0, 0, 1, 1], [], []>} : vector<288x128xbf16>, vector<128x128xbf16>, vector<288x128xf32> -> vector<288x128xf32>
      %68 = arith.addf %63, %67 : vector<288x128xf32>
      %c0_62 = arith.constant 0 : index
      %c0_63 = arith.constant 0 : index
      %69 = vector.load %arg5[%c0_62, %c0_63] : memref<1x128xf32, #tpu.memory_space<vmem>>, vector<1x128xf32>
      %70 = vector.broadcast %69 : vector<1x128xf32> to vector<288x128xf32>
      %71 = arith.addf %68, %70 : vector<288x128xf32>
      %cst_64 = arith.constant 0.000000e+00 : f32
      %72 = vector.broadcast %cst_64 : f32 to vector<288x128xf32>
      %73 = arith.maximumf %71, %72 : vector<288x128xf32>
      %74 = arith.truncf %73 : vector<288x128xf32> to vector<288x128xbf16>
      %c0_65 = arith.constant 0 : index
      %c0_66 = arith.constant 0 : index
      %75 = vector.load %arg11[%c0_65, %c0_66] : memref<288x128xbf16, #tpu.memory_space<vmem>>, vector<288x128xbf16>
      tpu.vector_store %arg11[%c0_65, %c0_66], %74 {strides = array<i32>} : memref<288x128xbf16, #tpu.memory_space<vmem>>, vector<288x128xbf16>,
    } else {
    }
    %c0 = arith.constant 0 : index
    %c0_1 = arith.constant 0 : index
    %3 = vector.load %arg11[%c0, %c0_1] : memref<288x128xbf16, #tpu.memory_space<vmem>>, vector<288x128xbf16>
    %c0_2 = arith.constant 0 : index
    %c0_3 = arith.constant 0 : index
    %4 = vector.load %arg6[%c0_2, %c0_3] : memref<128x128xbf16, #tpu.memory_space<vmem>>, vector<128x128xbf16>
    %cst = arith.constant dense<0.000000e+00> : vector<288x128xf32>
    %5 = tpu.matmul %3, %4, %cst {dimension_numbers = #tpu.dot_dimension_numbers<[1], [0], [0], [1], [0, 0, 1, 1], [], []>} : vector<288x128xbf16>, vector<128x128xbf16>, vector<288x128xf32> -> vector<288x128xf32>
    %c0_4 = arith.constant 0 : index
    %c0_5 = arith.constant 0 : index
    %6 = vector.load %arg7[%c0_4, %c0_5] : memref<1x128xf32, #tpu.memory_space<vmem>>, vector<1x128xf32>
    %7 = vector.broadcast %6 : vector<1x128xf32> to vector<288x128xf32>
    %8 = arith.addf %5, %7 : vector<288x128xf32>
    %c0_6 = arith.constant 0 : index
    %c0_7 = arith.constant 0 : index
    %c0_8 = arith.constant 0 : index
    %9 = vector.load %arg8[%c0_6, %c0_7, %c0_8] : memref<1x288x128xf32, #tpu.memory_space<vmem>>, vector<1x288x128xf32>
    %10 = vector.shape_cast %9 : vector<1x288x128xf32> to vector<288x128xf32>
    %11 = arith.addf %8, %10 : vector<288x128xf32>
    %cst_9 = arith.constant 0.000000e+00 : f32
    %12 = vector.broadcast %cst_9 : f32 to vector<288x128xf32>
    %13 = arith.maximumf %11, %12 : vector<288x128xf32>
    %c0_10 = arith.constant 0 : index
    %c0_11 = arith.constant 0 : index
    %c0_12 = arith.constant 0 : index
    %14 = vector.load %arg9[%c0_10, %c0_11, %c0_12] : memref<1x288x128xf32, #tpu.memory_space<vmem>>, vector<1x288x128xf32>
    %15 = vector.shape_cast %14 : vector<1x288x128xf32> to vector<288x128xf32>
    %16 = vector.shape_cast %13 : vector<288x128xf32> to vector<1x288x128xf32>
    tpu.vector_store %arg9[%c0_10, %c0_11, %c0_12], %16 {strides = array<i32>} : memref<1x288x128xf32, #tpu.memory_space<vmem>>, vector<1x288x128xf32>,
    return
  }
  func.func @transform_0(%arg0: i32, %arg1: i32) -> (i32, i32, i32) {
    %c0_i32 = arith.constant 0 : i32
    %c0_i32_0 = arith.constant 0 : i32
    %c0_i32_1 = arith.constant 0 : i32
    return %arg0, %c0_i32, %c0_i32_0 : i32, i32, i32
  }
  func.func @transform_1(%arg0: i32, %arg1: i32) -> (i32, i32) {
    %c0_i32 = arith.constant 0 : i32
    %c0_i32_0 = arith.constant 0 : i32
    %c0_i32_1 = arith.constant 0 : i32
    return %c0_i32, %c0_i32_0 : i32, i32
  }
  func.func @transform_2(%arg0: i32, %arg1: i32) -> (i32, i32, i32) {
    %c0_i32 = arith.constant 0 : i32
    %c0_i32_0 = arith.constant 0 : i32
    %c0_i32_1 = arith.constant 0 : i32
    %c0_i32_2 = arith.constant 0 : i32
    return %c0_i32, %c0_i32_0, %c0_i32_1 : i32, i32, i32
  }
  func.func @transform_3(%arg0: i32, %arg1: i32) -> (i32, i32) {
    %c0_i32 = arith.constant 0 : i32
    %c0_i32_0 = arith.constant 0 : i32
    %c0_i32_1 = arith.constant 0 : i32
    return %c0_i32, %c0_i32_0 : i32, i32
  }
  func.func @transform_4(%arg0: i32, %arg1: i32) -> (i32, i32) {
    %c0_i32 = arith.constant 0 : i32
    %c0_i32_0 = arith.constant 0 : i32
    return %c0_i32, %arg1 : i32, i32
  }
  func.func @transform_5(%arg0: i32, %arg1: i32) -> (i32, i32) {
    %c0_i32 = arith.constant 0 : i32
    %c0_i32_0 = arith.constant 0 : i32
    return %c0_i32, %arg1 : i32, i32
  }
  func.func @transform_6(%arg0: i32, %arg1: i32) -> (i32, i32, i32) {
    %c0_i32 = arith.constant 0 : i32
    %c0_i32_0 = arith.constant 0 : i32
    return %arg0, %c0_i32, %arg1 : i32, i32, i32
  }
  func.func @transform_7(%arg0: i32, %arg1: i32) -> (i32, i32, i32) {
    %c0_i32 = arith.constant 0 : i32
    %c0_i32_0 = arith.constant 0 : i32
    return %arg0, %c0_i32, %arg1 : i32, i32, i32
  }
}

</mosaic_0001>

<llo_original>
// kernel: tpu_custom_call.1
$region0: #{tpu_custom_call.1}
  #allocation0 [shape = 'u32[]', space=smem, size = 0x4, offset = 0x4, fixed_abs, tag = 'smem constant byte address 0x4 - core index']
  #allocation1 [shape = 'u32[144,128]{1,0:T(1,128)}', space=vmem, size = 0x12000, scoped, tag = 'internal scratch']
  #allocation2 [shape = 'bf16[342,128]{1,0:T(8,128)(2,1)}', space=vmem, size = 0x15800, scoped, tag = 'scratch operand']
  #allocation3 [shape = 'bf16[288,128]{1,0:T(16,128)(2,1)}', space=vmem, size = 0x12000, scoped, tag = 'scratch operand']
  %s0 = inlined_call_operand.vmem [shape: bf16[2,342,128], index: 0, kind: input, shape index: {}]
  %s1 = inlined_call_operand.vmem [shape: bf16[128,128], index: 1, kind: input, shape index: {}]
  %s2 = inlined_call_operand.vmem [shape: bf16[9,128,128], index: 2, kind: input, shape index: {}]
  %s3 = inlined_call_operand.vmem [shape: f32[1,128], index: 3, kind: input, shape index: {}]
  %s4 = inlined_call_operand.hbm [shape: bf16[128,128], index: 4, kind: input, shape index: {}]
  %s5 = inlined_call_operand.vmem [shape: f32[1,128], index: 5, kind: input, shape index: {}]
  %s6 = inlined_call_operand.hbm [shape: f32[2,288,128], index: 6, kind: input, shape index: {}]
  %s7 = inlined_call_operand.hbm [shape: f32[2,288,128], index: 7, kind: output, shape index: {}]
  %s8 = sld [smem:[#allocation0]]
  $region73: #{tpu_custom_call.1} parent=0
    _
  %s10 = ssub.s32 1, %s8
  %s11 = scalar_select 0, %s10, %s8
  $region1: #{tpu_custom_call.1} parent=0
    #allocation4 [shape = 'u8[32768]{0}', space=vmem, size = 0x8000, scoped, tag = 'input window, operand 4, single buffered']
    #allocation5 [shape = 's32[2]{0}', space=sflag, size = 0x8, scoped, tag = 'scoped memory for tpu_custom_call.1']
    #allocation6 [shape = 's32[2]{0}', space=sflag, size = 0x8, scoped, tag = 'scoped memory for tpu_custom_call.1']
    #allocation7 [shape = 'u8[294912]{0}', space=vmem, size = 0x48000, scoped, tag = 'input window, operand 6']
    #allocation8 [shape = 's32[2]{0}', space=sflag, size = 0x8, scoped, tag = 'scoped memory for tpu_custom_call.1']
    #allocation9 [shape = 'u8[294912]{0}', space=vmem, size = 0x48000, scoped, tag = 'output window, operand 0']
    %12 = vsyncpa [#allocation5], 0
    %13 = vsyncpa [#allocation8], 0
    %s14 = scalar_lea.sflag [#allocation8], 1
    %15 = vsyncpa %s14, 0
    %16 = vsyncpa [#allocation6], 0
    %s17 = scalar_lea.sflag [#allocation6], 1
    %18 = vsyncpa %s17, 0
    loop: start=0, step=1, limit=4
    $region2: #{tpu_custom_call.1} parent=1 // loop_pre_header
      _
    $region3: #{tpu_custom_call.1} parent=1 // loop_header
      %s20 = sphi 0, %s24
      %p21 = scmp.ge.s32.totalorder %s20, 4
      %s27 = sphi 0, %s39
      %s28 = sphi 0, %s35
      %s29 = sphi 0, %s27
      %s30 = sphi 0, %s28
      %s31 = sphi 0, %s29
      %s32 = sphi 0, %s30
      %s42 = sphi 0, %s44
      %s45 = sphi 0, %s42
      %s46 = sphi 0, %s45
      %s62 = sphi 0, %s46
      %s66 = sphi 0, %s66
      %s68 = sphi 0, %s66
      %s69 = sphi 0, %s68
      %s83 = sphi 0, %s69
      %s87 = sphi 0, %s87
      %s89 = sphi 0, %s87
      %s90 = sphi 0, %s89
      %s104 = sphi 0, %s90
      %s108 = sphi 0, %s108
      %s110 = sphi 0, %s108
      %s111 = sphi 0, %s110
      %s125 = sphi 0, %s111
      %s131 = sphi 0, %s133
      %s134 = sphi 0, %s131
      %s135 = sphi 0, %s134
      %s151 = sphi 0, %s135
      %s157 = sphi 0, %s159
      %s160 = sphi 0, %s157
      %s161 = sphi 0, %s160
      %s177 = sphi 0, %s161
      %s185 = sphi 0, %s187
      %s188 = sphi 0, %s185
      %s189 = sphi 0, %s188
      %s205 = sphi 0, %s189
      %s213 = sphi 0, %s215
      %s216 = sphi 0, %s213
      %s217 = sphi 0, %s216
      %s233 = sphi 0, %s217
    $region4: #{tpu_custom_call.1} parent=1 // loop_header_branch
      %23 = sbr.rel (%p21) target = $region8
    $region5: #{tpu_custom_call.1} parent=1 // loop_body
      %s25 = ssub.s32 %s20, 1
      %s26 = ssub.s32 %s20, 2
      %s33 = sadd.s32 1, %s28
      %p34 = scmp.ge.s32.totalorder %s33, 1
      %s35 = scalar_select %p34, 0, %s33
      %s36 = sadd.s32 1, %s27
      %s37 = scalar_select %p34, %s36, %s27
      %p38 = scmp.ge.s32.totalorder %s37, 2
      %s39 = scalar_select %p38, 0, %s37
      %s40 = ssub.s32 %s27, %s39
      %p41 = scmp.eq.s32.totalorder %s40, 0
      %s43 = sadd.s32 %s42, 1
      %s44 = scalar_select %p41, %s42, %s43
      %p47 = pneg %p41
      %p48 = scmp.eq.s32.totalorder %s20, 1
      %p49 = por %p47, %p48
      %p50 = scmp.ne.s32.totalorder %s42, %s45
      %p51 = scmp.eq.s32.totalorder %s20, 0
      %p52 = por %p50, %p51
      %p53 = scmp.ne.s32.totalorder %s42, %s45
      %p54 = scmp.eq.s32.totalorder %s25, 1
      %p55 = por %p53, %p54
      %p56 = scmp.ne.s32.totalorder %s45, %s46
      %p57 = scmp.eq.s32.totalorder %s25, 0
      %p58 = por %p56, %p57
      %p59 = scmp.ne.s32.totalorder %s45, %s46
      %p60 = scmp.eq.s32.totalorder %s26, 1
      %p61 = por %p59, %p60
      %p63 = scmp.ne.s32.totalorder %s46, %s62
      %p64 = scmp.eq.s32.totalorder %s26, 0
      %p65 = por %p63, %p64
      %s67 = sadd.s32 %s66, 1
      %p70 = scmp.eq.s32.totalorder %s20, 1
      %p71 = scmp.ne.s32.totalorder %s66, %s68
      %p72 = scmp.eq.s32.totalorder %s20, 0
      %p73 = por %p71, %p72
      %p74 = scmp.ne.s32.totalorder %s66, %s68
      %p75 = scmp.eq.s32.totalorder %s25, 1
      %p76 = por %p74, %p75
      %p77 = scmp.ne.s32.totalorder %s68, %s69
      %p78 = scmp.eq.s32.totalorder %s25, 0
      %p79 = por %p77, %p78
      %p80 = scmp.ne.s32.totalorder %s68, %s69
      %p81 = scmp.eq.s32.totalorder %s26, 1
      %p82 = por %p80, %p81
      %p84 = scmp.ne.s32.totalorder %s69, %s83
      %p85 = scmp.eq.s32.totalorder %s26, 0
      %p86 = por %p84, %p85
      %s88 = sadd.s32 %s87, 1
      %p91 = scmp.eq.s32.totalorder %s20, 1
      %p92 = scmp.ne.s32.totalorder %s87, %s89
      %p93 = scmp.eq.s32.totalorder %s20, 0
      %p94 = por %p92, %p93
      %p95 = scmp.ne.s32.totalorder %s87, %s89
      %p96 = scmp.eq.s32.totalorder %s25, 1
      %p97 = por %p95, %p96
      %p98 = scmp.ne.s32.totalorder %s89, %s90
      %p99 = scmp.eq.s32.totalorder %s25, 0
      %p100 = por %p98, %p99
      %p101 = scmp.ne.s32.totalorder %s89, %s90
      %p102 = scmp.eq.s32.totalorder %s26, 1
      %p103 = por %p101, %p102
      %p105 = scmp.ne.s32.totalorder %s90, %s104
      %p106 = scmp.eq.s32.totalorder %s26, 0
      %p107 = por %p105, %p106
      %s109 = sadd.s32 %s108, 1
      %p112 = scmp.eq.s32.totalorder %s20, 1
      %p113 = scmp.ne.s32.totalorder %s108, %s110
      %p114 = scmp.eq.s32.totalorder %s20, 0
      %p115 = por %p113, %p114
      %p116 = scmp.ne.s32.totalorder %s108, %s110
      %p117 = scmp.eq.s32.totalorder %s25, 1
      %p118 = por %p116, %p117
      %p119 = scmp.ne.s32.totalorder %s110, %s111
      %p120 = scmp.eq.s32.totalorder %s25, 0
      %p121 = por %p119, %p120
      %p122 = scmp.ne.s32.totalorder %s110, %s111
      %p123 = scmp.eq.s32.totalorder %s26, 1
      %p124 = por %p122, %p123
      %p126 = scmp.ne.s32.totalorder %s111, %s125
      %p127 = scmp.eq.s32.totalorder %s26, 0
      %p128 = por %p126, %p127
      %s129 = ssub.s32 %s28, %s35
      %p130 = scmp.eq.s32.totalorder %s129, 0
      %s132 = sadd.s32 %s131, 1
      %s133 = scalar_select %p130, %s131, %s132
      %p136 = pneg %p130
      %p137 = scmp.eq.s32.totalorder %s20, 1
      %p138 = por %p136, %p137
      %p139 = scmp.ne.s32.totalorder %s131, %s134
      %p140 = scmp.eq.s32.totalorder %s20, 0
      %p141 = por %p139, %p140
      %p142 = scmp.ne.s32.totalorder %s131, %s134
      %p143 = scmp.eq.s32.totalorder %s25, 1
      %p144 = por %p142, %p143
      %p145 = scmp.ne.s32.totalorder %s134, %s135
      %p146 = scmp.eq.s32.totalorder %s25, 0
      %p147 = por %p145, %p146
      %p148 = scmp.ne.s32.totalorder %s134, %s135
      %p149 = scmp.eq.s32.totalorder %s26, 1
      %p150 = por %p148, %p149
      %p152 = scmp.ne.s32.totalorder %s135, %s151
      %p153 = scmp.eq.s32.totalorder %s26, 0
      %p154 = por %p152, %p153
      %s155 = ssub.s32 %s28, %s35
      %p156 = scmp.eq.s32.totalorder %s155, 0
      %s158 = sadd.s32 %s157, 1
      %s159 = scalar_select %p156, %s157, %s158
      %p162 = pneg %p156
      %p163 = scmp.eq.s32.totalorder %s20, 1
      %p164 = por %p162, %p163
      %p165 = scmp.ne.s32.totalorder %s157, %s160
      %p166 = scmp.eq.s32.totalorder %s20, 0
      %p167 = por %p165, %p166
      %p168 = scmp.ne.s32.totalorder %s157, %s160
      %p169 = scmp.eq.s32.totalorder %s25, 1
      %p170 = por %p168, %p169
      %p171 = scmp.ne.s32.totalorder %s160, %s161
      %p172 = scmp.eq.s32.totalorder %s25, 0
      %p173 = por %p171, %p172
      %p174 = scmp.ne.s32.totalorder %s160, %s161
      %p175 = scmp.eq.s32.totalorder %s26, 1
      %p176 = por %p174, %p175
      %p178 = scmp.ne.s32.totalorder %s161, %s177
      %p179 = scmp.eq.s32.totalorder %s26, 0
      %p180 = por %p178, %p179
      %s181 = ssub.s32 %s27, %s39
      %s182 = ssub.s32 %s28, %s35
      %s183 = sor.u32 %s181, %s182
      %p184 = scmp.eq.s32.totalorder %s183, 0
      %s186 = sadd.s32 %s185, 1
      %s187 = scalar_select %p184, %s185, %s186
      %p190 = pneg %p184
      %p191 = scmp.eq.s32.totalorder %s20, 1
      %p192 = por %p190, %p191
      %p193 = scmp.ne.s32.totalorder %s185, %s188
      %p194 = scmp.eq.s32.totalorder %s20, 0
      %p195 = por %p193, %p194
      %p196 = scmp.ne.s32.totalorder %s185, %s188
      %p197 = scmp.eq.s32.totalorder %s25, 1
      %p198 = por %p196, %p197
      %p199 = scmp.ne.s32.totalorder %s188, %s189
      %p200 = scmp.eq.s32.totalorder %s25, 0
      %p201 = por %p199, %p200
      %p202 = scmp.ne.s32.totalorder %s188, %s189
      %p203 = scmp.eq.s32.totalorder %s26, 1
      %p204 = por %p202, %p203
      %p206 = scmp.ne.s32.totalorder %s189, %s205
      %p207 = scmp.eq.s32.totalorder %s26, 0
      %p208 = por %p206, %p207
      %s209 = ssub.s32 %s27, %s39
      %s210 = ssub.s32 %s28, %s35
      %s211 = sor.u32 %s209, %s210
      %p212 = scmp.eq.s32.totalorder %s211, 0
      %s214 = sadd.s32 %s213, 1
      %s215 = scalar_select %p212, %s213, %s214
      %p218 = pneg %p212
      %p219 = scmp.eq.s32.totalorder %s20, 1
      %p220 = por %p218, %p219
      %p221 = scmp.ne.s32.totalorder %s213, %s216
      %p222 = scmp.eq.s32.totalorder %s20, 0
      %p223 = por %p221, %p222
      %p224 = scmp.ne.s32.totalorder %s213, %s216
      %p225 = scmp.eq.s32.totalorder %s25, 1
      %p226 = por %p224, %p225
      %p227 = scmp.ne.s32.totalorder %s216, %s217
      %p228 = scmp.eq.s32.totalorder %s25, 0
      %p229 = por %p227, %p228
      %p230 = scmp.ne.s32.totalorder %s216, %s217
      %p231 = scmp.eq.s32.totalorder %s26, 1
      %p232 = por %p230, %p231
      %p234 = scmp.ne.s32.totalorder %s217, %s233
      %p235 = scmp.eq.s32.totalorder %s26, 0
      %p236 = por %p234, %p235
      %p237 = scmp.le.s32.totalorder 1, %s20
      %p238 = scmp.lt.s32.totalorder %s20, 3
      %p239 = pnand %p237, %p238
      %p240 = pneg %p239
      // Predicated region
      $region9: #{tpu_custom_call.1} parent=5 // pred_check
        _
      $region10: #{tpu_custom_call.1} parent=5 // pred_check_branch
        %242 = sbr.rel (%p239) target = $region12
      $region11: #{tpu_custom_call.1} parent=5 // pred_region
        %s243 = ssub.s32 %s20, 1
        // Predicated region
        $region13: #{tpu_custom_call.1} parent=11 // pred_check
          %p244 = pneg %p79
        $region14: #{tpu_custom_call.1} parent=11 // pred_check_branch
          %246 = sbr.rel (%p244) target = $region16
        $region15: #{tpu_custom_call.1} parent=11 // pred_region
          _
        $region16: #{tpu_custom_call.1} parent=11 // pred_fallthru
          _
        // Predicated region
        $region17: #{tpu_custom_call.1} parent=11 // pred_check
          %p247 = pneg %p100
        $region18: #{tpu_custom_call.1} parent=11 // pred_check_branch
          %249 = sbr.rel (%p247) target = $region20
        $region19: #{tpu_custom_call.1} parent=11 // pred_region
          _
        $region20: #{tpu_custom_call.1} parent=11 // pred_fallthru
          _
        // Predicated region
        $region21: #{tpu_custom_call.1} parent=11 // pred_check
          %p250 = pneg %p121
        $region22: #{tpu_custom_call.1} parent=11 // pred_check_branch
          %252 = sbr.rel (%p250) target = $region24
        $region23: #{tpu_custom_call.1} parent=11 // pred_region
          _
        $region24: #{tpu_custom_call.1} parent=11 // pred_fallthru
          _
        // Predicated region
        $region25: #{tpu_custom_call.1} parent=11 // pred_check
          %p253 = pneg %p147
        $region26: #{tpu_custom_call.1} parent=11 // pred_check_branch
          %255 = sbr.rel (%p253) target = $region28
        $region27: #{tpu_custom_call.1} parent=11 // pred_region
          %s257 = ssub.s32 1024, 1024
          %258 = vsyncadd [#allocation5], %s257
          %s259 = smul.addr %s30, 64
          %s260 = scalar_lea.hbm %s4, %s259
          %s261 = sshll.u32 [#allocation4], 4
          %s262 = int_to_ptr.vmem [resolvable:$true] %s261
          %267 = dma.hbm_to_vmem [thread:$0]  %s260, 1024, %s262, [#allocation5], 64, 64, 4
        $region28: #{tpu_custom_call.1} parent=11 // pred_fallthru
          _
        // Predicated region
        $region29: #{tpu_custom_call.1} parent=11 // pred_check
          %p268 = pneg %p173
        $region30: #{tpu_custom_call.1} parent=11 // pred_check_branch
          %270 = sbr.rel (%p268) target = $region32
        $region31: #{tpu_custom_call.1} parent=11 // pred_region
          %p271 = scmp.lt.s32.totalorder %s30, 0
          %s272 = scalar_select %p271, %s30, 0
          %s273 = scalar_lea.vmem %s5, %s272
        $region32: #{tpu_custom_call.1} parent=11 // pred_fallthru
          _
      $region12: #{tpu_custom_call.1} parent=5 // pred_fallthru
        _
      %p274 = scmp.lt.s32.totalorder %s20, 2
      // Predicated region
      $region33: #{tpu_custom_call.1} parent=5 // pred_check
        %p275 = pneg %p274
      $region34: #{tpu_custom_call.1} parent=5 // pred_check_branch
        %277 = sbr.rel (%p275) target = $region36
      $region35: #{tpu_custom_call.1} parent=5 // pred_region
        // Predicated region
        $region37: #{tpu_custom_call.1} parent=35 // pred_check
          %p278 = pneg %p52
        $region38: #{tpu_custom_call.1} parent=35 // pred_check_branch
          %280 = sbr.rel (%p278) target = $region40
        $region39: #{tpu_custom_call.1} parent=35 // pred_region
          %p281 = scmp.lt.s32.totalorder %s27, 1
          %s282 = scalar_select %p281, %s27, 1
          %s283 = smul.addr %s282, 43
          %s284 = smul.addr %s283, 4
          %s285 = scalar_lea.vmem %s0, %s284
        $region40: #{tpu_custom_call.1} parent=35 // pred_fallthru
          _
        // Predicated region
        $region41: #{tpu_custom_call.1} parent=35 // pred_check
          %p286 = pneg %p195
        $region42: #{tpu_custom_call.1} parent=35 // pred_check_branch
          %288 = sbr.rel (%p286) target = $region44
        $region43: #{tpu_custom_call.1} parent=35 // pred_region
          %s289 = sand.u32 %s185, 1
          %s290 = scalar_lea.sflag [#allocation8], %s289
          %s291 = sand.u32 %s185, 1
          %s292 = smul.addr %s291, 288
          %s293 = scalar_lea.vmem [#allocation7], %s292
          %s295 = ssub.s32 4608, 4608
          %296 = vsyncadd %s290, %s295
          %s297 = smul.addr %s27, 36
          %s298 = sadd.s32 %s28, %s297
          %s299 = smul.addr %s298, 128
          %s300 = scalar_lea.hbm %s6, %s299
          %s301 = sshll.u32 %s293, 4
          %s302 = int_to_ptr.vmem [resolvable:$true] %s301
          %307 = dma.hbm_to_vmem [thread:$0]  %s300, 4608, %s302, %s290, 128, 128, 8
        $region44: #{tpu_custom_call.1} parent=35 // pred_fallthru
          _
      $region36: #{tpu_custom_call.1} parent=5 // pred_fallthru
        _
      %p308 = scmp.le.s32.totalorder 1, %s20
      %p309 = scmp.lt.s32.totalorder %s20, 3
      %p310 = pnand %p308, %p309
      %p311 = pneg %p310
      // Predicated region
      $region45: #{tpu_custom_call.1} parent=5 // pred_check
        _
      $region46: #{tpu_custom_call.1} parent=5 // pred_check_branch
        %313 = sbr.rel (%p310) target = $region48
      $region47: #{tpu_custom_call.1} parent=5 // pred_region
        %s314 = ssub.s32 %s20, 1
        // Predicated region
        $region49: #{tpu_custom_call.1} parent=47 // pred_check
          %p315 = pneg %p147
        $region50: #{tpu_custom_call.1} parent=47 // pred_check_branch
          %317 = sbr.rel (%p315) target = $region52
        $region51: #{tpu_custom_call.1} parent=47 // pred_region
          %318 = dma.done [#allocation5], 1024
        $region52: #{tpu_custom_call.1} parent=47 // pred_fallthru
          _
        %s319 = sand.u32 %s188, 1
        %s320 = scalar_lea.sflag [#allocation8], %s319
        %s321 = sand.u32 %s188, 1
        %s322 = smul.addr %s321, 288
        %s323 = scalar_lea.vmem [#allocation7], %s322
        // Predicated region
        $region53: #{tpu_custom_call.1} parent=47 // pred_check
          %p324 = pneg %p201
        $region54: #{tpu_custom_call.1} parent=47 // pred_check_branch
          %326 = sbr.rel (%p324) target = $region56
        $region55: #{tpu_custom_call.1} parent=47 // pred_region
          %327 = dma.done %s320, 4608
        $region56: #{tpu_custom_call.1} parent=47 // pred_fallthru
          _
        %p328 = scmp.lt.s32.totalorder %s29, 1
        %s329 = scalar_select %p328, %s29, 1
        %s330 = smul.addr %s329, 43
        %s331 = smul.addr %s330, 4
        %s332 = scalar_lea.vmem %s0, %s331
        %p333 = pneg %p58
        %p334 = pneg %p55
        %p335 = pneg %p79
        %p336 = pneg %p76
        %p337 = pneg %p100
        %p338 = pneg %p97
        %p339 = pneg %p121
        %p340 = pneg %p118
        %p341 = pneg %p147
        %p342 = pneg %p144
        %p343 = scmp.lt.s32.totalorder %s30, 0
        %s344 = scalar_select %p343, %s30, 0
        %s345 = scalar_lea.vmem %s5, %s344
        %p346 = pneg %p173
        %p347 = pneg %p170
        %s348 = sand.u32 %s188, 1
        %s349 = scalar_lea.sflag [#allocation8], %s348
        %s350 = sand.u32 %s188, 1
        %s351 = smul.addr %s350, 288
        %s352 = scalar_lea.vmem [#allocation7], %s351
        %p353 = pneg %p201
        %p354 = pneg %p198
        %p355 = pneg %p229
        %p356 = pneg %p226
        %s357 = sand.u32 %s216, 1
        %s358 = scalar_lea.sflag [#allocation6], %s357
        %s359 = sand.u32 %s216, 1
        %s360 = smul.addr %s359, 288
        %s361 = scalar_lea.vmem [#allocation9], %s360
        %p362 = scmp.lt.s32.totalorder %s29, 1
        %s363 = scalar_select %p362, %s29, 1
        %s364 = smul.addr %s363, 43
        %s365 = smul.addr %s364, 4
        %s366 = scalar_lea.vmem %s0, %s365
        %p367 = scmp.lt.s32.totalorder %s30, 0
        %s368 = scalar_select %p367, %s30, 0
        %s369 = scalar_lea.vmem %s5, %s368
        %p371 = scmp.eq.s32.totalorder %s30, 0
        // Predicated region
        $region57: #{tpu_custom_call.1} parent=47 // pred_check
          %p372 = pneg %p371
        $region58: #{tpu_custom_call.1} parent=47 // pred_check_branch
          %374 = sbr.rel (%p372) target = $region60
        $region59: #{tpu_custom_call.1} parent=47 // pred_region
          %v375 = vld [vmem:[%s366] sm:$0xf]
          %v376 = vld [vmem:[%s366 + $0x4] sm:$0xf]
          %v377 = vld [vmem:[%s366 + $0x8] sm:$0xf]
          %v378 = vld [vmem:[%s366 + $0xc] sm:$0xf]
          %v379 = vld [vmem:[%s366 + $0x10] sm:$0xf]
          %v380 = vld [vmem:[%s366 + $0x14] sm:$0xf]
          %v381 = vld [vmem:[%s366 + $0x18] sm:$0xf]
          %v382 = vld [vmem:[%s366 + $0x1c] sm:$0xf]
          %v383 = vld [vmem:[%s366 + $0x20] sm:$0xf]
          %v384 = vld [vmem:[%s366 + $0x24] sm:$0xf]
          %v385 = vld [vmem:[%s366 + $0x28] sm:$0xf]
          %v386 = vld [vmem:[%s366 + $0x2c] sm:$0xf]
          %v387 = vld [vmem:[%s366 + $0x30] sm:$0xf]
          %v388 = vld [vmem:[%s366 + $0x34] sm:$0xf]
          %v389 = vld [vmem:[%s366 + $0x38] sm:$0xf]
          %v390 = vld [vmem:[%s366 + $0x3c] sm:$0xf]
          %v391 = vld [vmem:[%s366 + $0x40] sm:$0xf]
          %v392 = vld [vmem:[%s366 + $0x44] sm:$0xf]
          %v393 = vld [vmem:[%s366 + $0x48] sm:$0xf]
          %v394 = vld [vmem:[%s366 + $0x4c] sm:$0xf]
          %v395 = vld [vmem:[%s366 + $0x50] sm:$0xf]
          %v396 = vld [vmem:[%s366 + $0x54] sm:$0xf]
          %v397 = vld [vmem:[%s366 + $0x58] sm:$0xf]
          %v398 = vld [vmem:[%s366 + $0x5c] sm:$0xf]
          %v399 = vld [vmem:[%s366 + $0x60] sm:$0xf]
          %v400 = vld [vmem:[%s366 + $0x64] sm:$0xf]
          %v401 = vld [vmem:[%s366 + $0x68] sm:$0xf]
          %v402 = vld [vmem:[%s366 + $0x6c] sm:$0xf]
          %v403 = vld [vmem:[%s366 + $0x70] sm:$0xf]
          %v404 = vld [vmem:[%s366 + $0x74] sm:$0xf]
          %v405 = vld [vmem:[%s366 + $0x78] sm:$0xf]
          %v406 = vld [vmem:[%s366 + $0x7c] sm:$0xf]
          %v407 = vld [vmem:[%s366 + $0x80] sm:$0xf]
          %v408 = vld [vmem:[%s366 + $0x84] sm:$0xf]
          %v409 = vld [vmem:[%s366 + $0x88] sm:$0xf]
          %v410 = vld [vmem:[%s366 + $0x8c] sm:$0xf]
          %v411 = vld [vmem:[%s366 + $0x90] sm:$0xf]
          %v412 = vld [vmem:[%s366 + $0x94] sm:$0xf]
          %v413 = vld [vmem:[%s366 + $0x98] sm:$0xf]
          %v414 = vld [vmem:[%s366 + $0x9c] sm:$0xf]
          %v415 = vld [vmem:[%s366 + $0xa0] sm:$0xf]
          %v416 = vld [vmem:[%s366 + $0xa4] sm:$0xf]
          %v417 = vld [vmem:[%s366 + $0xa8] sm:$0x7]
          %v418 = vld [vmem:[%s1] sm:$0xf]
          %v419 = vld [vmem:[%s1 + $0x4] sm:$0xf]
          %v420 = vld [vmem:[%s1 + $0x8] sm:$0xf]
          %v421 = vld [vmem:[%s1 + $0xc] sm:$0xf]
          %v422 = vld [vmem:[%s1 + $0x10] sm:$0xf]
          %v423 = vld [vmem:[%s1 + $0x14] sm:$0xf]
          %v424 = vld [vmem:[%s1 + $0x18] sm:$0xf]
          %v425 = vld [vmem:[%s1 + $0x1c] sm:$0xf]
          %v426 = vld [vmem:[%s1 + $0x20] sm:$0xf]
          %v427 = vld [vmem:[%s1 + $0x24] sm:$0xf]
          %v428 = vld [vmem:[%s1 + $0x28] sm:$0xf]
          %v429 = vld [vmem:[%s1 + $0x2c] sm:$0xf]
          %v430 = vld [vmem:[%s1 + $0x30] sm:$0xf]
          %v431 = vld [vmem:[%s1 + $0x34] sm:$0xf]
          %v432 = vld [vmem:[%s1 + $0x38] sm:$0xf]
          %v433 = vld [vmem:[%s1 + $0x3c] sm:$0xf]
          %v477 = vunpack.c.l.b16 %v375
          %v478 = vunpack.c.l.b16 %v376
          %v479 = vunpack.c.l.b16 %v377
          %v480 = vunpack.c.l.b16 %v378
          %v481 = vunpack.c.l.b16 %v379
          %v482 = vunpack.c.l.b16 %v380
          %v483 = vunpack.c.l.b16 %v381
          %v484 = vunpack.c.l.b16 %v382
          %v485 = vunpack.c.l.b16 %v383
          %v486 = vunpack.c.l.b16 %v384
          %v487 = vunpack.c.l.b16 %v385
          %v488 = vunpack.c.l.b16 %v386
          %v489 = vunpack.c.l.b16 %v387
          %v490 = vunpack.c.l.b16 %v388
          %v491 = vunpack.c.l.b16 %v389
          %v492 = vunpack.c.l.b16 %v390
          %v493 = vunpack.c.l.b16 %v391
          %v494 = vunpack.c.l.b16 %v392
          %v495 = vunpack.c.l.b16 %v393
          %v496 = vunpack.c.l.b16 %v394
          %v497 = vunpack.c.l.b16 %v395
          %v498 = vunpack.c.l.b16 %v396
          %v499 = vunpack.c.l.b16 %v397
          %v500 = vunpack.c.l.b16 %v398
          %v501 = vunpack.c.l.b16 %v399
          %v502 = vunpack.c.l.b16 %v400
          %v503 = vunpack.c.l.b16 %v401
          %v504 = vunpack.c.l.b16 %v402
          %v505 = vunpack.c.l.b16 %v403
          %v506 = vunpack.c.l.b16 %v404
          %v507 = vunpack.c.l.b16 %v405
          %v508 = vunpack.c.l.b16 %v406
          %v509 = vunpack.c.l.b16 %v407
          %v510 = vunpack.c.l.b16 %v408
          %v511 = vunpack.c.l.b16 %v409
          %v512 = vunpack.c.l.b16 %v410
          %v513 = vunpack.c.l.b16 %v411
          %v514 = vunpack.c.l.b16 %v412
          %v515 = vunpack.c.l.b16 %v413
          %v516 = vunpack.c.l.b16 %v414
          %v517 = vunpack.c.l.b16 %v415
          %v518 = vunpack.c.l.b16 %v416
          %v519 = vunpack.c.l.b16 %v417
          %v520 = vpack.c.b16 %v478, %v477
          %v521 = vpack.c.b16 %v480, %v479
          %v522 = vpack.c.b16 %v482, %v481
          %v523 = vpack.c.b16 %v484, %v483
          %v524 = vpack.c.b16 %v486, %v485
          %v525 = vpack.c.b16 %v488, %v487
          %v526 = vpack.c.b16 %v490, %v489
          %v527 = vpack.c.b16 %v492, %v491
          %v528 = vpack.c.b16 %v494, %v493
          %v529 = vpack.c.b16 %v496, %v495
          %v530 = vpack.c.b16 %v498, %v497
          %v531 = vpack.c.b16 %v500, %v499
          %v532 = vpack.c.b16 %v502, %v501
          %v533 = vpack.c.b16 %v504, %v503
          %v534 = vpack.c.b16 %v506, %v505
          %v535 = vpack.c.b16 %v508, %v507
          %v536 = vpack.c.b16 %v510, %v509
          %v537 = vpack.c.b16 %v512, %v511
          %v538 = vpack.c.b16 %v514, %v513
          %v539 = vpack.c.b16 %v516, %v515
          %v540 = vpack.c.b16 %v518, %v517
          %v541 = vpack.c.b16 %v519, %v519
          %v580 = vunpack.c.l.b16 %v418
          %v581 = vunpack.c.l.b16 %v419
          %v582 = vunpack.c.l.b16 %v420
          %v583 = vunpack.c.l.b16 %v421
          %v584 = vunpack.c.l.b16 %v422
          %v585 = vunpack.c.l.b16 %v423
          %v586 = vunpack.c.l.b16 %v424
          %v587 = vunpack.c.l.b16 %v425
          %v588 = vunpack.c.l.b16 %v426
          %v589 = vunpack.c.l.b16 %v427
          %v590 = vunpack.c.l.b16 %v428
          %v591 = vunpack.c.l.b16 %v429
          %v592 = vunpack.c.l.b16 %v430
          %v593 = vunpack.c.l.b16 %v431
          %v594 = vunpack.c.l.b16 %v432
          %v595 = vunpack.c.l.b16 %v433
          %v596 = vpack.c.b16 %v581, %v580
          %v597 = vpack.c.b16 %v583, %v582
          %v598 = vpack.c.b16 %v585, %v584
          %v599 = vpack.c.b16 %v587, %v586
          %v600 = vpack.c.b16 %v589, %v588
          %v601 = vpack.c.b16 %v591, %v590
          %v602 = vpack.c.b16 %v593, %v592
          %v603 = vpack.c.b16 %v595, %v594
          %612 = vmatprep.subr.bf16.mxu0 0
          %613 = vmatpush1.bf16.msra.mxu0 %v596
          %614 = vmatprep.subr.bf16.mxu0 0
          %615 = vmatpush1.bf16.msra.mxu0 %v597
          %616 = vmatprep.subr.bf16.mxu0 0
          %617 = vmatpush1.bf16.msra.mxu0 %v598
          %618 = vmatprep.subr.bf16.mxu0 0
          %619 = vmatpush1.bf16.msra.mxu0 %v599
          %620 = vmatprep.subr.bf16.mxu0 0
          %621 = vmatpush1.bf16.msra.mxu0 %v600
          %622 = vmatprep.subr.bf16.mxu0 0
          %623 = vmatpush1.bf16.msra.mxu0 %v601
          %624 = vmatprep.subr.bf16.mxu0 0
          %625 = vmatpush1.bf16.msra.mxu0 %v602
          %626 = vmatprep.subr.bf16.mxu0 0
          %627 = vmatpush1.bf16.msra.mxu0 %v603
          %628 = vmatprep.subr.bf16.mxu0 0
          %629 = vmatpush1.bf16.msra.mxu0 0
          %630 = vmatprep.subr.bf16.mxu0 0
          %631 = vmatpush1.bf16.msra.mxu0 0
          %632 = vmatprep.subr.bf16.mxu0 0
          %633 = vmatpush1.bf16.msra.mxu0 0
          %634 = vmatprep.subr.bf16.mxu0 0
          %635 = vmatpush1.bf16.msra.mxu0 0
          %636 = vmatprep.subr.bf16.mxu0 0
          %637 = vmatpush1.bf16.msra.mxu0 0
          %638 = vmatprep.subr.bf16.mxu0 0
          %639 = vmatpush1.bf16.msra.mxu0 0
          %640 = vmatprep.subr.bf16.mxu0 0
          %641 = vmatpush1.bf16.msra.mxu0 0
          %642 = vmatprep.subr.bf16.mxu0 0
          %643 = vmatpush1.bf16.msra.mxu0 0
          %644 = vmatprep.mubr.bf16.mxu0 0
          %645 = vmatmul.mubr.bf16.gmra.mrb[0].mxu0 %v520
          %v646 = vpop.f32.mrb[0].mxu0
          %v647 = vadd.f32 0.0, %v646
          %v648 = vpop.f32.mrb[0].mxu0
          %v649 = vpop.f32.mrb[0].mxu0
          %v650 = vadd.f32 0.0, %v649
          %v651 = vpop.f32.mrb[0].mxu0
          %652 = vmatprep.mubr.bf16.mxu0 0
          %653 = vmatmul.mubr.bf16.gmra.mrb[0].mxu0 %v521
          %v654 = vpop.f32.mrb[0].mxu0
          %v655 = vadd.f32 0.0, %v654
          %v656 = vpop.f32.mrb[0].mxu0
          %v657 = vpop.f32.mrb[0].mxu0
          %v658 = vadd.f32 0.0, %v657
          %v659 = vpop.f32.mrb[0].mxu0
          %660 = vmatprep.mubr.bf16.mxu0 0
          %661 = vmatmul.mubr.bf16.gmra.mrb[0].mxu0 %v522
          %v662 = vpop.f32.mrb[0].mxu0
          %v663 = vadd.f32 0.0, %v662
          %v664 = vpop.f32.mrb[0].mxu0
          %v665 = vpop.f32.mrb[0].mxu0
          %v666 = vadd.f32 0.0, %v665
          %v667 = vpop.f32.mrb[0].mxu0
          %668 = vmatprep.mubr.bf16.mxu0 0
          %669 = vmatmul.mubr.bf16.gmra.mrb[0].mxu0 %v523
          %v670 = vpop.f32.mrb[0].mxu0
          %v671 = vadd.f32 0.0, %v670
          %v672 = vpop.f32.mrb[0].mxu0
          %v673 = vpop.f32.mrb[0].mxu0
          %v674 = vadd.f32 0.0, %v673
          %v675 = vpop.f32.mrb[0].mxu0
          %676 = vmatprep.mubr.bf16.mxu0 0
          %677 = vmatmul.mubr.bf16.gmra.mrb[0].mxu0 %v524
          %v678 = vpop.f32.mrb[0].mxu0
          %v679 = vadd.f32 0.0, %v678
          %v680 = vpop.f32.mrb[0].mxu0
          %v681 = vpop.f32.mrb[0].mxu0
          %v682 = vadd.f32 0.0, %v681
          %v683 = vpop.f32.mrb[0].mxu0
          %684 = vmatprep.mubr.bf16.mxu0 0
          %685 = vmatmul.mubr.bf16.gmra.mrb[0].mxu0 %v525
          %v686 = vpop.f32.mrb[0].mxu0
          %v687 = vadd.f32 0.0, %v686
          %v688 = vpop.f32.mrb[0].mxu0
          %v689 = vpop.f32.mrb[0].mxu0
          %v690 = vadd.f32 0.0, %v689
          %v691 = vpop.f32.mrb[0].mxu0
          %692 = vmatprep.mubr.bf16.mxu0 0
          %693 = vmatmul.mubr.bf16.gmra.mrb[0].mxu0 %v526
          %v694 = vpop.f32.mrb[0].mxu0
          %v695 = vadd.f32 0.0, %v694
          %v696 = vpop.f32.mrb[0].mxu0
          %v697 = vpop.f32.mrb[0].mxu0
          %v698 = vadd.f32 0.0, %v697
          %v699 = vpop.f32.mrb[0].mxu0
          %700 = vmatprep.mubr.bf16.mxu0 0
          %701 = vmatmul.mubr.bf16.gmra.mrb[0].mxu0 %v527
          %v702 = vpop.f32.mrb[0].mxu0
          %v703 = vadd.f32 0.0, %v702
          %v704 = vpop.f32.mrb[0].mxu0
          %v705 = vpop.f32.mrb[0].mxu0
          %v706 = vadd.f32 0.0, %v705
          %v707 = vpop.f32.mrb[0].mxu0
          %708 = vmatprep.mubr.bf16.mxu0 0
          %709 = vmatmul.mubr.bf16.gmra.mrb[0].mxu0 %v528
          %v710 = vpop.f32.mrb[0].mxu0
          %v711 = vadd.f32 0.0, %v710
          %v712 = vpop.f32.mrb[0].mxu0
          %v713 = vpop.f32.mrb[0].mxu0
          %v714 = vadd.f32 0.0, %v713
          %v715 = vpop.f32.mrb[0].mxu0
          %716 = vmatprep.mubr.bf16.mxu0 0
          %717 = vmatmul.mubr.bf16.gmra.mrb[0].mxu0 %v529
          %v718 = vpop.f32.mrb[0].mxu0
          %v719 = vadd.f32 0.0, %v718
          %v720 = vpop.f32.mrb[0].mxu0
          %v721 = vpop.f32.mrb[0].mxu0
          %v722 = vadd.f32 0.0, %v721
          %v723 = vpop.f32.mrb[0].mxu0
          %724 = vmatprep.mubr.bf16.mxu0 0
          %725 = vmatmul.mubr.bf16.gmra.mrb[0].mxu0 %v530
          %v726 = vpop.f32.mrb[0].mxu0
          %v727 = vadd.f32 0.0, %v726
          %v728 = vpop.f32.mrb[0].mxu0
          %v729 = vpop.f32.mrb[0].mxu0
          %v730 = vadd.f32 0.0, %v729
          %v731 = vpop.f32.mrb[0].mxu0
          %732 = vmatprep.mubr.bf16.mxu0 0
          %733 = vmatmul.mubr.bf16.gmra.mrb[0].mxu0 %v531
          %v734 = vpop.f32.mrb[0].mxu0
          %v735 = vadd.f32 0.0, %v734
          %v736 = vpop.f32.mrb[0].mxu0
          %v737 = vpop.f32.mrb[0].mxu0
          %v738 = vadd.f32 0.0, %v737
          %v739 = vpop.f32.mrb[0].mxu0
          %740 = vmatprep.mubr.bf16.mxu0 0
          %741 = vmatmul.mubr.bf16.gmra.mrb[0].mxu0 %v532
          %v742 = vpop.f32.mrb[0].mxu0
          %v743 = vadd.f32 0.0, %v742
          %v744 = vpop.f32.mrb[0].mxu0
          %v745 = vpop.f32.mrb[0].mxu0
          %v746 = vadd.f32 0.0, %v745
          %v747 = vpop.f32.mrb[0].mxu0
          %748 = vmatprep.mubr.bf16.mxu0 0
          %749 = vmatmul.mubr.bf16.gmra.mrb[0].mxu0 %v533
          %v750 = vpop.f32.mrb[0].mxu0
          %v751 = vadd.f32 0.0, %v750
          %v752 = vpop.f32.mrb[0].mxu0
          %v753 = vpop.f32.mrb[0].mxu0
          %v754 = vadd.f32 0.0, %v753
          %v755 = vpop.f32.mrb[0].mxu0
          %756 = vmatprep.mubr.bf16.mxu0 0
          %757 = vmatmul.mubr.bf16.gmra.mrb[0].mxu0 %v534
          %v758 = vpop.f32.mrb[0].mxu0
          %v759 = vadd.f32 0.0, %v758
          %v760 = vpop.f32.mrb[0].mxu0
          %v761 = vpop.f32.mrb[0].mxu0
          %v762 = vadd.f32 0.0, %v761
          %v763 = vpop.f32.mrb[0].mxu0
          %764 = vmatprep.mubr.bf16.mxu0 0
          %765 = vmatmul.mubr.bf16.gmra.mrb[0].mxu0 %v535
          %v766 = vpop.f32.mrb[0].mxu0
          %v767 = vadd.f32 0.0, %v766
          %v768 = vpop.f32.mrb[0].mxu0
          %v769 = vpop.f32.mrb[0].mxu0
          %v770 = vadd.f32 0.0, %v769
          %v771 = vpop.f32.mrb[0].mxu0
          %772 = vmatprep.mubr.bf16.mxu0 0
          %773 = vmatmul.mubr.bf16.gmra.mrb[0].mxu0 %v536
          %v774 = vpop.f32.mrb[0].mxu0
          %v775 = vadd.f32 0.0, %v774
          %v776 = vpop.f32.mrb[0].mxu0
          %v777 = vpop.f32.mrb[0].mxu0
          %v778 = vadd.f32 0.0, %v777
          %v779 = vpop.f32.mrb[0].mxu0
          %780 = vmatprep.mubr.bf16.mxu0 0
          %781 = vmatmul.mubr.bf16.gmra.mrb[0].mxu0 %v537
          %v782 = vpop.f32.mrb[0].mxu0
          %v783 = vadd.f32 0.0, %v782
          %v784 = vpop.f32.mrb[0].mxu0
          %v785 = vpop.f32.mrb[0].mxu0
          %v786 = vadd.f32 0.0, %v785
          %v787 = vpop.f32.mrb[0].mxu0
          %788 = vmatprep.mubr.bf16.mxu0 0
          %789 = vmatmul.mubr.bf16.gmra.mrb[0].mxu0 %v538
          %v790 = vpop.f32.mrb[0].mxu0
          %v791 = vadd.f32 0.0, %v790
          %v792 = vpop.f32.mrb[0].mxu0
          %v793 = vpop.f32.mrb[0].mxu0
          %v794 = vadd.f32 0.0, %v793
          %v795 = vpop.f32.mrb[0].mxu0
          %796 = vmatprep.mubr.bf16.mxu0 0
          %797 = vmatmul.mubr.bf16.gmra.mrb[0].mxu0 %v539
          %v798 = vpop.f32.mrb[0].mxu0
          %v799 = vadd.f32 0.0, %v798
          %v800 = vpop.f32.mrb[0].mxu0
          %v801 = vpop.f32.mrb[0].mxu0
          %v802 = vadd.f32 0.0, %v801
          %v803 = vpop.f32.mrb[0].mxu0
          %804 = vmatprep.mubr.bf16.mxu0 0
          %805 = vmatmul.mubr.bf16.gmra.mrb[0].mxu0 %v540
          %v806 = vpop.f32.mrb[0].mxu0
          %v807 = vadd.f32 0.0, %v806
          %v808 = vpop.f32.mrb[0].mxu0
          %v809 = vpop.f32.mrb[0].mxu0
          %v810 = vadd.f32 0.0, %v809
          %v811 = vpop.f32.mrb[0].mxu0
          %812 = vmatprep.mubr.bf16.mxu0 0
          %813 = vmatmul.mubr.bf16.gmra.mrb[0].mxu0 %v541
          %v814 = vpop.f32.mrb[0].mxu0
          %v815 = vadd.f32 0.0, %v814
          %v816 = vpop.f32.mrb[0].mxu0
          %v817 = vpop.f32.mrb[0].mxu0
          %v818 = vpop.f32.mrb[0].mxu0
          %819 = vdwg.mxu0
          %v820 = vmax.f32 %v647, 0.0
          %v821 = vmax.f32 %v650, 0.0
          %v822 = vmax.f32 %v655, 0.0
          %v823 = vmax.f32 %v658, 0.0
          %v824 = vmax.f32 %v663, 0.0
          %v825 = vmax.f32 %v666, 0.0
          %v826 = vmax.f32 %v671, 0.0
          %v827 = vmax.f32 %v674, 0.0
          %v828 = vmax.f32 %v679, 0.0
          %v829 = vmax.f32 %v682, 0.0
          %v830 = vmax.f32 %v687, 0.0
          %v831 = vmax.f32 %v690, 0.0
          %v832 = vmax.f32 %v695, 0.0
          %v833 = vmax.f32 %v698, 0.0
          %v834 = vmax.f32 %v703, 0.0
          %v835 = vmax.f32 %v706, 0.0
          %v836 = vmax.f32 %v711, 0.0
          %v837 = vmax.f32 %v714, 0.0
          %v838 = vmax.f32 %v719, 0.0
          %v839 = vmax.f32 %v722, 0.0
          %v840 = vmax.f32 %v727, 0.0
          %v841 = vmax.f32 %v730, 0.0
          %v842 = vmax.f32 %v735, 0.0
          %v843 = vmax.f32 %v738, 0.0
          %v844 = vmax.f32 %v743, 0.0
          %v845 = vmax.f32 %v746, 0.0
          %v846 = vmax.f32 %v751, 0.0
          %v847 = vmax.f32 %v754, 0.0
          %v848 = vmax.f32 %v759, 0.0
          %v849 = vmax.f32 %v762, 0.0
          %v850 = vmax.f32 %v767, 0.0
          %v851 = vmax.f32 %v770, 0.0
          %v852 = vmax.f32 %v775, 0.0
          %v853 = vmax.f32 %v778, 0.0
          %v854 = vmax.f32 %v783, 0.0
          %v855 = vmax.f32 %v786, 0.0
          %v856 = vmax.f32 %v791, 0.0
          %v857 = vmax.f32 %v794, 0.0
          %v858 = vmax.f32 %v799, 0.0
          %v859 = vmax.f32 %v802, 0.0
          %v860 = vmax.f32 %v807, 0.0
          %v861 = vmax.f32 %v810, 0.0
          %v862 = vmax.f32 %v815, 0.0
          %v863 = vpack.c.bf16 %v821, %v820
          %v864 = vpack.c.bf16 %v823, %v822
          %v865 = vpack.c.bf16 %v825, %v824
          %v866 = vpack.c.bf16 %v827, %v826
          %v867 = vpack.c.bf16 %v829, %v828
          %v868 = vpack.c.bf16 %v831, %v830
          %v869 = vpack.c.bf16 %v833, %v832
          %v870 = vpack.c.bf16 %v835, %v834
          %v871 = vpack.c.bf16 %v837, %v836
          %v872 = vpack.c.bf16 %v839, %v838
          %v873 = vpack.c.bf16 %v841, %v840
          %v874 = vpack.c.bf16 %v843, %v842
          %v875 = vpack.c.bf16 %v845, %v844
          %v876 = vpack.c.bf16 %v847, %v846
          %v877 = vpack.c.bf16 %v849, %v848
          %v878 = vpack.c.bf16 %v851, %v850
          %v879 = vpack.c.bf16 %v853, %v852
          %v880 = vpack.c.bf16 %v855, %v854
          %v881 = vpack.c.bf16 %v857, %v856
          %v882 = vpack.c.bf16 %v859, %v858
          %v883 = vpack.c.bf16 %v861, %v860
          %v884 = vpack.c.bf16 %v862, %v862
          %v907 = vunpack.c.l.b16 %v863
          %v908 = vunpack.c.h.b16 %v863
          %v909 = vunpack.c.l.b16 %v864
          %v910 = vunpack.c.h.b16 %v864
          %v911 = vunpack.c.l.b16 %v865
          %v912 = vunpack.c.h.b16 %v865
          %v913 = vunpack.c.l.b16 %v866
          %v914 = vunpack.c.h.b16 %v866
          %v915 = vunpack.c.l.b16 %v867
          %v916 = vunpack.c.h.b16 %v867
          %v917 = vunpack.c.l.b16 %v868
          %v918 = vunpack.c.h.b16 %v868
          %v919 = vunpack.c.l.b16 %v869
          %v920 = vunpack.c.h.b16 %v869
          %v921 = vunpack.c.l.b16 %v870
          %v922 = vunpack.c.h.b16 %v870
          %v923 = vunpack.c.l.b16 %v871
          %v924 = vunpack.c.h.b16 %v871
          %v925 = vunpack.c.l.b16 %v872
          %v926 = vunpack.c.h.b16 %v872
          %v927 = vunpack.c.l.b16 %v873
          %v928 = vunpack.c.h.b16 %v873
          %v929 = vunpack.c.l.b16 %v874
          %v930 = vunpack.c.h.b16 %v874
          %v931 = vunpack.c.l.b16 %v875
          %v932 = vunpack.c.h.b16 %v875
          %v933 = vunpack.c.l.b16 %v876
          %v934 = vunpack.c.h.b16 %v876
          %v935 = vunpack.c.l.b16 %v877
          %v936 = vunpack.c.h.b16 %v877
          %v937 = vunpack.c.l.b16 %v878
          %v938 = vunpack.c.h.b16 %v878
          %v939 = vunpack.c.l.b16 %v879
          %v940 = vunpack.c.h.b16 %v879
          %v941 = vunpack.c.l.b16 %v880
          %v942 = vunpack.c.h.b16 %v880
          %v943 = vunpack.c.l.b16 %v881
          %v944 = vunpack.c.h.b16 %v881
          %v945 = vunpack.c.l.b16 %v882
          %v946 = vunpack.c.h.b16 %v882
          %v947 = vunpack.c.l.b16 %v883
          %v948 = vunpack.c.h.b16 %v883
          %v949 = vunpack.c.l.b16 %v884
          %v950 = vpack.c.b16 %v907, %v907
          %v951 = vpack.c.b16 %v908, %v908
          %v952 = vpack.c.b16 %v909, %v909
          %v953 = vpack.c.b16 %v910, %v910
          %v954 = vpack.c.b16 %v911, %v911
          %v955 = vpack.c.b16 %v912, %v912
          %v956 = vpack.c.b16 %v913, %v913
          %v957 = vpack.c.b16 %v914, %v914
          %v958 = vpack.c.b16 %v915, %v915
          %v959 = vpack.c.b16 %v916, %v916
          %v960 = vpack.c.b16 %v917, %v917
          %v961 = vpack.c.b16 %v918, %v918
          %v962 = vpack.c.b16 %v919, %v919
          %v963 = vpack.c.b16 %v920, %v920
          %v964 = vpack.c.b16 %v921, %v921
          %v965 = vpack.c.b16 %v922, %v922
          %v966 = vpack.c.b16 %v923, %v923
          %v967 = vpack.c.b16 %v924, %v924
          %v968 = vpack.c.b16 %v925, %v925
          %v969 = vpack.c.b16 %v926, %v926
          %v970 = vpack.c.b16 %v927, %v927
          %v971 = vpack.c.b16 %v928, %v928
          %v972 = vpack.c.b16 %v929, %v929
          %v973 = vpack.c.b16 %v930, %v930
          %v974 = vpack.c.b16 %v931, %v931
          %v975 = vpack.c.b16 %v932, %v932
          %v976 = vpack.c.b16 %v933, %v933
          %v977 = vpack.c.b16 %v934, %v934
          %v978 = vpack.c.b16 %v935, %v935
          %v979 = vpack.c.b16 %v936, %v936
          %v980 = vpack.c.b16 %v937, %v937
          %v981 = vpack.c.b16 %v938, %v938
          %v982 = vpack.c.b16 %v939, %v939
          %v983 = vpack.c.b16 %v940, %v940
          %v984 = vpack.c.b16 %v941, %v941
          %v985 = vpack.c.b16 %v942, %v942
          %v986 = vpack.c.b16 %v943, %v943
          %v987 = vpack.c.b16 %v944, %v944
          %v988 = vpack.c.b16 %v945, %v945
          %v989 = vpack.c.b16 %v946, %v946
          %v990 = vpack.c.b16 %v947, %v947
          %v991 = vpack.c.b16 %v948, %v948
          %v992 = vpack.c.b16 %v949, %v949
          %1036 = vst [vmem:[#allocation2] sm:$0xf] %v950
          %1037 = vst [vmem:[#allocation2 + $0x4] sm:$0xf] %v951
          %1038 = vst [vmem:[#allocation2 + $0x8] sm:$0xf] %v952
          %1039 = vst [vmem:[#allocation2 + $0xc] sm:$0xf] %v953
          %1040 = vst [vmem:[#allocation2 + $0x10] sm:$0xf] %v954
          %1041 = vst [vmem:[#allocation2 + $0x14] sm:$0xf] %v955
          %1042 = vst [vmem:[#allocation2 + $0x18] sm:$0xf] %v956
          %1043 = vst [vmem:[#allocation2 + $0x1c] sm:$0xf] %v957
          %1044 = vst [vmem:[#allocation2 + $0x20] sm:$0xf] %v958
          %1045 = vst [vmem:[#allocation2 + $0x24] sm:$0xf] %v959
          %1046 = vst [vmem:[#allocation2 + $0x28] sm:$0xf] %v960
          %1047 = vst [vmem:[#allocation2 + $0x2c] sm:$0xf] %v961
          %1048 = vst [vmem:[#allocation2 + $0x30] sm:$0xf] %v962
          %1049 = vst [vmem:[#allocation2 + $0x34] sm:$0xf] %v963
          %1050 = vst [vmem:[#allocation2 + $0x38] sm:$0xf] %v964
          %1051 = vst [vmem:[#allocation2 + $0x3c] sm:$0xf] %v965
          %1052 = vst [vmem:[#allocation2 + $0x40] sm:$0xf] %v966
          %1053 = vst [vmem:[#allocation2 + $0x44] sm:$0xf] %v967
          %1054 = vst [vmem:[#allocation2 + $0x48] sm:$0xf] %v968
          %1055 = vst [vmem:[#allocation2 + $0x4c] sm:$0xf] %v969
          %1056 = vst [vmem:[#allocation2 + $0x50] sm:$0xf] %v970
          %1057 = vst [vmem:[#allocation2 + $0x54] sm:$0xf] %v971
          %1058 = vst [vmem:[#allocation2 + $0x58] sm:$0xf] %v972
          %1059 = vst [vmem:[#allocation2 + $0x5c] sm:$0xf] %v973
          %1060 = vst [vmem:[#allocation2 + $0x60] sm:$0xf] %v974
          %1061 = vst [vmem:[#allocation2 + $0x64] sm:$0xf] %v975
          %1062 = vst [vmem:[#allocation2 + $0x68] sm:$0xf] %v976
          %1063 = vst [vmem:[#allocation2 + $0x6c] sm:$0xf] %v977
          %1064 = vst [vmem:[#allocation2 + $0x70] sm:$0xf] %v978
          %1065 = vst [vmem:[#allocation2 + $0x74] sm:$0xf] %v979
          %1066 = vst [vmem:[#allocation2 + $0x78] sm:$0xf] %v980
          %1067 = vst [vmem:[#allocation2 + $0x7c] sm:$0xf] %v981
          %1068 = vst [vmem:[#allocation2 + $0x80] sm:$0xf] %v982
          %1069 = vst [vmem:[#allocation2 + $0x84] sm:$0xf] %v983
          %1070 = vst [vmem:[#allocation2 + $0x88] sm:$0xf] %v984
          %1071 = vst [vmem:[#allocation2 + $0x8c] sm:$0xf] %v985
          %1072 = vst [vmem:[#allocation2 + $0x90] sm:$0xf] %v986
          %1073 = vst [vmem:[#allocation2 + $0x94] sm:$0xf] %v987
          %1074 = vst [vmem:[#allocation2 + $0x98] sm:$0xf] %v988
          %1075 = vst [vmem:[#allocation2 + $0x9c] sm:$0xf] %v989
          %1076 = vst [vmem:[#allocation2 + $0xa0] sm:$0xf] %v990
          %1077 = vst [vmem:[#allocation2 + $0xa4] sm:$0xf] %v991
          %1078 = vst [vmem:[#allocation2 + $0xa8] sm:$0x7] %v992
          %v1079 = vld [vmem:[#allocation2] sm:$0xf]
          %v1080 = vld [vmem:[#allocation2 + $0x4] sm:$0xf]
          %v1081 = vld [vmem:[#allocation2 + $0x8] sm:$0xf]
          %v1082 = vld [vmem:[#allocation2 + $0xc] sm:$0xf]
          %v1083 = vld [vmem:[#allocation2 + $0x10] sm:$0xf]
          %v1084 = vld [vmem:[#allocation2 + $0x14] sm:$0xf]
          %v1085 = vld [vmem:[#allocation2 + $0x18] sm:$0xf]
          %v1086 = vld [vmem:[#allocation2 + $0x1c] sm:$0xf]
          %v1087 = vld [vmem:[#allocation2 + $0x20] sm:$0xf]
          %v1088 = vld [vmem:[#allocation2 + $0x24] sm:$0xf]
          %v1089 = vld [vmem:[#allocation2 + $0x28] sm:$0xf]
          %v1090 = vld [vmem:[#allocation2 + $0x2c] sm:$0xf]
          %v1091 = vld [vmem:[#allocation2 + $0x30] sm:$0xf]
          %v1092 = vld [vmem:[#allocation2 + $0x34] sm:$0xf]
          %v1093 = vld [vmem:[#allocation2 + $0x38] sm:$0xf]
          %v1094 = vld [vmem:[#allocation2 + $0x3c] sm:$0xf]
          %v1095 = vld [vmem:[#allocation2 + $0x40] sm:$0xf]
          %v1096 = vld [vmem:[#allocation2 + $0x44] sm:$0xf]
          %v1097 = vld [vmem:[#allocation2 + $0x48] sm:$0xf]
          %v1098 = vld [vmem:[#allocation2 + $0x4c] sm:$0xf]
          %v1099 = vld [vmem:[#allocation2 + $0x50] sm:$0xf]
          %v1100 = vld [vmem:[#allocation2 + $0x54] sm:$0xf]
          %v1101 = vld [vmem:[#allocation2 + $0x58] sm:$0xf]
          %v1102 = vld [vmem:[#allocation2 + $0x5c] sm:$0xf]
          %v1103 = vld [vmem:[#allocation2 + $0x60] sm:$0xf]
          %v1104 = vld [vmem:[#allocation2 + $0x64] sm:$0xf]
          %v1105 = vld [vmem:[#allocation2 + $0x68] sm:$0xf]
          %v1106 = vld [vmem:[#allocation2 + $0x6c] sm:$0xf]
          %v1107 = vld [vmem:[#allocation2 + $0x70] sm:$0xf]
          %v1108 = vld [vmem:[#allocation2 + $0x74] sm:$0xf]
          %v1109 = vld [vmem:[#allocation2 + $0x78] sm:$0xf]
          %v1110 = vld [vmem:[#allocation2 + $0x7c] sm:$0xf]
          %v1111 = vld [vmem:[#allocation2 + $0x80] sm:$0xf]
          %v1112 = vld [vmem:[#allocation2 + $0x84] sm:$0xf]
          %v1113 = vld [vmem:[#allocation2 + $0x88] sm:$0xf]
          %v1114 = vld [vmem:[#allocation2 + $0x8c] sm:$0xf]
          %v1115 = vld [vmem:[%s2] sm:$0xf]
          %v1116 = vld [vmem:[%s2 + $0x4] sm:$0xf]
          %v1117 = vld [vmem:[%s2 + $0x8] sm:$0xf]
          %v1118 = vld [vmem:[%s2 + $0xc] sm:$0xf]
          %v1119 = vld [vmem:[%s2 + $0x10] sm:$0xf]
          %v1120 = vld [vmem:[%s2 + $0x14] sm:$0xf]
          %v1121 = vld [vmem:[%s2 + $0x18] sm:$0xf]
          %v1122 = vld [vmem:[%s2 + $0x1c] sm:$0xf]
          %v1123 = vld [vmem:[%s2 + $0x20] sm:$0xf]
          %v1124 = vld [vmem:[%s2 + $0x24] sm:$0xf]
          %v1125 = vld [vmem:[%s2 + $0x28] sm:$0xf]
          %v1126 = vld [vmem:[%s2 + $0x2c] sm:$0xf]
          %v1127 = vld [vmem:[%s2 + $0x30] sm:$0xf]
          %v1128 = vld [vmem:[%s2 + $0x34] sm:$0xf]
          %v1129 = vld [vmem:[%s2 + $0x38] sm:$0xf]
          %v1130 = vld [vmem:[%s2 + $0x3c] sm:$0xf]
          %v1131 = vld [vmem:[#allocation2 + $0x90] sm:$0x1]
          %s1132 = scalar_lea.vmem %s2, 64
          %v1133 = vld [vmem:[%s1132] sm:$0xf]
          %v1134 = vld [vmem:[%s1132 + $0x4] sm:$0xf]
          %v1135 = vld [vmem:[%s1132 + $0x8] sm:$0xf]
          %v1136 = vld [vmem:[%s1132 + $0xc] sm:$0xf]
          %v1137 = vld [vmem:[%s1132 + $0x10] sm:$0xf]
          %v1138 = vld [vmem:[%s1132 + $0x14] sm:$0xf]
          %v1139 = vld [vmem:[%s1132 + $0x18] sm:$0xf]
          %v1140 = vld [vmem:[%s1132 + $0x1c] sm:$0xf]
          %v1141 = vld [vmem:[%s1132 + $0x20] sm:$0xf]
          %v1142 = vld [vmem:[%s1132 + $0x24] sm:$0xf]
          %v1143 = vld [vmem:[%s1132 + $0x28] sm:$0xf]
          %v1144 = vld [vmem:[%s1132 + $0x2c] sm:$0xf]
          %v1145 = vld [vmem:[%s1132 + $0x30] sm:$0xf]
          %v1146 = vld [vmem:[%s1132 + $0x34] sm:$0xf]
          %v1147 = vld [vmem:[%s1132 + $0x38] sm:$0xf]
          %v1148 = vld [vmem:[%s1132 + $0x3c] sm:$0xf]
          %v1186 = vunpack.c.l.b16 %v1079
          %v1187 = vunpack.c.l.b16 %v1080
          %v1188 = vunpack.c.l.b16 %v1081
          %v1189 = vunpack.c.l.b16 %v1082
          %v1190 = vunpack.c.l.b16 %v1083
          %v1191 = vunpack.c.l.b16 %v1084
          %v1192 = vunpack.c.l.b16 %v1085
          %v1193 = vunpack.c.l.b16 %v1086
          %v1194 = vunpack.c.l.b16 %v1087
          %v1195 = vunpack.c.l.b16 %v1088
          %v1196 = vunpack.c.l.b16 %v1089
          %v1197 = vunpack.c.l.b16 %v1090
          %v1198 = vunpack.c.l.b16 %v1091
          %v1199 = vunpack.c.l.b16 %v1092
          %v1200 = vunpack.c.l.b16 %v1093
          %v1201 = vunpack.c.l.b16 %v1094
          %v1202 = vunpack.c.l.b16 %v1095
          %v1203 = vunpack.c.l.b16 %v1096
          %v1204 = vunpack.c.l.b16 %v1097
          %v1205 = vunpack.c.l.b16 %v1098
          %v1206 = vunpack.c.l.b16 %v1099
          %v1207 = vunpack.c.l.b16 %v1100
          %v1208 = vunpack.c.l.b16 %v1101
          %v1209 = vunpack.c.l.b16 %v1102
          %v1210 = vunpack.c.l.b16 %v1103
          %v1211 = vunpack.c.l.b16 %v1104
          %v1212 = vunpack.c.l.b16 %v1105
          %v1213 = vunpack.c.l.b16 %v1106
          %v1214 = vunpack.c.l.b16 %v1107
          %v1215 = vunpack.c.l.b16 %v1108
          %v1216 = vunpack.c.l.b16 %v1109
          %v1217 = vunpack.c.l.b16 %v1110
          %v1218 = vunpack.c.l.b16 %v1111
          %v1219 = vunpack.c.l.b16 %v1112
          %v1220 = vunpack.c.l.b16 %v1113
          %v1221 = vunpack.c.l.b16 %v1114
          %v1222 = vunpack.c.l.b16 %v1131
          %v1223 = vpack.c.b16 %v1187, %v1186
          %v1224 = vpack.c.b16 %v1189, %v1188
          %v1225 = vpack.c.b16 %v1191, %v1190
          %v1226 = vpack.c.b16 %v1193, %v1192
          %v1227 = vpack.c.b16 %v1195, %v1194
          %v1228 = vpack.c.b16 %v1197, %v1196
          %v1229 = vpack.c.b16 %v1199, %v1198
          %v1230 = vpack.c.b16 %v1201, %v1200
          %v1231 = vpack.c.b16 %v1203, %v1202
          %v1232 = vpack.c.b16 %v1205, %v1204
          %v1233 = vpack.c.b16 %v1207, %v1206
          %v1234 = vpack.c.b16 %v1209, %v1208
          %v1235 = vpack.c.b16 %v1211, %v1210
          %v1236 = vpack.c.b16 %v1213, %v1212
          %v1237 = vpack.c.b16 %v1215, %v1214
          %v1238 = vpack.c.b16 %v1217, %v1216
          %v1239 = vpack.c.b16 %v1219, %v1218
          %v1240 = vpack.c.b16 %v1221, %v1220
          %v1241 = vpack.c.b16 %v1222, %v1222
          %vm1242 = vsmask.f32 7424
          %v1244 = vshrl.u32 %v1223, 16
          %v1246 = vshll.u32 %v1223, 16
          %v1248 = vrot.slane %v1246, 1
          %v1249 = vor.u32 %v1244, %v1248
          %v1251 = vshll.u32 %v1224, 16
          %v1253 = vrot.slane %v1251, 1
          %v1254 = vsel %vm1242, %v1249, %v1253
          %v1255 = vshrl.u32 %v1224, 16
          %v1257 = vor.u32 %v1255, %v1253
          %v1259 = vshll.u32 %v1225, 16
          %v1261 = vrot.slane %v1259, 1
          %v1262 = vsel %vm1242, %v1257, %v1261
          %v1263 = vshrl.u32 %v1225, 16
          %v1265 = vor.u32 %v1263, %v1261
          %v1267 = vshll.u32 %v1226, 16
          %v1269 = vrot.slane %v1267, 1
          %v1270 = vsel %vm1242, %v1265, %v1269
          %v1271 = vshrl.u32 %v1226, 16
          %v1273 = vor.u32 %v1271, %v1269
          %v1275 = vshll.u32 %v1227, 16
          %v1277 = vrot.slane %v1275, 1
          %v1278 = vsel %vm1242, %v1273, %v1277
          %v1279 = vshrl.u32 %v1227, 16
          %v1281 = vor.u32 %v1279, %v1277
          %v1283 = vshll.u32 %v1228, 16
          %v1285 = vrot.slane %v1283, 1
          %v1286 = vsel %vm1242, %v1281, %v1285
          %v1287 = vshrl.u32 %v1228, 16
          %v1289 = vor.u32 %v1287, %v1285
          %v1291 = vshll.u32 %v1229, 16
          %v1293 = vrot.slane %v1291, 1
          %v1294 = vsel %vm1242, %v1289, %v1293
          %v1295 = vshrl.u32 %v1229, 16
          %v1297 = vor.u32 %v1295, %v1293
          %v1299 = vshll.u32 %v1230, 16
          %v1301 = vrot.slane %v1299, 1
          %v1302 = vsel %vm1242, %v1297, %v1301
          %v1303 = vshrl.u32 %v1230, 16
          %v1305 = vor.u32 %v1303, %v1301
          %v1307 = vshll.u32 %v1231, 16
          %v1309 = vrot.slane %v1307, 1
          %v1310 = vsel %vm1242, %v1305, %v1309
          %v1311 = vshrl.u32 %v1231, 16
          %v1313 = vor.u32 %v1311, %v1309
          %v1315 = vshll.u32 %v1232, 16
          %v1317 = vrot.slane %v1315, 1
          %v1318 = vsel %vm1242, %v1313, %v1317
          %v1319 = vshrl.u32 %v1232, 16
          %v1321 = vor.u32 %v1319, %v1317
          %v1323 = vshll.u32 %v1233, 16
          %v1325 = vrot.slane %v1323, 1
          %v1326 = vsel %vm1242, %v1321, %v1325
          %v1327 = vshrl.u32 %v1233, 16
          %v1329 = vor.u32 %v1327, %v1325
          %v1331 = vshll.u32 %v1234, 16
          %v1333 = vrot.slane %v1331, 1
          %v1334 = vsel %vm1242, %v1329, %v1333
          %v1335 = vshrl.u32 %v1234, 16
          %v1337 = vor.u32 %v1335, %v1333
          %v1339 = vshll.u32 %v1235, 16
          %v1341 = vrot.slane %v1339, 1
          %v1342 = vsel %vm1242, %v1337, %v1341
          %v1343 = vshrl.u32 %v1235, 16
          %v1345 = vor.u32 %v1343, %v1341
          %v1347 = vshll.u32 %v1236, 16
          %v1349 = vrot.slane %v1347, 1
          %v1350 = vsel %vm1242, %v1345, %v1349
          %v1351 = vshrl.u32 %v1236, 16
          %v1353 = vor.u32 %v1351, %v1349
          %v1355 = vshll.u32 %v1237, 16
          %v1357 = vrot.slane %v1355, 1
          %v1358 = vsel %vm1242, %v1353, %v1357
          %v1359 = vshrl.u32 %v1237, 16
          %v1361 = vor.u32 %v1359, %v1357
          %v1363 = vshll.u32 %v1238, 16
          %v1365 = vrot.slane %v1363, 1
          %v1366 = vsel %vm1242, %v1361, %v1365
          %v1367 = vshrl.u32 %v1238, 16
          %v1369 = vor.u32 %v1367, %v1365
          %v1371 = vshll.u32 %v1239, 16
          %v1373 = vrot.slane %v1371, 1
          %v1374 = vsel %vm1242, %v1369, %v1373
          %v1375 = vshrl.u32 %v1239, 16
          %v1377 = vor.u32 %v1375, %v1373
          %v1379 = vshll.u32 %v1240, 16
          %v1381 = vrot.slane %v1379, 1
          %v1382 = vsel %vm1242, %v1377, %v1381
          %v1383 = vshrl.u32 %v1240, 16
          %v1385 = vor.u32 %v1383, %v1381
          %v1387 = vshll.u32 %v1241, 16
          %v1389 = vrot.slane %v1387, 1
          %v1390 = vsel %vm1242, %v1385, %v1389
          %v1425 = vunpack.c.l.b16 %v1133
          %v1426 = vunpack.c.l.b16 %v1134
          %v1427 = vunpack.c.l.b16 %v1135
          %v1428 = vunpack.c.l.b16 %v1136
          %v1429 = vunpack.c.l.b16 %v1137
          %v1430 = vunpack.c.l.b16 %v1138
          %v1431 = vunpack.c.l.b16 %v1139
          %v1432 = vunpack.c.l.b16 %v1140
          %v1433 = vunpack.c.l.b16 %v1141
          %v1434 = vunpack.c.l.b16 %v1142
          %v1435 = vunpack.c.l.b16 %v1143
          %v1436 = vunpack.c.l.b16 %v1144
          %v1437 = vunpack.c.l.b16 %v1145
          %v1438 = vunpack.c.l.b16 %v1146
          %v1439 = vunpack.c.l.b16 %v1147
          %v1440 = vunpack.c.l.b16 %v1148
          %v1441 = vpack.c.b16 %v1426, %v1425
          %v1442 = vpack.c.b16 %v1428, %v1427
          %v1443 = vpack.c.b16 %v1430, %v1429
          %v1444 = vpack.c.b16 %v1432, %v1431
          %v1445 = vpack.c.b16 %v1434, %v1433
          %v1446 = vpack.c.b16 %v1436, %v1435
          %v1447 = vpack.c.b16 %v1438, %v1437
          %v1448 = vpack.c.b16 %v1440, %v1439
          %1457 = vmatprep.subr.bf16.mxu0 0
          %1458 = vmatpush1.bf16.msra.mxu0 %v1441
          %1459 = vmatprep.subr.bf16.mxu0 0
          %1460 = vmatpush1.bf16.msra.mxu0 %v1442
          %1461 = vmatprep.subr.bf16.mxu0 0
          %1462 = vmatpush1.bf16.msra.mxu0 %v1443
          %1463 = vmatprep.subr.bf16.mxu0 0
          %1464 = vmatpush1.bf16.msra.mxu0 %v1444
          %1465 = vmatprep.subr.bf16.mxu0 0
          %1466 = vmatpush1.bf16.msra.mxu0 %v1445
          %1467 = vmatprep.subr.bf16.mxu0 0
          %1468 = vmatpush1.bf16.msra.mxu0 %v1446
          %1469 = vmatprep.subr.bf16.mxu0 0
          %1470 = vmatpush1.bf16.msra.mxu0 %v1447
          %1471 = vmatprep.subr.bf16.mxu0 0
          %1472 = vmatpush1.bf16.msra.mxu0 %v1448
          %1473 = vmatprep.subr.bf16.mxu0 0
          %1474 = vmatpush1.bf16.msra.mxu0 0
          %1475 = vmatprep.subr.bf16.mxu0 0
          %1476 = vmatpush1.bf16.msra.mxu0 0
          %1477 = vmatprep.subr.bf16.mxu0 0
          %1478 = vmatpush1.bf16.msra.mxu0 0
          %1479 = vmatprep.subr.bf16.mxu0 0
          %1480 = vmatpush1.bf16.msra.mxu0 0
          %1481 = vmatprep.subr.bf16.mxu0 0
          %1482 = vmatpush1.bf16.msra.mxu0 0
          %1483 = vmatprep.subr.bf16.mxu0 0
          %1484 = vmatpush1.bf16.msra.mxu0 0
          %1485 = vmatprep.subr.bf16.mxu0 0
          %1486 = vmatpush1.bf16.msra.mxu0 0
          %1487 = vmatprep.subr.bf16.mxu0 0
          %1488 = vmatpush1.bf16.msra.mxu0 0
          %1489 = vmatprep.mubr.bf16.mxu0 0
          %1490 = vmatmul.mubr.bf16.gmra.mrb[0].mxu0 %v1254
          %v1491 = vpop.f32.mrb[0].mxu0
          %v1492 = vadd.f32 0.0, %v1491
          %v1493 = vpop.f32.mrb[0].mxu0
          %v1494 = vpop.f32.mrb[0].mxu0
          %v1495 = vadd.f32 0.0, %v1494
          %v1496 = vpop.f32.mrb[0].mxu0
          %1497 = vmatprep.mubr.bf16.mxu0 0
          %1498 = vmatmul.mubr.bf16.gmra.mrb[0].mxu0 %v1262
          %v1499 = vpop.f32.mrb[0].mxu0
          %v1500 = vadd.f32 0.0, %v1499
          %v1501 = vpop.f32.mrb[0].mxu0
          %v1502 = vpop.f32.mrb[0].mxu0
          %v1503 = vadd.f32 0.0, %v1502
          %v1504 = vpop.f32.mrb[0].mxu0
          %1505 = vmatprep.mubr.bf16.mxu0 0
          %1506 = vmatmul.mubr.bf16.gmra.mrb[0].mxu0 %v1270
          %v1507 = vpop.f32.mrb[0].mxu0
          %v1508 = vadd.f32 0.0, %v1507
          %v1509 = vpop.f32.mrb[0].mxu0
          %v1510 = vpop.f32.mrb[0].mxu0
          %v1511 = vadd.f32 0.0, %v1510
          %v1512 = vpop.f32.mrb[0].mxu0
          %1513 = vmatprep.mubr.bf16.mxu0 0
          %1514 = vmatmul.mubr.bf16.gmra.mrb[0].mxu0 %v1278
          %v1515 = vpop.f32.mrb[0].mxu0
          %v1516 = vadd.f32 0.0, %v1515
          %v1517 = vpop.f32.mrb[0].mxu0
          %v1518 = vpop.f32.mrb[0].mxu0
          %v1519 = vadd.f32 0.0, %v1518
          %v1520 = vpop.f32.mrb[0].mxu0
          %1521 = vmatprep.mubr.bf16.mxu0 0
          %1522 = vmatmul.mubr.bf16.gmra.mrb[0].mxu0 %v1286
          %v1523 = vpop.f32.mrb[0].mxu0
          %v1524 = vadd.f32 0.0, %v1523
          %v1525 = vpop.f32.mrb[0].mxu0
          %v1526 = vpop.f32.mrb[0].mxu0
          %v1527 = vadd.f32 0.0, %v1526
          %v1528 = vpop.f32.mrb[0].mxu0
          %1529 = vmatprep.mubr.bf16.mxu0 0
          %1530 = vmatmul.mubr.bf16.gmra.mrb[0].mxu0 %v1294
          %v1531 = vpop.f32.mrb[0].mxu0
          %v1532 = vadd.f32 0.0, %v1531
          %v1533 = vpop.f32.mrb[0].mxu0
          %v1534 = vpop.f32.mrb[0].mxu0
          %v1535 = vadd.f32 0.0, %v1534
          %v1536 = vpop.f32.mrb[0].mxu0
          %1537 = vmatprep.mubr.bf16.mxu0 0
          %1538 = vmatmul.mubr.bf16.gmra.mrb[0].mxu0 %v1302
          %v1539 = vpop.f32.mrb[0].mxu0
          %v1540 = vadd.f32 0.0, %v1539
          %v1541 = vpop.f32.mrb[0].mxu0
          %v1542 = vpop.f32.mrb[0].mxu0
          %v1543 = vadd.f32 0.0, %v1542
          %v1544 = vpop.f32.mrb[0].mxu0
          %1545 = vmatprep.mubr.bf16.mxu0 0
          %1546 = vmatmul.mubr.bf16.gmra.mrb[0].mxu0 %v1310
          %v1547 = vpop.f32.mrb[0].mxu0
          %v1548 = vadd.f32 0.0, %v1547
          %v1549 = vpop.f32.mrb[0].mxu0
          %v1550 = vpop.f32.mrb[0].mxu0
          %v1551 = vadd.f32 0.0, %v1550
          %v1552 = vpop.f32.mrb[0].mxu0
          %1553 = vmatprep.mubr.bf16.mxu0 0
          %1554 = vmatmul.mubr.bf16.gmra.mrb[0].mxu0 %v1318
          %v1555 = vpop.f32.mrb[0].mxu0
          %v1556 = vadd.f32 0.0, %v1555
          %v1557 = vpop.f32.mrb[0].mxu0
          %v1558 = vpop.f32.mrb[0].mxu0
          %v1559 = vadd.f32 0.0, %v1558
          %v1560 = vpop.f32.mrb[0].mxu0
          %1561 = vmatprep.mubr.bf16.mxu0 0
          %1562 = vmatmul.mubr.bf16.gmra.mrb[0].mxu0 %v1326
          %v1563 = vpop.f32.mrb[0].mxu0
          %v1564 = vadd.f32 0.0, %v1563
          %v1565 = vpop.f32.mrb[0].mxu0
          %v1566 = vpop.f32.mrb[0].mxu0
          %v1567 = vadd.f32 0.0, %v1566
          %v1568 = vpop.f32.mrb[0].mxu0
          %1569 = vmatprep.mubr.bf16.mxu0 0
          %1570 = vmatmul.mubr.bf16.gmra.mrb[0].mxu0 %v1334
          %v1571 = vpop.f32.mrb[0].mxu0
          %v1572 = vadd.f32 0.0, %v1571
          %v1573 = vpop.f32.mrb[0].mxu0
          %v1574 = vpop.f32.mrb[0].mxu0
          %v1575 = vadd.f32 0.0, %v1574
          %v1576 = vpop.f32.mrb[0].mxu0
          %1577 = vmatprep.mubr.bf16.mxu0 0
          %1578 = vmatmul.mubr.bf16.gmra.mrb[0].mxu0 %v1342
          %v1579 = vpop.f32.mrb[0].mxu0
          %v1580 = vadd.f32 0.0, %v1579
          %v1581 = vpop.f32.mrb[0].mxu0
          %v1582 = vpop.f32.mrb[0].mxu0
          %v1583 = vadd.f32 0.0, %v1582
          %v1584 = vpop.f32.mrb[0].mxu0
          %1585 = vmatprep.mubr.bf16.mxu0 0
          %1586 = vmatmul.mubr.bf16.gmra.mrb[0].mxu0 %v1350
          %v1587 = vpop.f32.mrb[0].mxu0
          %v1588 = vadd.f32 0.0, %v1587
          %v1589 = vpop.f32.mrb[0].mxu0
          %v1590 = vpop.f32.mrb[0].mxu0
          %v1591 = vadd.f32 0.0, %v1590
          %v1592 = vpop.f32.mrb[0].mxu0
          %1593 = vmatprep.mubr.bf16.mxu0 0
          %1594 = vmatmul.mubr.bf16.gmra.mrb[0].mxu0 %v1358
          %v1595 = vpop.f32.mrb[0].mxu0
          %v1596 = vadd.f32 0.0, %v1595
          %v1597 = vpop.f32.mrb[0].mxu0
          %v1598 = vpop.f32.mrb[0].mxu0
          %v1599 = vadd.f32 0.0, %v1598
          %v1600 = vpop.f32.mrb[0].mxu0
          %1601 = vmatprep.mubr.bf16.mxu0 0
          %1602 = vmatmul.mubr.bf16.gmra.mrb[0].mxu0 %v1366
          %v1603 = vpop.f32.mrb[0].mxu0
          %v1604 = vadd.f32 0.0, %v1603
          %v1605 = vpop.f32.mrb[0].mxu0
          %v1606 = vpop.f32.mrb[0].mxu0
          %v1607 = vadd.f32 0.0, %v1606
          %v1608 = vpop.f32.mrb[0].mxu0
          %1609 = vmatprep.mubr.bf16.mxu0 0
          %1610 = vmatmul.mubr.bf16.gmra.mrb[0].mxu0 %v1374
          %v1611 = vpop.f32.mrb[0].mxu0
          %v1612 = vadd.f32 0.0, %v1611
          %v1613 = vpop.f32.mrb[0].mxu0
          %v1614 = vpop.f32.mrb[0].mxu0
          %v1615 = vadd.f32 0.0, %v1614
          %v1616 = vpop.f32.mrb[0].mxu0
          %1617 = vmatprep.mubr.bf16.mxu0 0
          %1618 = vmatmul.mubr.bf16.gmra.mrb[0].mxu0 %v1382
          %v1619 = vpop.f32.mrb[0].mxu0
          %v1620 = vadd.f32 0.0, %v1619
          %v1621 = vpop.f32.mrb[0].mxu0
          %v1622 = vpop.f32.mrb[0].mxu0
          %v1623 = vadd.f32 0.0, %v1622
          %v1624 = vpop.f32.mrb[0].mxu0
          %1625 = vmatprep.mubr.bf16.mxu0 0
          %1626 = vmatmul.mubr.bf16.gmra.mrb[0].mxu0 %v1390
          %v1627 = vpop.f32.mrb[0].mxu0
          %v1628 = vadd.f32 0.0, %v1627
          %v1629 = vpop.f32.mrb[0].mxu0
          %v1630 = vpop.f32.mrb[0].mxu0
          %v1631 = vadd.f32 0.0, %v1630
          %v1632 = vpop.f32.mrb[0].mxu0
          %1633 = vdwg.mxu0
          %v1668 = vunpack.c.l.b16 %v1115
          %v1669 = vunpack.c.l.b16 %v1116
          %v1670 = vunpack.c.l.b16 %v1117
          %v1671 = vunpack.c.l.b16 %v1118
          %v1672 = vunpack.c.l.b16 %v1119
          %v1673 = vunpack.c.l.b16 %v1120
          %v1674 = vunpack.c.l.b16 %v1121
          %v1675 = vunpack.c.l.b16 %v1122
          %v1676 = vunpack.c.l.b16 %v1123
          %v1677 = vunpack.c.l.b16 %v1124
          %v1678 = vunpack.c.l.b16 %v1125
          %v1679 = vunpack.c.l.b16 %v1126
          %v1680 = vunpack.c.l.b16 %v1127
          %v1681 = vunpack.c.l.b16 %v1128
          %v1682 = vunpack.c.l.b16 %v1129
          %v1683 = vunpack.c.l.b16 %v1130
          %v1684 = vpack.c.b16 %v1669, %v1668
          %v1685 = vpack.c.b16 %v1671, %v1670
          %v1686 = vpack.c.b16 %v1673, %v1672
          %v1687 = vpack.c.b16 %v1675, %v1674
          %v1688 = vpack.c.b16 %v1677, %v1676
          %v1689 = vpack.c.b16 %v1679, %v1678
          %v1690 = vpack.c.b16 %v1681, %v1680
          %v1691 = vpack.c.b16 %v1683, %v1682
          %1700 = vmatprep.subr.bf16.mxu0 0
          %1701 = vmatpush1.bf16.msra.mxu0 %v1684
          %1702 = vmatprep.subr.bf16.mxu0 0
          %1703 = vmatpush1.bf16.msra.mxu0 %v1685
          %1704 = vmatprep.subr.bf16.mxu0 0
          %1705 = vmatpush1.bf16.msra.mxu0 %v1686
          %1706 = vmatprep.subr.bf16.mxu0 0
          %1707 = vmatpush1.bf16.msra.mxu0 %v1687
          %1708 = vmatprep.subr.bf16.mxu0 0
          %1709 = vmatpush1.bf16.msra.mxu0 %v1688
          %1710 = vmatprep.subr.bf16.mxu0 0
          %1711 = vmatpush1.bf16.msra.mxu0 %v1689
          %1712 = vmatprep.subr.bf16.mxu0 0
          %1713 = vmatpush1.bf16.msra.mxu0 %v1690
          %1714 = vmatprep.subr.bf16.mxu0 0
          %1715 = vmatpush1.bf16.msra.mxu0 %v1691
          %1716 = vmatprep.subr.bf16.mxu0 0
          %1717 = vmatpush1.bf16.msra.mxu0 0
          %1718 = vmatprep.subr.bf16.mxu0 0
          %1719 = vmatpush1.bf16.msra.mxu0 0
          %1720 = vmatprep.subr.bf16.mxu0 0
          %1721 = vmatpush1.bf16.msra.mxu0 0
          %1722 = vmatprep.subr.bf16.mxu0 0
          %1723 = vmatpush1.bf16.msra.mxu0 0
          %1724 = vmatprep.subr.bf16.mxu0 0
          %1725 = vmatpush1.bf16.msra.mxu0 0
          %1726 = vmatprep.subr.bf16.mxu0 0
          %1727 = vmatpush1.bf16.msra.mxu0 0
          %1728 = vmatprep.subr.bf16.mxu0 0
          %1729 = vmatpush1.bf16.msra.mxu0 0
          %1730 = vmatprep.subr.bf16.mxu0 0
          %1731 = vmatpush1.bf16.msra.mxu0 0
          %1732 = vmatprep.mubr.bf16.mxu0 0
          %1733 = vmatmul.mubr.bf16.gmra.mrb[0].mxu0 %v1223
          %v1734 = vpop.f32.mrb[0].mxu0
          %v1735 = vadd.f32 %v1492, %v1734
          %v1736 = vpop.f32.mrb[0].mxu0
          %v1737 = vpop.f32.mrb[0].mxu0
          %v1738 = vadd.f32 %v1495, %v1737
          %v1739 = vpop.f32.mrb[0].mxu0
          %1740 = vmatprep.mubr.bf16.mxu0 0
          %1741 = vmatmul.mubr.bf16.gmra.mrb[0].mxu0 %v1224
          %v1742 = vpop.f32.mrb[0].mxu0
          %v1743 = vadd.f32 %v1500, %v1742
          %v1744 = vpop.f32.mrb[0].mxu0
          %v1745 = vpop.f32.mrb[0].mxu0
          %v1746 = vadd.f32 %v1503, %v1745
          %v1747 = vpop.f32.mrb[0].mxu0
          %1748 = vmatprep.mubr.bf16.mxu0 0
          %1749 = vmatmul.mubr.bf16.gmra.mrb[0].mxu0 %v1225
          %v1750 = vpop.f32.mrb[0].mxu0
          %v1751 = vadd.f32 %v1508, %v1750
          %v1752 = vpop.f32.mrb[0].mxu0
          %v1753 = vpop.f32.mrb[0].mxu0
          %v1754 = vadd.f32 %v1511, %v1753
          %v1755 = vpop.f32.mrb[0].mxu0
          %1756 = vmatprep.mubr.bf16.mxu0 0
          %1757 = vmatmul.mubr.bf16.gmra.mrb[0].mxu0 %v1226
          %v1758 = vpop.f32.mrb[0].mxu0
          %v1759 = vadd.f32 %v1516, %v1758
          %v1760 = vpop.f32.mrb[0].mxu0
          %v1761 = vpop.f32.mrb[0].mxu0
          %v1762 = vadd.f32 %v1519, %v1761
          %v1763 = vpop.f32.mrb[0].mxu0
          %1764 = vmatprep.mubr.bf16.mxu0 0
          %1765 = vmatmul.mubr.bf16.gmra.mrb[0].mxu0 %v1227
          %v1766 = vpop.f32.mrb[0].mxu0
          %v1767 = vadd.f32 %v1524, %v1766
          %v1768 = vpop.f32.mrb[0].mxu0
          %v1769 = vpop.f32.mrb[0].mxu0
          %v1770 = vadd.f32 %v1527, %v1769
          %v1771 = vpop.f32.mrb[0].mxu0
          %1772 = vmatprep.mubr.bf16.mxu0 0
          %1773 = vmatmul.mubr.bf16.gmra.mrb[0].mxu0 %v1228
          %v1774 = vpop.f32.mrb[0].mxu0
          %v1775 = vadd.f32 %v1532, %v1774
          %v1776 = vpop.f32.mrb[0].mxu0
          %v1777 = vpop.f32.mrb[0].mxu0
          %v1778 = vadd.f32 %v1535, %v1777
          %v1779 = vpop.f32.mrb[0].mxu0
          %1780 = vmatprep.mubr.bf16.mxu0 0
          %1781 = vmatmul.mubr.bf16.gmra.mrb[0].mxu0 %v1229
          %v1782 = vpop.f32.mrb[0].mxu0
          %v1783 = vadd.f32 %v1540, %v1782
          %v1784 = vpop.f32.mrb[0].mxu0
          %v1785 = vpop.f32.mrb[0].mxu0
          %v1786 = vadd.f32 %v1543, %v1785
          %v1787 = vpop.f32.mrb[0].mxu0
          %1788 = vmatprep.mubr.bf16.mxu0 0
          %1789 = vmatmul.mubr.bf16.gmra.mrb[0].mxu0 %v1230
          %v1790 = vpop.f32.mrb[0].mxu0
          %v1791 = vadd.f32 %v1548, %v1790
          %v1792 = vpop.f32.mrb[0].mxu0
          %v1793 = vpop.f32.mrb[0].mxu0
          %v1794 = vadd.f32 %v1551, %v1793
          %v1795 = vpop.f32.mrb[0].mxu0
          %1796 = vmatprep.mubr.bf16.mxu0 0
          %1797 = vmatmul.mubr.bf16.gmra.mrb[0].mxu0 %v1231
          %v1798 = vpop.f32.mrb[0].mxu0
          %v1799 = vadd.f32 %v1556, %v1798
          %v1800 = vpop.f32.mrb[0].mxu0
          %v1801 = vpop.f32.mrb[0].mxu0
          %v1802 = vadd.f32 %v1559, %v1801
          %v1803 = vpop.f32.mrb[0].mxu0
          %1804 = vmatprep.mubr.bf16.mxu0 0
          %1805 = vmatmul.mubr.bf16.gmra.mrb[0].mxu0 %v1232
          %v1806 = vpop.f32.mrb[0].mxu0
          %v1807 = vadd.f32 %v1564, %v1806
          %v1808 = vpop.f32.mrb[0].mxu0
          %v1809 = vpop.f32.mrb[0].mxu0
          %v1810 = vadd.f32 %v1567, %v1809
          %v1811 = vpop.f32.mrb[0].mxu0
          %1812 = vmatprep.mubr.bf16.mxu0 0
          %1813 = vmatmul.mubr.bf16.gmra.mrb[0].mxu0 %v1233
          %v1814 = vpop.f32.mrb[0].mxu0
          %v1815 = vadd.f32 %v1572, %v1814
          %v1816 = vpop.f32.mrb[0].mxu0
          %v1817 = vpop.f32.mrb[0].mxu0
          %v1818 = vadd.f32 %v1575, %v1817
          %v1819 = vpop.f32.mrb[0].mxu0
          %1820 = vmatprep.mubr.bf16.mxu0 0
          %1821 = vmatmul.mubr.bf16.gmra.mrb[0].mxu0 %v1234
          %v1822 = vpop.f32.mrb[0].mxu0
          %v1823 = vadd.f32 %v1580, %v1822
          %v1824 = vpop.f32.mrb[0].mxu0
          %v1825 = vpop.f32.mrb[0].mxu0
          %v1826 = vadd.f32 %v1583, %v1825
          %v1827 = vpop.f32.mrb[0].mxu0
          %1828 = vmatprep.mubr.bf16.mxu0 0
          %1829 = vmatmul.mubr.bf16.gmra.mrb[0].mxu0 %v1235
          %v1830 = vpop.f32.mrb[0].mxu0
          %v1831 = vadd.f32 %v1588, %v1830
          %v1832 = vpop.f32.mrb[0].mxu0
          %v1833 = vpop.f32.mrb[0].mxu0
          %v1834 = vadd.f32 %v1591, %v1833
          %v1835 = vpop.f32.mrb[0].mxu0
          %1836 = vmatprep.mubr.bf16.mxu0 0
          %1837 = vmatmul.mubr.bf16.gmra.mrb[0].mxu0 %v1236
          %v1838 = vpop.f32.mrb[0].mxu0
          %v1839 = vadd.f32 %v1596, %v1838
          %v1840 = vpop.f32.mrb[0].mxu0
          %v1841 = vpop.f32.mrb[0].mxu0
          %v1842 = vadd.f32 %v1599, %v1841
          %v1843 = vpop.f32.mrb[0].mxu0
          %1844 = vmatprep.mubr.bf16.mxu0 0
          %1845 = vmatmul.mubr.bf16.gmra.mrb[0].mxu0 %v1237
          %v1846 = vpop.f32.mrb[0].mxu0
          %v1847 = vadd.f32 %v1604, %v1846
          %v1848 = vpop.f32.mrb[0].mxu0
          %v1849 = vpop.f32.mrb[0].mxu0
          %v1850 = vadd.f32 %v1607, %v1849
          %v1851 = vpop.f32.mrb[0].mxu0
          %1852 = vmatprep.mubr.bf16.mxu0 0
          %1853 = vmatmul.mubr.bf16.gmra.mrb[0].mxu0 %v1238
          %v1854 = vpop.f32.mrb[0].mxu0
          %v1855 = vadd.f32 %v1612, %v1854
          %v1856 = vpop.f32.mrb[0].mxu0
          %v1857 = vpop.f32.mrb[0].mxu0
          %v1858 = vadd.f32 %v1615, %v1857
          %v1859 = vpop.f32.mrb[0].mxu0
          %1860 = vmatprep.mubr.bf16.mxu0 0
          %1861 = vmatmul.mubr.bf16.gmra.mrb[0].mxu0 %v1239
          %v1862 = vpop.f32.mrb[0].mxu0
          %v1863 = vadd.f32 %v1620, %v1862
          %v1864 = vpop.f32.mrb[0].mxu0
          %v1865 = vpop.f32.mrb[0].mxu0
          %v1866 = vadd.f32 %v1623, %v1865
          %v1867 = vpop.f32.mrb[0].mxu0
          %1868 = vmatprep.mubr.bf16.mxu0 0
          %1869 = vmatmul.mubr.bf16.gmra.mrb[0].mxu0 %v1240
          %v1870 = vpop.f32.mrb[0].mxu0
          %v1871 = vadd.f32 %v1628, %v1870
          %v1872 = vpop.f32.mrb[0].mxu0
          %v1873 = vpop.f32.mrb[0].mxu0
          %v1874 = vadd.f32 %v1631, %v1873
          %v1875 = vpop.f32.mrb[0].mxu0
          %1876 = vdwg.mxu0
          %v1877 = vld [vmem:[#allocation2] sm:$0xe]
          %s1878 = scalar_lea.vmem %s2, 128
          %v1879 = vld [vmem:[%s1878] sm:$0xf]
          %v1880 = vld [vmem:[%s1878 + $0x4] sm:$0xf]
          %v1881 = vld [vmem:[%s1878 + $0x8] sm:$0xf]
          %v1882 = vld [vmem:[%s1878 + $0xc] sm:$0xf]
          %v1883 = vld [vmem:[%s1878 + $0x10] sm:$0xf]
          %v1884 = vld [vmem:[%s1878 + $0x14] sm:$0xf]
          %v1885 = vld [vmem:[%s1878 + $0x18] sm:$0xf]
          %v1886 = vld [vmem:[%s1878 + $0x1c] sm:$0xf]
          %v1887 = vld [vmem:[%s1878 + $0x20] sm:$0xf]
          %v1888 = vld [vmem:[%s1878 + $0x24] sm:$0xf]
          %v1889 = vld [vmem:[%s1878 + $0x28] sm:$0xf]
          %v1890 = vld [vmem:[%s1878 + $0x2c] sm:$0xf]
          %v1891 = vld [vmem:[%s1878 + $0x30] sm:$0xf]
          %v1892 = vld [vmem:[%s1878 + $0x34] sm:$0xf]
          %v1893 = vld [vmem:[%s1878 + $0x38] sm:$0xf]
          %v1894 = vld [vmem:[%s1878 + $0x3c] sm:$0xf]
          %v1896 = vunpack.c.l.b16 %v1877
          %v1897 = vpack.c.b16 %v1187, %v1896
          %vm1898 = vcmask 1046528
          %v1899 = vrot.slane %v1897, 1
          %v1900 = vrot.slane %v1224, 1
          %v1901 = vsel %vm1898, %v1899, %v1900
          %v1902 = vrot.slane %v1225, 1
          %v1903 = vsel %vm1898, %v1900, %v1902
          %v1904 = vrot.slane %v1226, 1
          %v1905 = vsel %vm1898, %v1902, %v1904
          %v1906 = vrot.slane %v1227, 1
          %v1907 = vsel %vm1898, %v1904, %v1906
          %v1908 = vrot.slane %v1228, 1
          %v1909 = vsel %vm1898, %v1906, %v1908
          %v1910 = vrot.slane %v1229, 1
          %v1911 = vsel %vm1898, %v1908, %v1910
          %v1912 = vrot.slane %v1230, 1
          %v1913 = vsel %vm1898, %v1910, %v1912
          %v1914 = vrot.slane %v1231, 1
          %v1915 = vsel %vm1898, %v1912, %v1914
          %v1916 = vrot.slane %v1232, 1
          %v1917 = vsel %vm1898, %v1914, %v1916
          %v1918 = vrot.slane %v1233, 1
          %v1919 = vsel %vm1898, %v1916, %v1918
          %v1920 = vrot.slane %v1234, 1
          %v1921 = vsel %vm1898, %v1918, %v1920
          %v1922 = vrot.slane %v1235, 1
          %v1923 = vsel %vm1898, %v1920, %v1922
          %v1924 = vrot.slane %v1236, 1
          %v1925 = vsel %vm1898, %v1922, %v1924
          %v1926 = vrot.slane %v1237, 1
          %v1927 = vsel %vm1898, %v1924, %v1926
          %v1928 = vrot.slane %v1238, 1
          %v1929 = vsel %vm1898, %v1926, %v1928
          %v1930 = vrot.slane %v1239, 1
          %v1931 = vsel %vm1898, %v1928, %v1930
          %v1932 = vrot.slane %v1240, 1
          %v1933 = vsel %vm1898, %v1930, %v1932
          %v1934 = vrot.slane %v1241, 1
          %v1935 = vsel %vm1898, %v1932, %v1934
          %v1970 = vunpack.c.l.b16 %v1879
          %v1971 = vunpack.c.l.b16 %v1880
          %v1972 = vunpack.c.l.b16 %v1881
          %v1973 = vunpack.c.l.b16 %v1882
          %v1974 = vunpack.c.l.b16 %v1883
          %v1975 = vunpack.c.l.b16 %v1884
          %v1976 = vunpack.c.l.b16 %v1885
          %v1977 = vunpack.c.l.b16 %v1886
          %v1978 = vunpack.c.l.b16 %v1887
          %v1979 = vunpack.c.l.b16 %v1888
          %v1980 = vunpack.c.l.b16 %v1889
          %v1981 = vunpack.c.l.b16 %v1890
          %v1982 = vunpack.c.l.b16 %v1891
          %v1983 = vunpack.c.l.b16 %v1892
          %v1984 = vunpack.c.l.b16 %v1893
          %v1985 = vunpack.c.l.b16 %v1894
          %v1986 = vpack.c.b16 %v1971, %v1970
          %v1987 = vpack.c.b16 %v1973, %v1972
          %v1988 = vpack.c.b16 %v1975, %v1974
          %v1989 = vpack.c.b16 %v1977, %v1976
          %v1990 = vpack.c.b16 %v1979, %v1978
          %v1991 = vpack.c.b16 %v1981, %v1980
          %v1992 = vpack.c.b16 %v1983, %v1982
          %v1993 = vpack.c.b16 %v1985, %v1984
          %2002 = vmatprep.subr.bf16.mxu0 0
          %2003 = vmatpush1.bf16.msra.mxu0 %v1986
          %2004 = vmatprep.subr.bf16.mxu0 0
          %2005 = vmatpush1.bf16.msra.mxu0 %v1987
          %2006 = vmatprep.subr.bf16.mxu0 0
          %2007 = vmatpush1.bf16.msra.mxu0 %v1988
          %2008 = vmatprep.subr.bf16.mxu0 0
          %2009 = vmatpush1.bf16.msra.mxu0 %v1989
          %2010 = vmatprep.subr.bf16.mxu0 0
          %2011 = vmatpush1.bf16.msra.mxu0 %v1990
          %2012 = vmatprep.subr.bf16.mxu0 0
          %2013 = vmatpush1.bf16.msra.mxu0 %v1991
          %2014 = vmatprep.subr.bf16.mxu0 0
          %2015 = vmatpush1.bf16.msra.mxu0 %v1992
          %2016 = vmatprep.subr.bf16.mxu0 0
          %2017 = vmatpush1.bf16.msra.mxu0 %v1993
          %2018 = vmatprep.subr.bf16.mxu0 0
          %2019 = vmatpush1.bf16.msra.mxu0 0
          %2020 = vmatprep.subr.bf16.mxu0 0
          %2021 = vmatpush1.bf16.msra.mxu0 0
          %2022 = vmatprep.subr.bf16.mxu0 0
          %2023 = vmatpush1.bf16.msra.mxu0 0
          %2024 = vmatprep.subr.bf16.mxu0 0
          %2025 = vmatpush1.bf16.msra.mxu0 0
          %2026 = vmatprep.subr.bf16.mxu0 0
          %2027 = vmatpush1.bf16.msra.mxu0 0
          %2028 = vmatprep.subr.bf16.mxu0 0
          %2029 = vmatpush1.bf16.msra.mxu0 0
          %2030 = vmatprep.subr.bf16.mxu0 0
          %2031 = vmatpush1.bf16.msra.mxu0 0
          %2032 = vmatprep.subr.bf16.mxu0 0
          %2033 = vmatpush1.bf16.msra.mxu0 0
          %2034 = vmatprep.mubr.bf16.mxu0 0
          %2035 = vmatmul.mubr.bf16.gmra.mrb[0].mxu0 %v1901
          %v2036 = vpop.f32.mrb[0].mxu0
          %v2037 = vadd.f32 0.0, %v2036
          %v2038 = vpop.f32.mrb[0].mxu0
          %v2039 = vpop.f32.mrb[0].mxu0
          %v2040 = vadd.f32 0.0, %v2039
          %v2041 = vpop.f32.mrb[0].mxu0
          %2042 = vmatprep.mubr.bf16.mxu0 0
          %2043 = vmatmul.mubr.bf16.gmra.mrb[0].mxu0 %v1903
          %v2044 = vpop.f32.mrb[0].mxu0
          %v2045 = vadd.f32 0.0, %v2044
          %v2046 = vpop.f32.mrb[0].mxu0
          %v2047 = vpop.f32.mrb[0].mxu0
          %v2048 = vadd.f32 0.0, %v2047
          %v2049 = vpop.f32.mrb[0].mxu0
          %2050 = vmatprep.mubr.bf16.mxu0 0
          %2051 = vmatmul.mubr.bf16.gmra.mrb[0].mxu0 %v1905
          %v2052 = vpop.f32.mrb[0].mxu0
          %v2053 = vadd.f32 0.0, %v2052
          %v2054 = vpop.f32.mrb[0].mxu0
          %v2055 = vpop.f32.mrb[0].mxu0
          %v2056 = vadd.f32 0.0, %v2055
          %v2057 = vpop.f32.mrb[0].mxu0
          %2058 = vmatprep.mubr.bf16.mxu0 0
          %2059 = vmatmul.mubr.bf16.gmra.mrb[0].mxu0 %v1907
          %v2060 = vpop.f32.mrb[0].mxu0
          %v2061 = vadd.f32 0.0, %v2060
          %v2062 = vpop.f32.mrb[0].mxu0
          %v2063 = vpop.f32.mrb[0].mxu0
          %v2064 = vadd.f32 0.0, %v2063
          %v2065 = vpop.f32.mrb[0].mxu0
          %2066 = vmatprep.mubr.bf16.mxu0 0
          %2067 = vmatmul.mubr.bf16.gmra.mrb[0].mxu0 %v1909
          %v2068 = vpop.f32.mrb[0].mxu0
          %v2069 = vadd.f32 0.0, %v2068
          %v2070 = vpop.f32.mrb[0].mxu0
          %v2071 = vpop.f32.mrb[0].mxu0
          %v2072 = vadd.f32 0.0, %v2071
          %v2073 = vpop.f32.mrb[0].mxu0
          %2074 = vmatprep.mubr.bf16.mxu0 0
          %2075 = vmatmul.mubr.bf16.gmra.mrb[0].mxu0 %v1911
          %v2076 = vpop.f32.mrb[0].mxu0
          %v2077 = vadd.f32 0.0, %v2076
          %v2078 = vpop.f32.mrb[0].mxu0
          %v2079 = vpop.f32.mrb[0].mxu0
          %v2080 = vadd.f32 0.0, %v2079
          %v2081 = vpop.f32.mrb[0].mxu0
          %2082 = vmatprep.mubr.bf16.mxu0 0
          %2083 = vmatmul.mubr.bf16.gmra.mrb[0].mxu0 %v1913
          %v2084 = vpop.f32.mrb[0].mxu0
          %v2085 = vadd.f32 0.0, %v2084
          %v2086 = vpop.f32.mrb[0].mxu0
          %v2087 = vpop.f32.mrb[0].mxu0
          %v2088 = vadd.f32 0.0, %v2087
          %v2089 = vpop.f32.mrb[0].mxu0
          %2090 = vmatprep.mubr.bf16.mxu0 0
          %2091 = vmatmul.mubr.bf16.gmra.mrb[0].mxu0 %v1915
          %v2092 = vpop.f32.mrb[0].mxu0
          %v2093 = vadd.f32 0.0, %v2092
          %v2094 = vpop.f32.mrb[0].mxu0
          %v2095 = vpop.f32.mrb[0].mxu0
          %v2096 = vadd.f32 0.0, %v2095
          %v2097 = vpop.f32.mrb[0].mxu0
          %2098 = vmatprep.mubr.bf16.mxu0 0
          %2099 = vmatmul.mubr.bf16.gmra.mrb[0].mxu0 %v1917
          %v2100 = vpop.f32.mrb[0].mxu0
          %v2101 = vadd.f32 0.0, %v2100
          %v2102 = vpop.f32.mrb[0].mxu0
          %v2103 = vpop.f32.mrb[0].mxu0
          %v2104 = vadd.f32 0.0, %v2103
          %v2105 = vpop.f32.mrb[0].mxu0
          %2106 = vmatprep.mubr.bf16.mxu0 0
          %2107 = vmatmul.mubr.bf16.gmra.mrb[0].mxu0 %v1919
          %v2108 = vpop.f32.mrb[0].mxu0
          %v2109 = vadd.f32 0.0, %v2108
          %v2110 = vpop.f32.mrb[0].mxu0
          %v2111 = vpop.f32.mrb[0].mxu0
          %v2112 = vadd.f32 0.0, %v2111
          %v2113 = vpop.f32.mrb[0].mxu0
          %2114 = vmatprep.mubr.bf16.mxu0 0
          %2115 = vmatmul.mubr.bf16.gmra.mrb[0].mxu0 %v1921
          %v2116 = vpop.f32.mrb[0].mxu0
          %v2117 = vadd.f32 0.0, %v2116
          %v2118 = vpop.f32.mrb[0].mxu0
          %v2119 = vpop.f32.mrb[0].mxu0
          %v2120 = vadd.f32 0.0, %v2119
          %v2121 = vpop.f32.mrb[0].mxu0
          %2122 = vmatprep.mubr.bf16.mxu0 0
          %2123 = vmatmul.mubr.bf16.gmra.mrb[0].mxu0 %v1923
          %v2124 = vpop.f32.mrb[0].mxu0
          %v2125 = vadd.f32 0.0, %v2124
          %v2126 = vpop.f32.mrb[0].mxu0
          %v2127 = vpop.f32.mrb[0].mxu0
          %v2128 = vadd.f32 0.0, %v2127
          %v2129 = vpop.f32.mrb[0].mxu0
          %2130 = vmatprep.mubr.bf16.mxu0 0
          %2131 = vmatmul.mubr.bf16.gmra.mrb[0].mxu0 %v1925
          %v2132 = vpop.f32.mrb[0].mxu0
          %v2133 = vadd.f32 0.0, %v2132
          %v2134 = vpop.f32.mrb[0].mxu0
          %v2135 = vpop.f32.mrb[0].mxu0
          %v2136 = vadd.f32 0.0, %v2135
          %v2137 = vpop.f32.mrb[0].mxu0
          %2138 = vmatprep.mubr.bf16.mxu0 0
          %2139 = vmatmul.mubr.bf16.gmra.mrb[0].mxu0 %v1927
          %v2140 = vpop.f32.mrb[0].mxu0
          %v2141 = vadd.f32 0.0, %v2140
          %v2142 = vpop.f32.mrb[0].mxu0
          %v2143 = vpop.f32.mrb[0].mxu0
          %v2144 = vadd.f32 0.0, %v2143
          %v2145 = vpop.f32.mrb[0].mxu0
          %2146 = vmatprep.mubr.bf16.mxu0 0
          %2147 = vmatmul.mubr.bf16.gmra.mrb[0].mxu0 %v1929
          %v2148 = vpop.f32.mrb[0].mxu0
          %v2149 = vadd.f32 0.0, %v2148
          %v2150 = vpop.f32.mrb[0].mxu0
          %v2151 = vpop.f32.mrb[0].mxu0
          %v2152 = vadd.f32 0.0, %v2151
          %v2153 = vpop.f32.mrb[0].mxu0
          %2154 = vmatprep.mubr.bf16.mxu0 0
          %2155 = vmatmul.mubr.bf16.gmra.mrb[0].mxu0 %v1931
          %v2156 = vpop.f32.mrb[0].mxu0
          %v2157 = vadd.f32 0.0, %v2156
          %v2158 = vpop.f32.mrb[0].mxu0
          %v2159 = vpop.f32.mrb[0].mxu0
          %v2160 = vadd.f32 0.0, %v2159
          %v2161 = vpop.f32.mrb[0].mxu0
          %2162 = vmatprep.mubr.bf16.mxu0 0
          %2163 = vmatmul.mubr.bf16.gmra.mrb[0].mxu0 %v1933
          %v2164 = vpop.f32.mrb[0].mxu0
          %v2165 = vadd.f32 0.0, %v2164
          %v2166 = vpop.f32.mrb[0].mxu0
          %v2167 = vpop.f32.mrb[0].mxu0
          %v2168 = vadd.f32 0.0, %v2167
          %v2169 = vpop.f32.mrb[0].mxu0
          %2170 = vmatprep.mubr.bf16.mxu0 0
          %2171 = vmatmul.mubr.bf16.gmra.mrb[0].mxu0 %v1935
          %v2172 = vpop.f32.mrb[0].mxu0
          %v2173 = vadd.f32 0.0, %v2172
          %v2174 = vpop.f32.mrb[0].mxu0
          %v2175 = vpop.f32.mrb[0].mxu0
          %v2176 = vadd.f32 0.0, %v2175
          %v2177 = vpop.f32.mrb[0].mxu0
          %2178 = vdwg.mxu0
          %v2179 = vadd.f32 %v1735, %v2037
          %v2180 = vadd.f32 %v1738, %v2040
          %v2181 = vadd.f32 %v1743, %v2045
          %v2182 = vadd.f32 %v1746, %v2048
          %v2183 = vadd.f32 %v1751, %v2053
          %v2184 = vadd.f32 %v1754, %v2056
          %v2185 = vadd.f32 %v1759, %v2061
          %v2186 = vadd.f32 %v1762, %v2064
          %v2187 = vadd.f32 %v1767, %v2069
          %v2188 = vadd.f32 %v1770, %v2072
          %v2189 = vadd.f32 %v1775, %v2077
          %v2190 = vadd.f32 %v1778, %v2080
          %v2191 = vadd.f32 %v1783, %v2085
          %v2192 = vadd.f32 %v1786, %v2088
          %v2193 = vadd.f32 %v1791, %v2093
          %v2194 = vadd.f32 %v1794, %v2096
          %v2195 = vadd.f32 %v1799, %v2101
          %v2196 = vadd.f32 %v1802, %v2104
          %v2197 = vadd.f32 %v1807, %v2109
          %v2198 = vadd.f32 %v1810, %v2112
          %v2199 = vadd.f32 %v1815, %v2117
          %v2200 = vadd.f32 %v1818, %v2120
          %v2201 = vadd.f32 %v1823, %v2125
          %v2202 = vadd.f32 %v1826, %v2128
          %v2203 = vadd.f32 %v1831, %v2133
          %v2204 = vadd.f32 %v1834, %v2136
          %v2205 = vadd.f32 %v1839, %v2141
          %v2206 = vadd.f32 %v1842, %v2144
          %v2207 = vadd.f32 %v1847, %v2149
          %v2208 = vadd.f32 %v1850, %v2152
          %v2209 = vadd.f32 %v1855, %v2157
          %v2210 = vadd.f32 %v1858, %v2160
          %v2211 = vadd.f32 %v1863, %v2165
          %v2212 = vadd.f32 %v1866, %v2168
          %v2213 = vadd.f32 %v1871, %v2173
          %v2214 = vadd.f32 %v1874, %v2176
          %v2215 = vld [vmem:[#allocation2 + $0x8] sm:$0xe]
          %v2216 = vld [vmem:[#allocation2 + $0xc] sm:$0xf]
          %v2217 = vld [vmem:[#allocation2 + $0x10] sm:$0xf]
          %v2218 = vld [vmem:[#allocation2 + $0x14] sm:$0xf]
          %v2219 = vld [vmem:[#allocation2 + $0x18] sm:$0xf]
          %v2220 = vld [vmem:[#allocation2 + $0x1c] sm:$0xf]
          %v2221 = vld [vmem:[#allocation2 + $0x20] sm:$0xf]
          %v2222 = vld [vmem:[#allocation2 + $0x24] sm:$0xf]
          %v2223 = vld [vmem:[#allocation2 + $0x28] sm:$0xf]
          %v2224 = vld [vmem:[#allocation2 + $0x2c] sm:$0xf]
          %v2225 = vld [vmem:[#allocation2 + $0x30] sm:$0xf]
          %v2226 = vld [vmem:[#allocation2 + $0x34] sm:$0xf]
          %v2227 = vld [vmem:[#allocation2 + $0x38] sm:$0xf]
          %v2228 = vld [vmem:[#allocation2 + $0x3c] sm:$0xf]
          %v2229 = vld [vmem:[#allocation2 + $0x40] sm:$0xf]
          %v2230 = vld [vmem:[#allocation2 + $0x44] sm:$0xf]
          %v2231 = vld [vmem:[#allocation2 + $0x48] sm:$0xf]
          %v2232 = vld [vmem:[#allocation2 + $0x4c] sm:$0xf]
          %v2233 = vld [vmem:[#allocation2 + $0x50] sm:$0xf]
          %v2234 = vld [vmem:[#allocation2 + $0x54] sm:$0xf]
          %v2235 = vld [vmem:[#allocation2 + $0x58] sm:$0xf]
          %v2236 = vld [vmem:[#allocation2 + $0x5c] sm:$0xf]
          %v2237 = vld [vmem:[#allocation2 + $0x60] sm:$0xf]
          %v2238 = vld [vmem:[#allocation2 + $0x64] sm:$0xf]
          %v2239 = vld [vmem:[#allocation2 + $0x68] sm:$0xf]
          %v2240 = vld [vmem:[#allocation2 + $0x6c] sm:$0xf]
          %v2241 = vld [vmem:[#allocation2 + $0x70] sm:$0xf]
          %v2242 = vld [vmem:[#allocation2 + $0x74] sm:$0xf]
          %v2243 = vld [vmem:[#allocation2 + $0x78] sm:$0xf]
          %v2244 = vld [vmem:[#allocation2 + $0x7c] sm:$0xf]
          %v2245 = vld [vmem:[#allocation2 + $0x80] sm:$0xf]
          %v2246 = vld [vmem:[#allocation2 + $0x84] sm:$0xf]
          %v2247 = vld [vmem:[#allocation2 + $0x88] sm:$0xf]
          %v2248 = vld [vmem:[#allocation2 + $0x8c] sm:$0xf]
          %v2249 = vld [vmem:[#allocation2 + $0x90] sm:$0xf]
          %v2250 = vld [vmem:[#allocation2 + $0x94] sm:$0xf]
          %v2251 = vld [vmem:[#allocation2 + $0x98] sm:$0x1]
          %s2252 = scalar_lea.vmem %s2, 192
          %v2253 = vld [vmem:[%s2252] sm:$0xf]
          %v2254 = vld [vmem:[%s2252 + $0x4] sm:$0xf]
          %v2255 = vld [vmem:[%s2252 + $0x8] sm:$0xf]
          %v2256 = vld [vmem:[%s2252 + $0xc] sm:$0xf]
          %v2257 = vld [vmem:[%s2252 + $0x10] sm:$0xf]
          %v2258 = vld [vmem:[%s2252 + $0x14] sm:$0xf]
          %v2259 = vld [vmem:[%s2252 + $0x18] sm:$0xf]
          %v2260 = vld [vmem:[%s2252 + $0x1c] sm:$0xf]
          %v2261 = vld [vmem:[%s2252 + $0x20] sm:$0xf]
          %v2262 = vld [vmem:[%s2252 + $0x24] sm:$0xf]
          %v2263 = vld [vmem:[%s2252 + $0x28] sm:$0xf]
          %v2264 = vld [vmem:[%s2252 + $0x2c] sm:$0xf]
          %v2265 = vld [vmem:[%s2252 + $0x30] sm:$0xf]
          %v2266 = vld [vmem:[%s2252 + $0x34] sm:$0xf]
          %v2267 = vld [vmem:[%s2252 + $0x38] sm:$0xf]
          %v2268 = vld [vmem:[%s2252 + $0x3c] sm:$0xf]
          %v2306 = vunpack.c.l.b16 %v2215
          %v2307 = vunpack.c.l.b16 %v2216
          %v2308 = vunpack.c.l.b16 %v2217
          %v2309 = vunpack.c.l.b16 %v2218
          %v2310 = vunpack.c.l.b16 %v2219
          %v2311 = vunpack.c.l.b16 %v2220
          %v2312 = vunpack.c.l.b16 %v2221
          %v2313 = vunpack.c.l.b16 %v2222
          %v2314 = vunpack.c.l.b16 %v2223
          %v2315 = vunpack.c.l.b16 %v2224
          %v2316 = vunpack.c.l.b16 %v2225
          %v2317 = vunpack.c.l.b16 %v2226
          %v2318 = vunpack.c.l.b16 %v2227
          %v2319 = vunpack.c.l.b16 %v2228
          %v2320 = vunpack.c.l.b16 %v2229
          %v2321 = vunpack.c.l.b16 %v2230
          %v2322 = vunpack.c.l.b16 %v2231
          %v2323 = vunpack.c.l.b16 %v2232
          %v2324 = vunpack.c.l.b16 %v2233
          %v2325 = vunpack.c.l.b16 %v2234
          %v2326 = vunpack.c.l.b16 %v2235
          %v2327 = vunpack.c.l.b16 %v2236
          %v2328 = vunpack.c.l.b16 %v2237
          %v2329 = vunpack.c.l.b16 %v2238
          %v2330 = vunpack.c.l.b16 %v2239
          %v2331 = vunpack.c.l.b16 %v2240
          %v2332 = vunpack.c.l.b16 %v2241
          %v2333 = vunpack.c.l.b16 %v2242
          %v2334 = vunpack.c.l.b16 %v2243
          %v2335 = vunpack.c.l.b16 %v2244
          %v2336 = vunpack.c.l.b16 %v2245
          %v2337 = vunpack.c.l.b16 %v2246
          %v2338 = vunpack.c.l.b16 %v2247
          %v2339 = vunpack.c.l.b16 %v2248
          %v2340 = vunpack.c.l.b16 %v2249
          %v2341 = vunpack.c.l.b16 %v2250
          %v2342 = vunpack.c.l.b16 %v2251
          %v2343 = vpack.c.b16 %v2307, %v2306
          %v2344 = vpack.c.b16 %v2309, %v2308
          %v2345 = vpack.c.b16 %v2311, %v2310
          %v2346 = vpack.c.b16 %v2313, %v2312
          %v2347 = vpack.c.b16 %v2315, %v2314
          %v2348 = vpack.c.b16 %v2317, %v2316
          %v2349 = vpack.c.b16 %v2319, %v2318
          %v2350 = vpack.c.b16 %v2321, %v2320
          %v2351 = vpack.c.b16 %v2323, %v2322
          %v2352 = vpack.c.b16 %v2325, %v2324
          %v2353 = vpack.c.b16 %v2327, %v2326
          %v2354 = vpack.c.b16 %v2329, %v2328
          %v2355 = vpack.c.b16 %v2331, %v2330
          %v2356 = vpack.c.b16 %v2333, %v2332
          %v2357 = vpack.c.b16 %v2335, %v2334
          %v2358 = vpack.c.b16 %v2337, %v2336
          %v2359 = vpack.c.b16 %v2339, %v2338
          %v2360 = vpack.c.b16 %v2341, %v2340
          %v2361 = vpack.c.b16 %v2342, %v2342
          %v2362 = vrot.slane %v2343, 1
          %v2363 = vrot.slane %v2344, 1
          %v2364 = vsel %vm1898, %v2362, %v2363
          %v2365 = vrot.slane %v2345, 1
          %v2366 = vsel %vm1898, %v2363, %v2365
          %v2367 = vrot.slane %v2346, 1
          %v2368 = vsel %vm1898, %v2365, %v2367
          %v2369 = vrot.slane %v2347, 1
          %v2370 = vsel %vm1898, %v2367, %v2369
          %v2371 = vrot.slane %v2348, 1
          %v2372 = vsel %vm1898, %v2369, %v2371
          %v2373 = vrot.slane %v2349, 1
          %v2374 = vsel %vm1898, %v2371, %v2373
          %v2375 = vrot.slane %v2350, 1
          %v2376 = vsel %vm1898, %v2373, %v2375
          %v2377 = vrot.slane %v2351, 1
          %v2378 = vsel %vm1898, %v2375, %v2377
          %v2379 = vrot.slane %v2352, 1
          %v2380 = vsel %vm1898, %v2377, %v2379
          %v2381 = vrot.slane %v2353, 1
          %v2382 = vsel %vm1898, %v2379, %v2381
          %v2383 = vrot.slane %v2354, 1
          %v2384 = vsel %vm1898, %v2381, %v2383
          %v2385 = vrot.slane %v2355, 1
          %v2386 = vsel %vm1898, %v2383, %v2385
          %v2387 = vrot.slane %v2356, 1
          %v2388 = vsel %vm1898, %v2385, %v2387
          %v2389 = vrot.slane %v2357, 1
          %v2390 = vsel %vm1898, %v2387, %v2389
          %v2391 = vrot.slane %v2358, 1
          %v2392 = vsel %vm1898, %v2389, %v2391
          %v2393 = vrot.slane %v2359, 1
          %v2394 = vsel %vm1898, %v2391, %v2393
          %v2395 = vrot.slane %v2360, 1
          %v2396 = vsel %vm1898, %v2393, %v2395
          %v2397 = vrot.slane %v2361, 1
          %v2398 = vsel %vm1898, %v2395, %v2397
          %v2433 = vunpack.c.l.b16 %v2253
          %v2434 = vunpack.c.l.b16 %v2254
          %v2435 = vunpack.c.l.b16 %v2255
          %v2436 = vunpack.c.l.b16 %v2256
          %v2437 = vunpack.c.l.b16 %v2257
          %v2438 = vunpack.c.l.b16 %v2258
          %v2439 = vunpack.c.l.b16 %v2259
          %v2440 = vunpack.c.l.b16 %v2260
          %v2441 = vunpack.c.l.b16 %v2261
          %v2442 = vunpack.c.l.b16 %v2262
          %v2443 = vunpack.c.l.b16 %v2263
          %v2444 = vunpack.c.l.b16 %v2264
          %v2445 = vunpack.c.l.b16 %v2265
          %v2446 = vunpack.c.l.b16 %v2266
          %v2447 = vunpack.c.l.b16 %v2267
          %v2448 = vunpack.c.l.b16 %v2268
          %v2449 = vpack.c.b16 %v2434, %v2433
          %v2450 = vpack.c.b16 %v2436, %v2435
          %v2451 = vpack.c.b16 %v2438, %v2437
          %v2452 = vpack.c.b16 %v2440, %v2439
          %v2453 = vpack.c.b16 %v2442, %v2441
          %v2454 = vpack.c.b16 %v2444, %v2443
          %v2455 = vpack.c.b16 %v2446, %v2445
          %v2456 = vpack.c.b16 %v2448, %v2447
          %2465 = vmatprep.subr.bf16.mxu0 0
          %2466 = vmatpush1.bf16.msra.mxu0 %v2449
          %2467 = vmatprep.subr.bf16.mxu0 0
          %2468 = vmatpush1.bf16.msra.mxu0 %v2450
          %2469 = vmatprep.subr.bf16.mxu0 0
          %2470 = vmatpush1.bf16.msra.mxu0 %v2451
          %2471 = vmatprep.subr.bf16.mxu0 0
          %2472 = vmatpush1.bf16.msra.mxu0 %v2452
          %2473 = vmatprep.subr.bf16.mxu0 0
          %2474 = vmatpush1.bf16.msra.mxu0 %v2453
          %2475 = vmatprep.subr.bf16.mxu0 0
          %2476 = vmatpush1.bf16.msra.mxu0 %v2454
          %2477 = vmatprep.subr.bf16.mxu0 0
          %2478 = vmatpush1.bf16.msra.mxu0 %v2455
          %2479 = vmatprep.subr.bf16.mxu0 0
          %2480 = vmatpush1.bf16.msra.mxu0 %v2456
          %2481 = vmatprep.subr.bf16.mxu0 0
          %2482 = vmatpush1.bf16.msra.mxu0 0
          %2483 = vmatprep.subr.bf16.mxu0 0
          %2484 = vmatpush1.bf16.msra.mxu0 0
          %2485 = vmatprep.subr.bf16.mxu0 0
          %2486 = vmatpush1.bf16.msra.mxu0 0
          %2487 = vmatprep.subr.bf16.mxu0 0
          %2488 = vmatpush1.bf16.msra.mxu0 0
          %2489 = vmatprep.subr.bf16.mxu0 0
          %2490 = vmatpush1.bf16.msra.mxu0 0
          %2491 = vmatprep.subr.bf16.mxu0 0
          %2492 = vmatpush1.bf16.msra.mxu0 0
          %2493 = vmatprep.subr.bf16.mxu0 0
          %2494 = vmatpush1.bf16.msra.mxu0 0
          %2495 = vmatprep.subr.bf16.mxu0 0
          %2496 = vmatpush1.bf16.msra.mxu0 0
          %2497 = vmatprep.mubr.bf16.mxu0 0
          %2498 = vmatmul.mubr.bf16.gmra.mrb[0].mxu0 %v2364
          %v2499 = vpop.f32.mrb[0].mxu0
          %v2500 = vadd.f32 0.0, %v2499
          %v2501 = vpop.f32.mrb[0].mxu0
          %v2502 = vpop.f32.mrb[0].mxu0
          %v2503 = vadd.f32 0.0, %v2502
          %v2504 = vpop.f32.mrb[0].mxu0
          %2505 = vmatprep.mubr.bf16.mxu0 0
          %2506 = vmatmul.mubr.bf16.gmra.mrb[0].mxu0 %v2366
          %v2507 = vpop.f32.mrb[0].mxu0
          %v2508 = vadd.f32 0.0, %v2507
          %v2509 = vpop.f32.mrb[0].mxu0
          %v2510 = vpop.f32.mrb[0].mxu0
          %v2511 = vadd.f32 0.0, %v2510
          %v2512 = vpop.f32.mrb[0].mxu0
          %2513 = vmatprep.mubr.bf16.mxu0 0
          %2514 = vmatmul.mubr.bf16.gmra.mrb[0].mxu0 %v2368
          %v2515 = vpop.f32.mrb[0].mxu0
          %v2516 = vadd.f32 0.0, %v2515
          %v2517 = vpop.f32.mrb[0].mxu0
          %v2518 = vpop.f32.mrb[0].mxu0
          %v2519 = vadd.f32 0.0, %v2518
          %v2520 = vpop.f32.mrb[0].mxu0
          %2521 = vmatprep.mubr.bf16.mxu0 0
          %2522 = vmatmul.mubr.bf16.gmra.mrb[0].mxu0 %v2370
          %v2523 = vpop.f32.mrb[0].mxu0
          %v2524 = vadd.f32 0.0, %v2523
          %v2525 = vpop.f32.mrb[0].mxu0
          %v2526 = vpop.f32.mrb[0].mxu0
          %v2527 = vadd.f32 0.0, %v2526
          %v2528 = vpop.f32.mrb[0].mxu0
          %2529 = vmatprep.mubr.bf16.mxu0 0
          %2530 = vmatmul.mubr.bf16.gmra.mrb[0].mxu0 %v2372
          %v2531 = vpop.f32.mrb[0].mxu0
          %v2532 = vadd.f32 0.0, %v2531
          %v2533 = vpop.f32.mrb[0].mxu0
          %v2534 = vpop.f32.mrb[0].mxu0
          %v2535 = vadd.f32 0.0, %v2534
          %v2536 = vpop.f32.mrb[0].mxu0
          %2537 = vmatprep.mubr.bf16.mxu0 0
          %2538 = vmatmul.mubr.bf16.gmra.mrb[0].mxu0 %v2374
          %v2539 = vpop.f32.mrb[0].mxu0
          %v2540 = vadd.f32 0.0, %v2539
          %v2541 = vpop.f32.mrb[0].mxu0
          %v2542 = vpop.f32.mrb[0].mxu0
          %v2543 = vadd.f32 0.0, %v2542
          %v2544 = vpop.f32.mrb[0].mxu0
          %2545 = vmatprep.mubr.bf16.mxu0 0
          %2546 = vmatmul.mubr.bf16.gmra.mrb[0].mxu0 %v2376
          %v2547 = vpop.f32.mrb[0].mxu0
          %v2548 = vadd.f32 0.0, %v2547
          %v2549 = vpop.f32.mrb[0].mxu0
          %v2550 = vpop.f32.mrb[0].mxu0
          %v2551 = vadd.f32 0.0, %v2550
          %v2552 = vpop.f32.mrb[0].mxu0
          %2553 = vmatprep.mubr.bf16.mxu0 0
          %2554 = vmatmul.mubr.bf16.gmra.mrb[0].mxu0 %v2378
          %v2555 = vpop.f32.mrb[0].mxu0
          %v2556 = vadd.f32 0.0, %v2555
          %v2557 = vpop.f32.mrb[0].mxu0
          %v2558 = vpop.f32.mrb[0].mxu0
          %v2559 = vadd.f32 0.0, %v2558
          %v2560 = vpop.f32.mrb[0].mxu0
          %2561 = vmatprep.mubr.bf16.mxu0 0
          %2562 = vmatmul.mubr.bf16.gmra.mrb[0].mxu0 %v2380
          %v2563 = vpop.f32.mrb[0].mxu0
          %v2564 = vadd.f32 0.0, %v2563
          %v2565 = vpop.f32.mrb[0].mxu0
          %v2566 = vpop.f32.mrb[0].mxu0
          %v2567 = vadd.f32 0.0, %v2566
          %v2568 = vpop.f32.mrb[0].mxu0
          %2569 = vmatprep.mubr.bf16.mxu0 0
          %2570 = vmatmul.mubr.bf16.gmra.mrb[0].mxu0 %v2382
          %v2571 = vpop.f32.mrb[0].mxu0
          %v2572 = vadd.f32 0.0, %v2571
          %v2573 = vpop.f32.mrb[0].mxu0
          %v2574 = vpop.f32.mrb[0].mxu0
          %v2575 = vadd.f32 0.0, %v2574
          %v2576 = vpop.f32.mrb[0].mxu0
          %2577 = vmatprep.mubr.bf16.mxu0 0
          %2578 = vmatmul.mubr.bf16.gmra.mrb[0].mxu0 %v2384
          %v2579 = vpop.f32.mrb[0].mxu0
          %v2580 = vadd.f32 0.0, %v2579
          %v2581 = vpop.f32.mrb[0].mxu0
          %v2582 = vpop.f32.mrb[0].mxu0
          %v2583 = vadd.f32 0.0, %v2582
          %v2584 = vpop.f32.mrb[0].mxu0
          %2585 = vmatprep.mubr.bf16.mxu0 0
          %2586 = vmatmul.mubr.bf16.gmra.mrb[0].mxu0 %v2386
          %v2587 = vpop.f32.mrb[0].mxu0
          %v2588 = vadd.f32 0.0, %v2587
          %v2589 = vpop.f32.mrb[0].mxu0
          %v2590 = vpop.f32.mrb[0].mxu0
          %v2591 = vadd.f32 0.0, %v2590
          %v2592 = vpop.f32.mrb[0].mxu0
          %2593 = vmatprep.mubr.bf16.mxu0 0
          %2594 = vmatmul.mubr.bf16.gmra.mrb[0].mxu0 %v2388
          %v2595 = vpop.f32.mrb[0].mxu0
          %v2596 = vadd.f32 0.0, %v2595
          %v2597 = vpop.f32.mrb[0].mxu0
          %v2598 = vpop.f32.mrb[0].mxu0
          %v2599 = vadd.f32 0.0, %v2598
          %v2600 = vpop.f32.mrb[0].mxu0
          %2601 = vmatprep.mubr.bf16.mxu0 0
          %2602 = vmatmul.mubr.bf16.gmra.mrb[0].mxu0 %v2390
          %v2603 = vpop.f32.mrb[0].mxu0
          %v2604 = vadd.f32 0.0, %v2603
          %v2605 = vpop.f32.mrb[0].mxu0
          %v2606 = vpop.f32.mrb[0].mxu0
          %v2607 = vadd.f32 0.0, %v2606
          %v2608 = vpop.f32.mrb[0].mxu0
          %2609 = vmatprep.mubr.bf16.mxu0 0
          %2610 = vmatmul.mubr.bf16.gmra.mrb[0].mxu0 %v2392
          %v2611 = vpop.f32.mrb[0].mxu0
          %v2612 = vadd.f32 0.0, %v2611
          %v2613 = vpop.f32.mrb[0].mxu0
          %v2614 = vpop.f32.mrb[0].mxu0
          %v2615 = vadd.f32 0.0, %v2614
          %v2616 = vpop.f32.mrb[0].mxu0
          %2617 = vmatprep.mubr.bf16.mxu0 0
          %2618 = vmatmul.mubr.bf16.gmra.mrb[0].mxu0 %v2394
          %v2619 = vpop.f32.mrb[0].mxu0
          %v2620 = vadd.f32 0.0, %v2619
          %v2621 = vpop.f32.mrb[0].mxu0
          %v2622 = vpop.f32.mrb[0].mxu0
          %v2623 = vadd.f32 0.0, %v2622
          %v2624 = vpop.f32.mrb[0].mxu0
          %2625 = vmatprep.mubr.bf16.mxu0 0
          %2626 = vmatmul.mubr.bf16.gmra.mrb[0].mxu0 %v2396
          %v2627 = vpop.f32.mrb[0].mxu0
          %v2628 = vadd.f32 0.0, %v2627
          %v2629 = vpop.f32.mrb[0].mxu0
          %v2630 = vpop.f32.mrb[0].mxu0
          %v2631 = vadd.f32 0.0, %v2630
          %v2632 = vpop.f32.mrb[0].mxu0
          %2633 = vmatprep.mubr.bf16.mxu0 0
          %2634 = vmatmul.mubr.bf16.gmra.mrb[0].mxu0 %v2398
          %v2635 = vpop.f32.mrb[0].mxu0
          %v2636 = vadd.f32 0.0, %v2635
          %v2637 = vpop.f32.mrb[0].mxu0
          %v2638 = vpop.f32.mrb[0].mxu0
          %v2639 = vadd.f32 0.0, %v2638
          %v2640 = vpop.f32.mrb[0].mxu0
          %2641 = vdwg.mxu0
          %v2642 = vadd.f32 %v2179, %v2500
          %v2643 = vadd.f32 %v2180, %v2503
          %v2644 = vadd.f32 %v2181, %v2508
          %v2645 = vadd.f32 %v2182, %v2511
          %v2646 = vadd.f32 %v2183, %v2516
          %v2647 = vadd.f32 %v2184, %v2519
          %v2648 = vadd.f32 %v2185, %v2524
          %v2649 = vadd.f32 %v2186, %v2527
          %v2650 = vadd.f32 %v2187, %v2532
          %v2651 = vadd.f32 %v2188, %v2535
          %v2652 = vadd.f32 %v2189, %v2540
          %v2653 = vadd.f32 %v2190, %v2543
          %v2654 = vadd.f32 %v2191, %v2548
          %v2655 = vadd.f32 %v2192, %v2551
          %v2656 = vadd.f32 %v2193, %v2556
          %v2657 = vadd.f32 %v2194, %v2559
          %v2658 = vadd.f32 %v2195, %v2564
          %v2659 = vadd.f32 %v2196, %v2567
          %v2660 = vadd.f32 %v2197, %v2572
          %v2661 = vadd.f32 %v2198, %v2575
          %v2662 = vadd.f32 %v2199, %v2580
          %v2663 = vadd.f32 %v2200, %v2583
          %v2664 = vadd.f32 %v2201, %v2588
          %v2665 = vadd.f32 %v2202, %v2591
          %v2666 = vadd.f32 %v2203, %v2596
          %v2667 = vadd.f32 %v2204, %v2599
          %v2668 = vadd.f32 %v2205, %v2604
          %v2669 = vadd.f32 %v2206, %v2607
          %v2670 = vadd.f32 %v2207, %v2612
          %v2671 = vadd.f32 %v2208, %v2615
          %v2672 = vadd.f32 %v2209, %v2620
          %v2673 = vadd.f32 %v2210, %v2623
          %v2674 = vadd.f32 %v2211, %v2628
          %v2675 = vadd.f32 %v2212, %v2631
          %v2676 = vadd.f32 %v2213, %v2636
          %v2677 = vadd.f32 %v2214, %v2639
          %v2678 = vld [vmem:[#allocation2 + $0x98] sm:$0x3]
          %s2679 = scalar_lea.vmem %s2, 256
          %v2680 = vld [vmem:[%s2679] sm:$0xf]
          %v2681 = vld [vmem:[%s2679 + $0x4] sm:$0xf]
          %v2682 = vld [vmem:[%s2679 + $0x8] sm:$0xf]
          %v2683 = vld [vmem:[%s2679 + $0xc] sm:$0xf]
          %v2684 = vld [vmem:[%s2679 + $0x10] sm:$0xf]
          %v2685 = vld [vmem:[%s2679 + $0x14] sm:$0xf]
          %v2686 = vld [vmem:[%s2679 + $0x18] sm:$0xf]
          %v2687 = vld [vmem:[%s2679 + $0x1c] sm:$0xf]
          %v2688 = vld [vmem:[%s2679 + $0x20] sm:$0xf]
          %v2689 = vld [vmem:[%s2679 + $0x24] sm:$0xf]
          %v2690 = vld [vmem:[%s2679 + $0x28] sm:$0xf]
          %v2691 = vld [vmem:[%s2679 + $0x2c] sm:$0xf]
          %v2692 = vld [vmem:[%s2679 + $0x30] sm:$0xf]
          %v2693 = vld [vmem:[%s2679 + $0x34] sm:$0xf]
          %v2694 = vld [vmem:[%s2679 + $0x38] sm:$0xf]
          %v2695 = vld [vmem:[%s2679 + $0x3c] sm:$0xf]
          %v2697 = vunpack.c.l.b16 %v2678
          %v2698 = vpack.c.b16 %v2697, %v2697
          %vm2699 = vsmask.f32 6400
          %v2701 = vshrl.u32 %v2343, 16
          %v2703 = vrot.slane %v2701, 1
          %v2704 = vshll.u32 %v2343, 16
          %v2706 = vrot.slane %v2704, 2
          %v2707 = vor.u32 %v2703, %v2706
          %v2709 = vshrl.u32 %v2344, 16
          %v2711 = vrot.slane %v2709, 1
          %v2712 = vshll.u32 %v2344, 16
          %v2714 = vrot.slane %v2712, 2
          %v2715 = vor.u32 %v2711, %v2714
          %v2716 = vsel %vm2699, %v2707, %v2715
          %v2718 = vshrl.u32 %v2345, 16
          %v2720 = vrot.slane %v2718, 1
          %v2721 = vshll.u32 %v2345, 16
          %v2723 = vrot.slane %v2721, 2
          %v2724 = vor.u32 %v2720, %v2723
          %v2725 = vsel %vm2699, %v2715, %v2724
          %v2727 = vshrl.u32 %v2346, 16
          %v2729 = vrot.slane %v2727, 1
          %v2730 = vshll.u32 %v2346, 16
          %v2732 = vrot.slane %v2730, 2
          %v2733 = vor.u32 %v2729, %v2732
          %v2734 = vsel %vm2699, %v2724, %v2733
          %v2736 = vshrl.u32 %v2347, 16
          %v2738 = vrot.slane %v2736, 1
          %v2739 = vshll.u32 %v2347, 16
          %v2741 = vrot.slane %v2739, 2
          %v2742 = vor.u32 %v2738, %v2741
          %v2743 = vsel %vm2699, %v2733, %v2742
          %v2745 = vshrl.u32 %v2348, 16
          %v2747 = vrot.slane %v2745, 1
          %v2748 = vshll.u32 %v2348, 16
          %v2750 = vrot.slane %v2748, 2
          %v2751 = vor.u32 %v2747, %v2750
          %v2752 = vsel %vm2699, %v2742, %v2751
          %v2754 = vshrl.u32 %v2349, 16
          %v2756 = vrot.slane %v2754, 1
          %v2757 = vshll.u32 %v2349, 16
          %v2759 = vrot.slane %v2757, 2
          %v2760 = vor.u32 %v2756, %v2759
          %v2761 = vsel %vm2699, %v2751, %v2760
          %v2763 = vshrl.u32 %v2350, 16
          %v2765 = vrot.slane %v2763, 1
          %v2766 = vshll.u32 %v2350, 16
          %v2768 = vrot.slane %v2766, 2
          %v2769 = vor.u32 %v2765, %v2768
          %v2770 = vsel %vm2699, %v2760, %v2769
          %v2772 = vshrl.u32 %v2351, 16
          %v2774 = vrot.slane %v2772, 1
          %v2775 = vshll.u32 %v2351, 16
          %v2777 = vrot.slane %v2775, 2
          %v2778 = vor.u32 %v2774, %v2777
          %v2779 = vsel %vm2699, %v2769, %v2778
          %v2781 = vshrl.u32 %v2352, 16
          %v2783 = vrot.slane %v2781, 1
          %v2784 = vshll.u32 %v2352, 16
          %v2786 = vrot.slane %v2784, 2
          %v2787 = vor.u32 %v2783, %v2786
          %v2788 = vsel %vm2699, %v2778, %v2787
          %v2790 = vshrl.u32 %v2353, 16
          %v2792 = vrot.slane %v2790, 1
          %v2793 = vshll.u32 %v2353, 16
          %v2795 = vrot.slane %v2793, 2
          %v2796 = vor.u32 %v2792, %v2795
          %v2797 = vsel %vm2699, %v2787, %v2796
          %v2799 = vshrl.u32 %v2354, 16
          %v2801 = vrot.slane %v2799, 1
          %v2802 = vshll.u32 %v2354, 16
          %v2804 = vrot.slane %v2802, 2
          %v2805 = vor.u32 %v2801, %v2804
          %v2806 = vsel %vm2699, %v2796, %v2805
          %v2808 = vshrl.u32 %v2355, 16
          %v2810 = vrot.slane %v2808, 1
          %v2811 = vshll.u32 %v2355, 16
          %v2813 = vrot.slane %v2811, 2
          %v2814 = vor.u32 %v2810, %v2813
          %v2815 = vsel %vm2699, %v2805, %v2814
          %v2817 = vshrl.u32 %v2356, 16
          %v2819 = vrot.slane %v2817, 1
          %v2820 = vshll.u32 %v2356, 16
          %v2822 = vrot.slane %v2820, 2
          %v2823 = vor.u32 %v2819, %v2822
          %v2824 = vsel %vm2699, %v2814, %v2823
          %v2826 = vshrl.u32 %v2357, 16
          %v2828 = vrot.slane %v2826, 1
          %v2829 = vshll.u32 %v2357, 16
          %v2831 = vrot.slane %v2829, 2
          %v2832 = vor.u32 %v2828, %v2831
          %v2833 = vsel %vm2699, %v2823, %v2832
          %v2835 = vshrl.u32 %v2358, 16
          %v2837 = vrot.slane %v2835, 1
          %v2838 = vshll.u32 %v2358, 16
          %v2840 = vrot.slane %v2838, 2
          %v2841 = vor.u32 %v2837, %v2840
          %v2842 = vsel %vm2699, %v2832, %v2841
          %v2844 = vshrl.u32 %v2359, 16
          %v2846 = vrot.slane %v2844, 1
          %v2847 = vshll.u32 %v2359, 16
          %v2849 = vrot.slane %v2847, 2
          %v2850 = vor.u32 %v2846, %v2849
          %v2851 = vsel %vm2699, %v2841, %v2850
          %v2853 = vshrl.u32 %v2360, 16
          %v2855 = vrot.slane %v2853, 1
          %v2856 = vshll.u32 %v2360, 16
          %v2858 = vrot.slane %v2856, 2
          %v2859 = vor.u32 %v2855, %v2858
          %v2860 = vsel %vm2699, %v2850, %v2859
          %v2862 = vshrl.u32 %v2698, 16
          %v2864 = vrot.slane %v2862, 1
          %v2865 = vshll.u32 %v2698, 16
          %v2867 = vrot.slane %v2865, 2
          %v2868 = vor.u32 %v2864, %v2867
          %v2869 = vsel %vm2699, %v2859, %v2868
          %v2904 = vunpack.c.l.b16 %v2680
          %v2905 = vunpack.c.l.b16 %v2681
          %v2906 = vunpack.c.l.b16 %v2682
          %v2907 = vunpack.c.l.b16 %v2683
          %v2908 = vunpack.c.l.b16 %v2684
          %v2909 = vunpack.c.l.b16 %v2685
          %v2910 = vunpack.c.l.b16 %v2686
          %v2911 = vunpack.c.l.b16 %v2687
          %v2912 = vunpack.c.l.b16 %v2688
          %v2913 = vunpack.c.l.b16 %v2689
          %v2914 = vunpack.c.l.b16 %v2690
          %v2915 = vunpack.c.l.b16 %v2691
          %v2916 = vunpack.c.l.b16 %v2692
          %v2917 = vunpack.c.l.b16 %v2693
          %v2918 = vunpack.c.l.b16 %v2694
          %v2919 = vunpack.c.l.b16 %v2695
          %v2920 = vpack.c.b16 %v2905, %v2904
          %v2921 = vpack.c.b16 %v2907, %v2906
          %v2922 = vpack.c.b16 %v2909, %v2908
          %v2923 = vpack.c.b16 %v2911, %v2910
          %v2924 = vpack.c.b16 %v2913, %v2912
          %v2925 = vpack.c.b16 %v2915, %v2914
          %v2926 = vpack.c.b16 %v2917, %v2916
          %v2927 = vpack.c.b16 %v2919, %v2918
          %2936 = vmatprep.subr.bf16.mxu0 0
          %2937 = vmatpush1.bf16.msra.mxu0 %v2920
          %2938 = vmatprep.subr.bf16.mxu0 0
          %2939 = vmatpush1.bf16.msra.mxu0 %v2921
          %2940 = vmatprep.subr.bf16.mxu0 0
          %2941 = vmatpush1.bf16.msra.mxu0 %v2922
          %2942 = vmatprep.subr.bf16.mxu0 0
          %2943 = vmatpush1.bf16.msra.mxu0 %v2923
          %2944 = vmatprep.subr.bf16.mxu0 0
          %2945 = vmatpush1.bf16.msra.mxu0 %v2924
          %2946 = vmatprep.subr.bf16.mxu0 0
          %2947 = vmatpush1.bf16.msra.mxu0 %v2925
          %2948 = vmatprep.subr.bf16.mxu0 0
          %2949 = vmatpush1.bf16.msra.mxu0 %v2926
          %2950 = vmatprep.subr.bf16.mxu0 0
          %2951 = vmatpush1.bf16.msra.mxu0 %v2927
          %2952 = vmatprep.subr.bf16.mxu0 0
          %2953 = vmatpush1.bf16.msra.mxu0 0
          %2954 = vmatprep.subr.bf16.mxu0 0
          %2955 = vmatpush1.bf16.msra.mxu0 0
          %2956 = vmatprep.subr.bf16.mxu0 0
          %2957 = vmatpush1.bf16.msra.mxu0 0
          %2958 = vmatprep.subr.bf16.mxu0 0
          %2959 = vmatpush1.bf16.msra.mxu0 0
          %2960 = vmatprep.subr.bf16.mxu0 0
          %2961 = vmatpush1.bf16.msra.mxu0 0
          %2962 = vmatprep.subr.bf16.mxu0 0
          %2963 = vmatpush1.bf16.msra.mxu0 0
          %2964 = vmatprep.subr.bf16.mxu0 0
          %2965 = vmatpush1.bf16.msra.mxu0 0
          %2966 = vmatprep.subr.bf16.mxu0 0
          %2967 = vmatpush1.bf16.msra.mxu0 0
          %2968 = vmatprep.mubr.bf16.mxu0 0
          %2969 = vmatmul.mubr.bf16.gmra.mrb[0].mxu0 %v2716
          %v2970 = vpop.f32.mrb[0].mxu0
          %v2971 = vadd.f32 0.0, %v2970
          %v2972 = vpop.f32.mrb[0].mxu0
          %v2973 = vpop.f32.mrb[0].mxu0
          %v2974 = vadd.f32 0.0, %v2973
          %v2975 = vpop.f32.mrb[0].mxu0
          %2976 = vmatprep.mubr.bf16.mxu0 0
          %2977 = vmatmul.mubr.bf16.gmra.mrb[0].mxu0 %v2725
          %v2978 = vpop.f32.mrb[0].mxu0
          %v2979 = vadd.f32 0.0, %v2978
          %v2980 = vpop.f32.mrb[0].mxu0
          %v2981 = vpop.f32.mrb[0].mxu0
          %v2982 = vadd.f32 0.0, %v2981
          %v2983 = vpop.f32.mrb[0].mxu0
          %2984 = vmatprep.mubr.bf16.mxu0 0
          %2985 = vmatmul.mubr.bf16.gmra.mrb[0].mxu0 %v2734
          %v2986 = vpop.f32.mrb[0].mxu0
          %v2987 = vadd.f32 0.0, %v2986
          %v2988 = vpop.f32.mrb[0].mxu0
          %v2989 = vpop.f32.mrb[0].mxu0
          %v2990 = vadd.f32 0.0, %v2989
          %v2991 = vpop.f32.mrb[0].mxu0
          %2992 = vmatprep.mubr.bf16.mxu0 0
          %2993 = vmatmul.mubr.bf16.gmra.mrb[0].mxu0 %v2743
          %v2994 = vpop.f32.mrb[0].mxu0
          %v2995 = vadd.f32 0.0, %v2994
          %v2996 = vpop.f32.mrb[0].mxu0
          %v2997 = vpop.f32.mrb[0].mxu0
          %v2998 = vadd.f32 0.0, %v2997
          %v2999 = vpop.f32.mrb[0].mxu0
          %3000 = vmatprep.mubr.bf16.mxu0 0
          %3001 = vmatmul.mubr.bf16.gmra.mrb[0].mxu0 %v2752
          %v3002 = vpop.f32.mrb[0].mxu0
          %v3003 = vadd.f32 0.0, %v3002
          %v3004 = vpop.f32.mrb[0].mxu0
          %v3005 = vpop.f32.mrb[0].mxu0
          %v3006 = vadd.f32 0.0, %v3005
          %v3007 = vpop.f32.mrb[0].mxu0
          %3008 = vmatprep.mubr.bf16.mxu0 0
          %3009 = vmatmul.mubr.bf16.gmra.mrb[0].mxu0 %v2761
          %v3010 = vpop.f32.mrb[0].mxu0
          %v3011 = vadd.f32 0.0, %v3010
          %v3012 = vpop.f32.mrb[0].mxu0
          %v3013 = vpop.f32.mrb[0].mxu0
          %v3014 = vadd.f32 0.0, %v3013
          %v3015 = vpop.f32.mrb[0].mxu0
          %3016 = vmatprep.mubr.bf16.mxu0 0
          %3017 = vmatmul.mubr.bf16.gmra.mrb[0].mxu0 %v2770
          %v3018 = vpop.f32.mrb[0].mxu0
          %v3019 = vadd.f32 0.0, %v3018
          %v3020 = vpop.f32.mrb[0].mxu0
          %v3021 = vpop.f32.mrb[0].mxu0
          %v3022 = vadd.f32 0.0, %v3021
          %v3023 = vpop.f32.mrb[0].mxu0
          %3024 = vmatprep.mubr.bf16.mxu0 0
          %3025 = vmatmul.mubr.bf16.gmra.mrb[0].mxu0 %v2779
          %v3026 = vpop.f32.mrb[0].mxu0
          %v3027 = vadd.f32 0.0, %v3026
          %v3028 = vpop.f32.mrb[0].mxu0
          %v3029 = vpop.f32.mrb[0].mxu0
          %v3030 = vadd.f32 0.0, %v3029
          %v3031 = vpop.f32.mrb[0].mxu0
          %3032 = vmatprep.mubr.bf16.mxu0 0
          %3033 = vmatmul.mubr.bf16.gmra.mrb[0].mxu0 %v2788
          %v3034 = vpop.f32.mrb[0].mxu0
          %v3035 = vadd.f32 0.0, %v3034
          %v3036 = vpop.f32.mrb[0].mxu0
          %v3037 = vpop.f32.mrb[0].mxu0
          %v3038 = vadd.f32 0.0, %v3037
          %v3039 = vpop.f32.mrb[0].mxu0
          %3040 = vmatprep.mubr.bf16.mxu0 0
          %3041 = vmatmul.mubr.bf16.gmra.mrb[0].mxu0 %v2797
          %v3042 = vpop.f32.mrb[0].mxu0
          %v3043 = vadd.f32 0.0, %v3042
          %v3044 = vpop.f32.mrb[0].mxu0
          %v3045 = vpop.f32.mrb[0].mxu0
          %v3046 = vadd.f32 0.0, %v3045
          %v3047 = vpop.f32.mrb[0].mxu0
          %3048 = vmatprep.mubr.bf16.mxu0 0
          %3049 = vmatmul.mubr.bf16.gmra.mrb[0].mxu0 %v2806
          %v3050 = vpop.f32.mrb[0].mxu0
          %v3051 = vadd.f32 0.0, %v3050
          %v3052 = vpop.f32.mrb[0].mxu0
          %v3053 = vpop.f32.mrb[0].mxu0
          %v3054 = vadd.f32 0.0, %v3053
          %v3055 = vpop.f32.mrb[0].mxu0
          %3056 = vmatprep.mubr.bf16.mxu0 0
          %3057 = vmatmul.mubr.bf16.gmra.mrb[0].mxu0 %v2815
          %v3058 = vpop.f32.mrb[0].mxu0
          %v3059 = vadd.f32 0.0, %v3058
          %v3060 = vpop.f32.mrb[0].mxu0
          %v3061 = vpop.f32.mrb[0].mxu0
          %v3062 = vadd.f32 0.0, %v3061
          %v3063 = vpop.f32.mrb[0].mxu0
          %3064 = vmatprep.mubr.bf16.mxu0 0
          %3065 = vmatmul.mubr.bf16.gmra.mrb[0].mxu0 %v2824
          %v3066 = vpop.f32.mrb[0].mxu0
          %v3067 = vadd.f32 0.0, %v3066
          %v3068 = vpop.f32.mrb[0].mxu0
          %v3069 = vpop.f32.mrb[0].mxu0
          %v3070 = vadd.f32 0.0, %v3069
          %v3071 = vpop.f32.mrb[0].mxu0
          %3072 = vmatprep.mubr.bf16.mxu0 0
          %3073 = vmatmul.mubr.bf16.gmra.mrb[0].mxu0 %v2833
          %v3074 = vpop.f32.mrb[0].mxu0
          %v3075 = vadd.f32 0.0, %v3074
          %v3076 = vpop.f32.mrb[0].mxu0
          %v3077 = vpop.f32.mrb[0].mxu0
          %v3078 = vadd.f32 0.0, %v3077
          %v3079 = vpop.f32.mrb[0].mxu0
          %3080 = vmatprep.mubr.bf16.mxu0 0
          %3081 = vmatmul.mubr.bf16.gmra.mrb[0].mxu0 %v2842
          %v3082 = vpop.f32.mrb[0].mxu0
          %v3083 = vadd.f32 0.0, %v3082
          %v3084 = vpop.f32.mrb[0].mxu0
          %v3085 = vpop.f32.mrb[0].mxu0
          %v3086 = vadd.f32 0.0, %v3085
          %v3087 = vpop.f32.mrb[0].mxu0
          %3088 = vmatprep.mubr.bf16.mxu0 0
          %3089 = vmatmul.mubr.bf16.gmra.mrb[0].mxu0 %v2851
          %v3090 = vpop.f32.mrb[0].mxu0
          %v3091 = vadd.f32 0.0, %v3090
          %v3092 = vpop.f32.mrb[0].mxu0
          %v3093 = vpop.f32.mrb[0].mxu0
          %v3094 = vadd.f32 0.0, %v3093
          %v3095 = vpop.f32.mrb[0].mxu0
          %3096 = vmatprep.mubr.bf16.mxu0 0
          %3097 = vmatmul.mubr.bf16.gmra.mrb[0].mxu0 %v2860
          %v3098 = vpop.f32.mrb[0].mxu0
          %v3099 = vadd.f32 0.0, %v3098
          %v3100 = vpop.f32.mrb[0].mxu0
          %v3101 = vpop.f32.mrb[0].mxu0
          %v3102 = vadd.f32 0.0, %v3101
          %v3103 = vpop.f32.mrb[0].mxu0
          %3104 = vmatprep.mubr.bf16.mxu0 0
          %3105 = vmatmul.mubr.bf16.gmra.mrb[0].mxu0 %v2869
          %v3106 = vpop.f32.mrb[0].mxu0
          %v3107 = vadd.f32 0.0, %v3106
          %v3108 = vpop.f32.mrb[0].mxu0
          %v3109 = vpop.f32.mrb[0].mxu0
          %v3110 = vadd.f32 0.0, %v3109
          %v3111 = vpop.f32.mrb[0].mxu0
          %3112 = vdwg.mxu0
          %v3113 = vadd.f32 %v2642, %v2971
          %v3114 = vadd.f32 %v2643, %v2974
          %v3115 = vadd.f32 %v2644, %v2979
          %v3116 = vadd.f32 %v2645, %v2982
          %v3117 = vadd.f32 %v2646, %v2987
          %v3118 = vadd.f32 %v2647, %v2990
          %v3119 = vadd.f32 %v2648, %v2995
          %v3120 = vadd.f32 %v2649, %v2998
          %v3121 = vadd.f32 %v2650, %v3003
          %v3122 = vadd.f32 %v2651, %v3006
          %v3123 = vadd.f32 %v2652, %v3011
          %v3124 = vadd.f32 %v2653, %v3014
          %v3125 = vadd.f32 %v2654, %v3019
          %v3126 = vadd.f32 %v2655, %v3022
          %v3127 = vadd.f32 %v2656, %v3027
          %v3128 = vadd.f32 %v2657, %v3030
          %v3129 = vadd.f32 %v2658, %v3035
          %v3130 = vadd.f32 %v2659, %v3038
          %v3131 = vadd.f32 %v2660, %v3043
          %v3132 = vadd.f32 %v2661, %v3046
          %v3133 = vadd.f32 %v2662, %v3051
          %v3134 = vadd.f32 %v2663, %v3054
          %v3135 = vadd.f32 %v2664, %v3059
          %v3136 = vadd.f32 %v2665, %v3062
          %v3137 = vadd.f32 %v2666, %v3067
          %v3138 = vadd.f32 %v2667, %v3070
          %v3139 = vadd.f32 %v2668, %v3075
          %v3140 = vadd.f32 %v2669, %v3078
          %v3141 = vadd.f32 %v2670, %v3083
          %v3142 = vadd.f32 %v2671, %v3086
          %v3143 = vadd.f32 %v2672, %v3091
          %v3144 = vadd.f32 %v2673, %v3094
          %v3145 = vadd.f32 %v2674, %v3099
          %v3146 = vadd.f32 %v2675, %v3102
          %v3147 = vadd.f32 %v2676, %v3107
          %v3148 = vadd.f32 %v2677, %v3110
          %v3149 = vld [vmem:[#allocation2 + $0x8] sm:$0xc]
          %s3150 = scalar_lea.vmem %s2, 320
          %v3151 = vld [vmem:[%s3150] sm:$0xf]
          %v3152 = vld [vmem:[%s3150 + $0x4] sm:$0xf]
          %v3153 = vld [vmem:[%s3150 + $0x8] sm:$0xf]
          %v3154 = vld [vmem:[%s3150 + $0xc] sm:$0xf]
          %v3155 = vld [vmem:[%s3150 + $0x10] sm:$0xf]
          %v3156 = vld [vmem:[%s3150 + $0x14] sm:$0xf]
          %v3157 = vld [vmem:[%s3150 + $0x18] sm:$0xf]
          %v3158 = vld [vmem:[%s3150 + $0x1c] sm:$0xf]
          %v3159 = vld [vmem:[%s3150 + $0x20] sm:$0xf]
          %v3160 = vld [vmem:[%s3150 + $0x24] sm:$0xf]
          %v3161 = vld [vmem:[%s3150 + $0x28] sm:$0xf]
          %v3162 = vld [vmem:[%s3150 + $0x2c] sm:$0xf]
          %v3163 = vld [vmem:[%s3150 + $0x30] sm:$0xf]
          %v3164 = vld [vmem:[%s3150 + $0x34] sm:$0xf]
          %v3165 = vld [vmem:[%s3150 + $0x38] sm:$0xf]
          %v3166 = vld [vmem:[%s3150 + $0x3c] sm:$0xf]
          %v3168 = vunpack.c.l.b16 %v3149
          %v3169 = vpack.c.b16 %v2307, %v3168
          %vm3170 = vcmask 1045504
          %v3171 = vrot.slane %v3169, 2
          %v3172 = vrot.slane %v2344, 2
          %v3173 = vsel %vm3170, %v3171, %v3172
          %v3174 = vrot.slane %v2345, 2
          %v3175 = vsel %vm3170, %v3172, %v3174
          %v3176 = vrot.slane %v2346, 2
          %v3177 = vsel %vm3170, %v3174, %v3176
          %v3178 = vrot.slane %v2347, 2
          %v3179 = vsel %vm3170, %v3176, %v3178
          %v3180 = vrot.slane %v2348, 2
          %v3181 = vsel %vm3170, %v3178, %v3180
          %v3182 = vrot.slane %v2349, 2
          %v3183 = vsel %vm3170, %v3180, %v3182
          %v3184 = vrot.slane %v2350, 2
          %v3185 = vsel %vm3170, %v3182, %v3184
          %v3186 = vrot.slane %v2351, 2
          %v3187 = vsel %vm3170, %v3184, %v3186
          %v3188 = vrot.slane %v2352, 2
          %v3189 = vsel %vm3170, %v3186, %v3188
          %v3190 = vrot.slane %v2353, 2
          %v3191 = vsel %vm3170, %v3188, %v3190
          %v3192 = vrot.slane %v2354, 2
          %v3193 = vsel %vm3170, %v3190, %v3192
          %v3194 = vrot.slane %v2355, 2
          %v3195 = vsel %vm3170, %v3192, %v3194
          %v3196 = vrot.slane %v2356, 2
          %v3197 = vsel %vm3170, %v3194, %v3196
          %v3198 = vrot.slane %v2357, 2
          %v3199 = vsel %vm3170, %v3196, %v3198
          %v3200 = vrot.slane %v2358, 2
          %v3201 = vsel %vm3170, %v3198, %v3200
          %v3202 = vrot.slane %v2359, 2
          %v3203 = vsel %vm3170, %v3200, %v3202
          %v3204 = vrot.slane %v2360, 2
          %v3205 = vsel %vm3170, %v3202, %v3204
          %v3206 = vrot.slane %v2698, 2
          %v3207 = vsel %vm3170, %v3204, %v3206
          %v3242 = vunpack.c.l.b16 %v3151
          %v3243 = vunpack.c.l.b16 %v3152
          %v3244 = vunpack.c.l.b16 %v3153
          %v3245 = vunpack.c.l.b16 %v3154
          %v3246 = vunpack.c.l.b16 %v3155
          %v3247 = vunpack.c.l.b16 %v3156
          %v3248 = vunpack.c.l.b16 %v3157
          %v3249 = vunpack.c.l.b16 %v3158
          %v3250 = vunpack.c.l.b16 %v3159
          %v3251 = vunpack.c.l.b16 %v3160
          %v3252 = vunpack.c.l.b16 %v3161
          %v3253 = vunpack.c.l.b16 %v3162
          %v3254 = vunpack.c.l.b16 %v3163
          %v3255 = vunpack.c.l.b16 %v3164
          %v3256 = vunpack.c.l.b16 %v3165
          %v3257 = vunpack.c.l.b16 %v3166
          %v3258 = vpack.c.b16 %v3243, %v3242
          %v3259 = vpack.c.b16 %v3245, %v3244
          %v3260 = vpack.c.b16 %v3247, %v3246
          %v3261 = vpack.c.b16 %v3249, %v3248
          %v3262 = vpack.c.b16 %v3251, %v3250
          %v3263 = vpack.c.b16 %v3253, %v3252
          %v3264 = vpack.c.b16 %v3255, %v3254
          %v3265 = vpack.c.b16 %v3257, %v3256
          %3274 = vmatprep.subr.bf16.mxu0 0
          %3275 = vmatpush1.bf16.msra.mxu0 %v3258
          %3276 = vmatprep.subr.bf16.mxu0 0
          %3277 = vmatpush1.bf16.msra.mxu0 %v3259
          %3278 = vmatprep.subr.bf16.mxu0 0
          %3279 = vmatpush1.bf16.msra.mxu0 %v3260
          %3280 = vmatprep.subr.bf16.mxu0 0
          %3281 = vmatpush1.bf16.msra.mxu0 %v3261
          %3282 = vmatprep.subr.bf16.mxu0 0
          %3283 = vmatpush1.bf16.msra.mxu0 %v3262
          %3284 = vmatprep.subr.bf16.mxu0 0
          %3285 = vmatpush1.bf16.msra.mxu0 %v3263
          %3286 = vmatprep.subr.bf16.mxu0 0
          %3287 = vmatpush1.bf16.msra.mxu0 %v3264
          %3288 = vmatprep.subr.bf16.mxu0 0
          %3289 = vmatpush1.bf16.msra.mxu0 %v3265
          %3290 = vmatprep.subr.bf16.mxu0 0
          %3291 = vmatpush1.bf16.msra.mxu0 0
          %3292 = vmatprep.subr.bf16.mxu0 0
          %3293 = vmatpush1.bf16.msra.mxu0 0
          %3294 = vmatprep.subr.bf16.mxu0 0
          %3295 = vmatpush1.bf16.msra.mxu0 0
          %3296 = vmatprep.subr.bf16.mxu0 0
          %3297 = vmatpush1.bf16.msra.mxu0 0
          %3298 = vmatprep.subr.bf16.mxu0 0
          %3299 = vmatpush1.bf16.msra.mxu0 0
          %3300 = vmatprep.subr.bf16.mxu0 0
          %3301 = vmatpush1.bf16.msra.mxu0 0
          %3302 = vmatprep.subr.bf16.mxu0 0
          %3303 = vmatpush1.bf16.msra.mxu0 0
          %3304 = vmatprep.subr.bf16.mxu0 0
          %3305 = vmatpush1.bf16.msra.mxu0 0
          %3306 = vmatprep.mubr.bf16.mxu0 0
          %3307 = vmatmul.mubr.bf16.gmra.mrb[0].mxu0 %v3173
          %v3308 = vpop.f32.mrb[0].mxu0
          %v3309 = vadd.f32 0.0, %v3308
          %v3310 = vpop.f32.mrb[0].mxu0
          %v3311 = vpop.f32.mrb[0].mxu0
          %v3312 = vadd.f32 0.0, %v3311
          %v3313 = vpop.f32.mrb[0].mxu0
          %3314 = vmatprep.mubr.bf16.mxu0 0
          %3315 = vmatmul.mubr.bf16.gmra.mrb[0].mxu0 %v3175
          %v3316 = vpop.f32.mrb[0].mxu0
          %v3317 = vadd.f32 0.0, %v3316
          %v3318 = vpop.f32.mrb[0].mxu0
          %v3319 = vpop.f32.mrb[0].mxu0
          %v3320 = vadd.f32 0.0, %v3319
          %v3321 = vpop.f32.mrb[0].mxu0
          %3322 = vmatprep.mubr.bf16.mxu0 0
          %3323 = vmatmul.mubr.bf16.gmra.mrb[0].mxu0 %v3177
          %v3324 = vpop.f32.mrb[0].mxu0
          %v3325 = vadd.f32 0.0, %v3324
          %v3326 = vpop.f32.mrb[0].mxu0
          %v3327 = vpop.f32.mrb[0].mxu0
          %v3328 = vadd.f32 0.0, %v3327
          %v3329 = vpop.f32.mrb[0].mxu0
          %3330 = vmatprep.mubr.bf16.mxu0 0
          %3331 = vmatmul.mubr.bf16.gmra.mrb[0].mxu0 %v3179
          %v3332 = vpop.f32.mrb[0].mxu0
          %v3333 = vadd.f32 0.0, %v3332
          %v3334 = vpop.f32.mrb[0].mxu0
          %v3335 = vpop.f32.mrb[0].mxu0
          %v3336 = vadd.f32 0.0, %v3335
          %v3337 = vpop.f32.mrb[0].mxu0
          %3338 = vmatprep.mubr.bf16.mxu0 0
          %3339 = vmatmul.mubr.bf16.gmra.mrb[0].mxu0 %v3181
          %v3340 = vpop.f32.mrb[0].mxu0
          %v3341 = vadd.f32 0.0, %v3340
          %v3342 = vpop.f32.mrb[0].mxu0
          %v3343 = vpop.f32.mrb[0].mxu0
          %v3344 = vadd.f32 0.0, %v3343
          %v3345 = vpop.f32.mrb[0].mxu0
          %3346 = vmatprep.mubr.bf16.mxu0 0
          %3347 = vmatmul.mubr.bf16.gmra.mrb[0].mxu0 %v3183
          %v3348 = vpop.f32.mrb[0].mxu0
          %v3349 = vadd.f32 0.0, %v3348
          %v3350 = vpop.f32.mrb[0].mxu0
          %v3351 = vpop.f32.mrb[0].mxu0
          %v3352 = vadd.f32 0.0, %v3351
          %v3353 = vpop.f32.mrb[0].mxu0
          %3354 = vmatprep.mubr.bf16.mxu0 0
          %3355 = vmatmul.mubr.bf16.gmra.mrb[0].mxu0 %v3185
          %v3356 = vpop.f32.mrb[0].mxu0
          %v3357 = vadd.f32 0.0, %v3356
          %v3358 = vpop.f32.mrb[0].mxu0
          %v3359 = vpop.f32.mrb[0].mxu0
          %v3360 = vadd.f32 0.0, %v3359
          %v3361 = vpop.f32.mrb[0].mxu0
          %3362 = vmatprep.mubr.bf16.mxu0 0
          %3363 = vmatmul.mubr.bf16.gmra.mrb[0].mxu0 %v3187
          %v3364 = vpop.f32.mrb[0].mxu0
          %v3365 = vadd.f32 0.0, %v3364
          %v3366 = vpop.f32.mrb[0].mxu0
          %v3367 = vpop.f32.mrb[0].mxu0
          %v3368 = vadd.f32 0.0, %v3367
          %v3369 = vpop.f32.mrb[0].mxu0
          %3370 = vmatprep.mubr.bf16.mxu0 0
          %3371 = vmatmul.mubr.bf16.gmra.mrb[0].mxu0 %v3189
          %v3372 = vpop.f32.mrb[0].mxu0
          %v3373 = vadd.f32 0.0, %v3372
          %v3374 = vpop.f32.mrb[0].mxu0
          %v3375 = vpop.f32.mrb[0].mxu0
          %v3376 = vadd.f32 0.0, %v3375
          %v3377 = vpop.f32.mrb[0].mxu0
          %3378 = vmatprep.mubr.bf16.mxu0 0
          %3379 = vmatmul.mubr.bf16.gmra.mrb[0].mxu0 %v3191
          %v3380 = vpop.f32.mrb[0].mxu0
          %v3381 = vadd.f32 0.0, %v3380
          %v3382 = vpop.f32.mrb[0].mxu0
          %v3383 = vpop.f32.mrb[0].mxu0
          %v3384 = vadd.f32 0.0, %v3383
          %v3385 = vpop.f32.mrb[0].mxu0
          %3386 = vmatprep.mubr.bf16.mxu0 0
          %3387 = vmatmul.mubr.bf16.gmra.mrb[0].mxu0 %v3193
          %v3388 = vpop.f32.mrb[0].mxu0
          %v3389 = vadd.f32 0.0, %v3388
          %v3390 = vpop.f32.mrb[0].mxu0
          %v3391 = vpop.f32.mrb[0].mxu0
          %v3392 = vadd.f32 0.0, %v3391
          %v3393 = vpop.f32.mrb[0].mxu0
          %3394 = vmatprep.mubr.bf16.mxu0 0
          %3395 = vmatmul.mubr.bf16.gmra.mrb[0].mxu0 %v3195
          %v3396 = vpop.f32.mrb[0].mxu0
          %v3397 = vadd.f32 0.0, %v3396
          %v3398 = vpop.f32.mrb[0].mxu0
          %v3399 = vpop.f32.mrb[0].mxu0
          %v3400 = vadd.f32 0.0, %v3399
          %v3401 = vpop.f32.mrb[0].mxu0
          %3402 = vmatprep.mubr.bf16.mxu0 0
          %3403 = vmatmul.mubr.bf16.gmra.mrb[0].mxu0 %v3197
          %v3404 = vpop.f32.mrb[0].mxu0
          %v3405 = vadd.f32 0.0, %v3404
          %v3406 = vpop.f32.mrb[0].mxu0
          %v3407 = vpop.f32.mrb[0].mxu0
          %v3408 = vadd.f32 0.0, %v3407
          %v3409 = vpop.f32.mrb[0].mxu0
          %3410 = vmatprep.mubr.bf16.mxu0 0
          %3411 = vmatmul.mubr.bf16.gmra.mrb[0].mxu0 %v3199
          %v3412 = vpop.f32.mrb[0].mxu0
          %v3413 = vadd.f32 0.0, %v3412
          %v3414 = vpop.f32.mrb[0].mxu0
          %v3415 = vpop.f32.mrb[0].mxu0
          %v3416 = vadd.f32 0.0, %v3415
          %v3417 = vpop.f32.mrb[0].mxu0
          %3418 = vmatprep.mubr.bf16.mxu0 0
          %3419 = vmatmul.mubr.bf16.gmra.mrb[0].mxu0 %v3201
          %v3420 = vpop.f32.mrb[0].mxu0
          %v3421 = vadd.f32 0.0, %v3420
          %v3422 = vpop.f32.mrb[0].mxu0
          %v3423 = vpop.f32.mrb[0].mxu0
          %v3424 = vadd.f32 0.0, %v3423
          %v3425 = vpop.f32.mrb[0].mxu0
          %3426 = vmatprep.mubr.bf16.mxu0 0
          %3427 = vmatmul.mubr.bf16.gmra.mrb[0].mxu0 %v3203
          %v3428 = vpop.f32.mrb[0].mxu0
          %v3429 = vadd.f32 0.0, %v3428
          %v3430 = vpop.f32.mrb[0].mxu0
          %v3431 = vpop.f32.mrb[0].mxu0
          %v3432 = vadd.f32 0.0, %v3431
          %v3433 = vpop.f32.mrb[0].mxu0
          %3434 = vmatprep.mubr.bf16.mxu0 0
          %3435 = vmatmul.mubr.bf16.gmra.mrb[0].mxu0 %v3205
          %v3436 = vpop.f32.mrb[0].mxu0
          %v3437 = vadd.f32 0.0, %v3436
          %v3438 = vpop.f32.mrb[0].mxu0
          %v3439 = vpop.f32.mrb[0].mxu0
          %v3440 = vadd.f32 0.0, %v3439
          %v3441 = vpop.f32.mrb[0].mxu0
          %3442 = vmatprep.mubr.bf16.mxu0 0
          %3443 = vmatmul.mubr.bf16.gmra.mrb[0].mxu0 %v3207
          %v3444 = vpop.f32.mrb[0].mxu0
          %v3445 = vadd.f32 0.0, %v3444
          %v3446 = vpop.f32.mrb[0].mxu0
          %v3447 = vpop.f32.mrb[0].mxu0
          %v3448 = vadd.f32 0.0, %v3447
          %v3449 = vpop.f32.mrb[0].mxu0
          %3450 = vdwg.mxu0
          %v3451 = vadd.f32 %v3113, %v3309
          %v3452 = vadd.f32 %v3114, %v3312
          %v3453 = vadd.f32 %v3115, %v3317
          %v3454 = vadd.f32 %v3116, %v3320
          %v3455 = vadd.f32 %v3117, %v3325
          %v3456 = vadd.f32 %v3118, %v3328
          %v3457 = vadd.f32 %v3119, %v3333
          %v3458 = vadd.f32 %v3120, %v3336
          %v3459 = vadd.f32 %v3121, %v3341
          %v3460 = vadd.f32 %v3122, %v3344
          %v3461 = vadd.f32 %v3123, %v3349
          %v3462 = vadd.f32 %v3124, %v3352
          %v3463 = vadd.f32 %v3125, %v3357
          %v3464 = vadd.f32 %v3126, %v3360
          %v3465 = vadd.f32 %v3127, %v3365
          %v3466 = vadd.f32 %v3128, %v3368
          %v3467 = vadd.f32 %v3129, %v3373
          %v3468 = vadd.f32 %v3130, %v3376
          %v3469 = vadd.f32 %v3131, %v3381
          %v3470 = vadd.f32 %v3132, %v3384
          %v3471 = vadd.f32 %v3133, %v3389
          %v3472 = vadd.f32 %v3134, %v3392
          %v3473 = vadd.f32 %v3135, %v3397
          %v3474 = vadd.f32 %v3136, %v3400
          %v3475 = vadd.f32 %v3137, %v3405
          %v3476 = vadd.f32 %v3138, %v3408
          %v3477 = vadd.f32 %v3139, %v3413
          %v3478 = vadd.f32 %v3140, %v3416
          %v3479 = vadd.f32 %v3141, %v3421
          %v3480 = vadd.f32 %v3142, %v3424
          %v3481 = vadd.f32 %v3143, %v3429
          %v3482 = vadd.f32 %v3144, %v3432
          %v3483 = vadd.f32 %v3145, %v3437
          %v3484 = vadd.f32 %v3146, %v3440
          %v3485 = vadd.f32 %v3147, %v3445
          %v3486 = vadd.f32 %v3148, %v3448
          %v3487 = vld [vmem:[#allocation2 + $0x10] sm:$0xc]
          %v3488 = vld [vmem:[#allocation2 + $0x14] sm:$0xf]
          %v3489 = vld [vmem:[#allocation2 + $0x18] sm:$0xf]
          %v3490 = vld [vmem:[#allocation2 + $0x1c] sm:$0xf]
          %v3491 = vld [vmem:[#allocation2 + $0x20] sm:$0xf]
          %v3492 = vld [vmem:[#allocation2 + $0x24] sm:$0xf]
          %v3493 = vld [vmem:[#allocation2 + $0x28] sm:$0xf]
          %v3494 = vld [vmem:[#allocation2 + $0x2c] sm:$0xf]
          %v3495 = vld [vmem:[#allocation2 + $0x30] sm:$0xf]
          %v3496 = vld [vmem:[#allocation2 + $0x34] sm:$0xf]
          %v3497 = vld [vmem:[#allocation2 + $0x38] sm:$0xf]
          %v3498 = vld [vmem:[#allocation2 + $0x3c] sm:$0xf]
          %v3499 = vld [vmem:[#allocation2 + $0x40] sm:$0xf]
          %v3500 = vld [vmem:[#allocation2 + $0x44] sm:$0xf]
          %v3501 = vld [vmem:[#allocation2 + $0x48] sm:$0xf]
          %v3502 = vld [vmem:[#allocation2 + $0x4c] sm:$0xf]
          %v3503 = vld [vmem:[#allocation2 + $0x50] sm:$0xf]
          %v3504 = vld [vmem:[#allocation2 + $0x54] sm:$0xf]
          %v3505 = vld [vmem:[#allocation2 + $0x58] sm:$0xf]
          %v3506 = vld [vmem:[#allocation2 + $0x5c] sm:$0xf]
          %v3507 = vld [vmem:[#allocation2 + $0x60] sm:$0xf]
          %v3508 = vld [vmem:[#allocation2 + $0x64] sm:$0xf]
          %v3509 = vld [vmem:[#allocation2 + $0x68] sm:$0xf]
          %v3510 = vld [vmem:[#allocation2 + $0x6c] sm:$0xf]
          %v3511 = vld [vmem:[#allocation2 + $0x70] sm:$0xf]
          %v3512 = vld [vmem:[#allocation2 + $0x74] sm:$0xf]
          %v3513 = vld [vmem:[#allocation2 + $0x78] sm:$0xf]
          %v3514 = vld [vmem:[#allocation2 + $0x7c] sm:$0xf]
          %v3515 = vld [vmem:[#allocation2 + $0x80] sm:$0xf]
          %v3516 = vld [vmem:[#allocation2 + $0x84] sm:$0xf]
          %v3517 = vld [vmem:[#allocation2 + $0x88] sm:$0xf]
          %v3518 = vld [vmem:[#allocation2 + $0x8c] sm:$0xf]
          %v3519 = vld [vmem:[#allocation2 + $0x90] sm:$0xf]
          %v3520 = vld [vmem:[#allocation2 + $0x94] sm:$0xf]
          %v3521 = vld [vmem:[#allocation2 + $0x98] sm:$0xf]
          %v3522 = vld [vmem:[#allocation2 + $0x9c] sm:$0xf]
          %v3523 = vld [vmem:[#allocation2 + $0xa0] sm:$0x3]
          %s3524 = scalar_lea.vmem %s2, 384
          %v3525 = vld [vmem:[%s3524] sm:$0xf]
          %v3526 = vld [vmem:[%s3524 + $0x4] sm:$0xf]
          %v3527 = vld [vmem:[%s3524 + $0x8] sm:$0xf]
          %v3528 = vld [vmem:[%s3524 + $0xc] sm:$0xf]
          %v3529 = vld [vmem:[%s3524 + $0x10] sm:$0xf]
          %v3530 = vld [vmem:[%s3524 + $0x14] sm:$0xf]
          %v3531 = vld [vmem:[%s3524 + $0x18] sm:$0xf]
          %v3532 = vld [vmem:[%s3524 + $0x1c] sm:$0xf]
          %v3533 = vld [vmem:[%s3524 + $0x20] sm:$0xf]
          %v3534 = vld [vmem:[%s3524 + $0x24] sm:$0xf]
          %v3535 = vld [vmem:[%s3524 + $0x28] sm:$0xf]
          %v3536 = vld [vmem:[%s3524 + $0x2c] sm:$0xf]
          %v3537 = vld [vmem:[%s3524 + $0x30] sm:$0xf]
          %v3538 = vld [vmem:[%s3524 + $0x34] sm:$0xf]
          %v3539 = vld [vmem:[%s3524 + $0x38] sm:$0xf]
          %v3540 = vld [vmem:[%s3524 + $0x3c] sm:$0xf]
          %v3578 = vunpack.c.l.b16 %v3487
          %v3579 = vunpack.c.l.b16 %v3488
          %v3580 = vunpack.c.l.b16 %v3489
          %v3581 = vunpack.c.l.b16 %v3490
          %v3582 = vunpack.c.l.b16 %v3491
          %v3583 = vunpack.c.l.b16 %v3492
          %v3584 = vunpack.c.l.b16 %v3493
          %v3585 = vunpack.c.l.b16 %v3494
          %v3586 = vunpack.c.l.b16 %v3495
          %v3587 = vunpack.c.l.b16 %v3496
          %v3588 = vunpack.c.l.b16 %v3497
          %v3589 = vunpack.c.l.b16 %v3498
          %v3590 = vunpack.c.l.b16 %v3499
          %v3591 = vunpack.c.l.b16 %v3500
          %v3592 = vunpack.c.l.b16 %v3501
          %v3593 = vunpack.c.l.b16 %v3502
          %v3594 = vunpack.c.l.b16 %v3503
          %v3595 = vunpack.c.l.b16 %v3504
          %v3596 = vunpack.c.l.b16 %v3505
          %v3597 = vunpack.c.l.b16 %v3506
          %v3598 = vunpack.c.l.b16 %v3507
          %v3599 = vunpack.c.l.b16 %v3508
          %v3600 = vunpack.c.l.b16 %v3509
          %v3601 = vunpack.c.l.b16 %v3510
          %v3602 = vunpack.c.l.b16 %v3511
          %v3603 = vunpack.c.l.b16 %v3512
          %v3604 = vunpack.c.l.b16 %v3513
          %v3605 = vunpack.c.l.b16 %v3514
          %v3606 = vunpack.c.l.b16 %v3515
          %v3607 = vunpack.c.l.b16 %v3516
          %v3608 = vunpack.c.l.b16 %v3517
          %v3609 = vunpack.c.l.b16 %v3518
          %v3610 = vunpack.c.l.b16 %v3519
          %v3611 = vunpack.c.l.b16 %v3520
          %v3612 = vunpack.c.l.b16 %v3521
          %v3613 = vunpack.c.l.b16 %v3522
          %v3614 = vunpack.c.l.b16 %v3523
          %v3615 = vpack.c.b16 %v3579, %v3578
          %v3616 = vpack.c.b16 %v3581, %v3580
          %v3617 = vpack.c.b16 %v3583, %v3582
          %v3618 = vpack.c.b16 %v3585, %v3584
          %v3619 = vpack.c.b16 %v3587, %v3586
          %v3620 = vpack.c.b16 %v3589, %v3588
          %v3621 = vpack.c.b16 %v3591, %v3590
          %v3622 = vpack.c.b16 %v3593, %v3592
          %v3623 = vpack.c.b16 %v3595, %v3594
          %v3624 = vpack.c.b16 %v3597, %v3596
          %v3625 = vpack.c.b16 %v3599, %v3598
          %v3626 = vpack.c.b16 %v3601, %v3600
          %v3627 = vpack.c.b16 %v3603, %v3602
          %v3628 = vpack.c.b16 %v3605, %v3604
          %v3629 = vpack.c.b16 %v3607, %v3606
          %v3630 = vpack.c.b16 %v3609, %v3608
          %v3631 = vpack.c.b16 %v3611, %v3610
          %v3632 = vpack.c.b16 %v3613, %v3612
          %v3633 = vpack.c.b16 %v3614, %v3614
          %v3634 = vrot.slane %v3615, 2
          %v3635 = vrot.slane %v3616, 2
          %v3636 = vsel %vm3170, %v3634, %v3635
          %v3637 = vrot.slane %v3617, 2
          %v3638 = vsel %vm3170, %v3635, %v3637
          %v3639 = vrot.slane %v3618, 2
          %v3640 = vsel %vm3170, %v3637, %v3639
          %v3641 = vrot.slane %v3619, 2
          %v3642 = vsel %vm3170, %v3639, %v3641
          %v3643 = vrot.slane %v3620, 2
          %v3644 = vsel %vm3170, %v3641, %v3643
          %v3645 = vrot.slane %v3621, 2
          %v3646 = vsel %vm3170, %v3643, %v3645
          %v3647 = vrot.slane %v3622, 2
          %v3648 = vsel %vm3170, %v3645, %v3647
          %v3649 = vrot.slane %v3623, 2
          %v3650 = vsel %vm3170, %v3647, %v3649
          %v3651 = vrot.slane %v3624, 2
          %v3652 = vsel %vm3170, %v3649, %v3651
          %v3653 = vrot.slane %v3625, 2
          %v3654 = vsel %vm3170, %v3651, %v3653
          %v3655 = vrot.slane %v3626, 2
          %v3656 = vsel %vm3170, %v3653, %v3655
          %v3657 = vrot.slane %v3627, 2
          %v3658 = vsel %vm3170, %v3655, %v3657
          %v3659 = vrot.slane %v3628, 2
          %v3660 = vsel %vm3170, %v3657, %v3659
          %v3661 = vrot.slane %v3629, 2
          %v3662 = vsel %vm3170, %v3659, %v3661
          %v3663 = vrot.slane %v3630, 2
          %v3664 = vsel %vm3170, %v3661, %v3663
          %v3665 = vrot.slane %v3631, 2
          %v3666 = vsel %vm3170, %v3663, %v3665
          %v3667 = vrot.slane %v3632, 2
          %v3668 = vsel %vm3170, %v3665, %v3667
          %v3669 = vrot.slane %v3633, 2
          %v3670 = vsel %vm3170, %v3667, %v3669
          %v3705 = vunpack.c.l.b16 %v3525
          %v3706 = vunpack.c.l.b16 %v3526
          %v3707 = vunpack.c.l.b16 %v3527
          %v3708 = vunpack.c.l.b16 %v3528
          %v3709 = vunpack.c.l.b16 %v3529
          %v3710 = vunpack.c.l.b16 %v3530
          %v3711 = vunpack.c.l.b16 %v3531
          %v3712 = vunpack.c.l.b16 %v3532
          %v3713 = vunpack.c.l.b16 %v3533
          %v3714 = vunpack.c.l.b16 %v3534
          %v3715 = vunpack.c.l.b16 %v3535
          %v3716 = vunpack.c.l.b16 %v3536
          %v3717 = vunpack.c.l.b16 %v3537
          %v3718 = vunpack.c.l.b16 %v3538
          %v3719 = vunpack.c.l.b16 %v3539
          %v3720 = vunpack.c.l.b16 %v3540
          %v3721 = vpack.c.b16 %v3706, %v3705
          %v3722 = vpack.c.b16 %v3708, %v3707
          %v3723 = vpack.c.b16 %v3710, %v3709
          %v3724 = vpack.c.b16 %v3712, %v3711
          %v3725 = vpack.c.b16 %v3714, %v3713
          %v3726 = vpack.c.b16 %v3716, %v3715
          %v3727 = vpack.c.b16 %v3718, %v3717
          %v3728 = vpack.c.b16 %v3720, %v3719
          %3737 = vmatprep.subr.bf16.mxu0 0
          %3738 = vmatpush1.bf16.msra.mxu0 %v3721
          %3739 = vmatprep.subr.bf16.mxu0 0
          %3740 = vmatpush1.bf16.msra.mxu0 %v3722
          %3741 = vmatprep.subr.bf16.mxu0 0
          %3742 = vmatpush1.bf16.msra.mxu0 %v3723
          %3743 = vmatprep.subr.bf16.mxu0 0
          %3744 = vmatpush1.bf16.msra.mxu0 %v3724
          %3745 = vmatprep.subr.bf16.mxu0 0
          %3746 = vmatpush1.bf16.msra.mxu0 %v3725
          %3747 = vmatprep.subr.bf16.mxu0 0
          %3748 = vmatpush1.bf16.msra.mxu0 %v3726
          %3749 = vmatprep.subr.bf16.mxu0 0
          %3750 = vmatpush1.bf16.msra.mxu0 %v3727
          %3751 = vmatprep.subr.bf16.mxu0 0
          %3752 = vmatpush1.bf16.msra.mxu0 %v3728
          %3753 = vmatprep.subr.bf16.mxu0 0
          %3754 = vmatpush1.bf16.msra.mxu0 0
          %3755 = vmatprep.subr.bf16.mxu0 0
          %3756 = vmatpush1.bf16.msra.mxu0 0
          %3757 = vmatprep.subr.bf16.mxu0 0
          %3758 = vmatpush1.bf16.msra.mxu0 0
          %3759 = vmatprep.subr.bf16.mxu0 0
          %3760 = vmatpush1.bf16.msra.mxu0 0
          %3761 = vmatprep.subr.bf16.mxu0 0
          %3762 = vmatpush1.bf16.msra.mxu0 0
          %3763 = vmatprep.subr.bf16.mxu0 0
          %3764 = vmatpush1.bf16.msra.mxu0 0
          %3765 = vmatprep.subr.bf16.mxu0 0
          %3766 = vmatpush1.bf16.msra.mxu0 0
          %3767 = vmatprep.subr.bf16.mxu0 0
          %3768 = vmatpush1.bf16.msra.mxu0 0
          %3769 = vmatprep.mubr.bf16.mxu0 0
          %3770 = vmatmul.mubr.bf16.gmra.mrb[0].mxu0 %v3636
          %v3771 = vpop.f32.mrb[0].mxu0
          %v3772 = vadd.f32 0.0, %v3771
          %v3773 = vpop.f32.mrb[0].mxu0
          %v3774 = vpop.f32.mrb[0].mxu0
          %v3775 = vadd.f32 0.0, %v3774
          %v3776 = vpop.f32.mrb[0].mxu0
          %3777 = vmatprep.mubr.bf16.mxu0 0
          %3778 = vmatmul.mubr.bf16.gmra.mrb[0].mxu0 %v3638
          %v3779 = vpop.f32.mrb[0].mxu0
          %v3780 = vadd.f32 0.0, %v3779
          %v3781 = vpop.f32.mrb[0].mxu0
          %v3782 = vpop.f32.mrb[0].mxu0
          %v3783 = vadd.f32 0.0, %v3782
          %v3784 = vpop.f32.mrb[0].mxu0
          %3785 = vmatprep.mubr.bf16.mxu0 0
          %3786 = vmatmul.mubr.bf16.gmra.mrb[0].mxu0 %v3640
          %v3787 = vpop.f32.mrb[0].mxu0
          %v3788 = vadd.f32 0.0, %v3787
          %v3789 = vpop.f32.mrb[0].mxu0
          %v3790 = vpop.f32.mrb[0].mxu0
          %v3791 = vadd.f32 0.0, %v3790
          %v3792 = vpop.f32.mrb[0].mxu0
          %3793 = vmatprep.mubr.bf16.mxu0 0
          %3794 = vmatmul.mubr.bf16.gmra.mrb[0].mxu0 %v3642
          %v3795 = vpop.f32.mrb[0].mxu0
          %v3796 = vadd.f32 0.0, %v3795
          %v3797 = vpop.f32.mrb[0].mxu0
          %v3798 = vpop.f32.mrb[0].mxu0
          %v3799 = vadd.f32 0.0, %v3798
          %v3800 = vpop.f32.mrb[0].mxu0
          %3801 = vmatprep.mubr.bf16.mxu0 0
          %3802 = vmatmul.mubr.bf16.gmra.mrb[0].mxu0 %v3644
          %v3803 = vpop.f32.mrb[0].mxu0
          %v3804 = vadd.f32 0.0, %v3803
          %v3805 = vpop.f32.mrb[0].mxu0
          %v3806 = vpop.f32.mrb[0].mxu0
          %v3807 = vadd.f32 0.0, %v3806
          %v3808 = vpop.f32.mrb[0].mxu0
          %3809 = vmatprep.mubr.bf16.mxu0 0
          %3810 = vmatmul.mubr.bf16.gmra.mrb[0].mxu0 %v3646
          %v3811 = vpop.f32.mrb[0].mxu0
          %v3812 = vadd.f32 0.0, %v3811
          %v3813 = vpop.f32.mrb[0].mxu0
          %v3814 = vpop.f32.mrb[0].mxu0
          %v3815 = vadd.f32 0.0, %v3814
          %v3816 = vpop.f32.mrb[0].mxu0
          %3817 = vmatprep.mubr.bf16.mxu0 0
          %3818 = vmatmul.mubr.bf16.gmra.mrb[0].mxu0 %v3648
          %v3819 = vpop.f32.mrb[0].mxu0
          %v3820 = vadd.f32 0.0, %v3819
          %v3821 = vpop.f32.mrb[0].mxu0
          %v3822 = vpop.f32.mrb[0].mxu0
          %v3823 = vadd.f32 0.0, %v3822
          %v3824 = vpop.f32.mrb[0].mxu0
          %3825 = vmatprep.mubr.bf16.mxu0 0
          %3826 = vmatmul.mubr.bf16.gmra.mrb[0].mxu0 %v3650
          %v3827 = vpop.f32.mrb[0].mxu0
          %v3828 = vadd.f32 0.0, %v3827
          %v3829 = vpop.f32.mrb[0].mxu0
          %v3830 = vpop.f32.mrb[0].mxu0
          %v3831 = vadd.f32 0.0, %v3830
          %v3832 = vpop.f32.mrb[0].mxu0
          %3833 = vmatprep.mubr.bf16.mxu0 0
          %3834 = vmatmul.mubr.bf16.gmra.mrb[0].mxu0 %v3652
          %v3835 = vpop.f32.mrb[0].mxu0
          %v3836 = vadd.f32 0.0, %v3835
          %v3837 = vpop.f32.mrb[0].mxu0
          %v3838 = vpop.f32.mrb[0].mxu0
          %v3839 = vadd.f32 0.0, %v3838
          %v3840 = vpop.f32.mrb[0].mxu0
          %3841 = vmatprep.mubr.bf16.mxu0 0
          %3842 = vmatmul.mubr.bf16.gmra.mrb[0].mxu0 %v3654
          %v3843 = vpop.f32.mrb[0].mxu0
          %v3844 = vadd.f32 0.0, %v3843
          %v3845 = vpop.f32.mrb[0].mxu0
          %v3846 = vpop.f32.mrb[0].mxu0
          %v3847 = vadd.f32 0.0, %v3846
          %v3848 = vpop.f32.mrb[0].mxu0
          %3849 = vmatprep.mubr.bf16.mxu0 0
          %3850 = vmatmul.mubr.bf16.gmra.mrb[0].mxu0 %v3656
          %v3851 = vpop.f32.mrb[0].mxu0
          %v3852 = vadd.f32 0.0, %v3851
          %v3853 = vpop.f32.mrb[0].mxu0
          %v3854 = vpop.f32.mrb[0].mxu0
          %v3855 = vadd.f32 0.0, %v3854
          %v3856 = vpop.f32.mrb[0].mxu0
          %3857 = vmatprep.mubr.bf16.mxu0 0
          %3858 = vmatmul.mubr.bf16.gmra.mrb[0].mxu0 %v3658
          %v3859 = vpop.f32.mrb[0].mxu0
          %v3860 = vadd.f32 0.0, %v3859
          %v3861 = vpop.f32.mrb[0].mxu0
          %v3862 = vpop.f32.mrb[0].mxu0
          %v3863 = vadd.f32 0.0, %v3862
          %v3864 = vpop.f32.mrb[0].mxu0
          %3865 = vmatprep.mubr.bf16.mxu0 0
          %3866 = vmatmul.mubr.bf16.gmra.mrb[0].mxu0 %v3660
          %v3867 = vpop.f32.mrb[0].mxu0
          %v3868 = vadd.f32 0.0, %v3867
          %v3869 = vpop.f32.mrb[0].mxu0
          %v3870 = vpop.f32.mrb[0].mxu0
          %v3871 = vadd.f32 0.0, %v3870
          %v3872 = vpop.f32.mrb[0].mxu0
          %3873 = vmatprep.mubr.bf16.mxu0 0
          %3874 = vmatmul.mubr.bf16.gmra.mrb[0].mxu0 %v3662
          %v3875 = vpop.f32.mrb[0].mxu0
          %v3876 = vadd.f32 0.0, %v3875
          %v3877 = vpop.f32.mrb[0].mxu0
          %v3878 = vpop.f32.mrb[0].mxu0
          %v3879 = vadd.f32 0.0, %v3878
          %v3880 = vpop.f32.mrb[0].mxu0
          %3881 = vmatprep.mubr.bf16.mxu0 0
          %3882 = vmatmul.mubr.bf16.gmra.mrb[0].mxu0 %v3664
          %v3883 = vpop.f32.mrb[0].mxu0
          %v3884 = vadd.f32 0.0, %v3883
          %v3885 = vpop.f32.mrb[0].mxu0
          %v3886 = vpop.f32.mrb[0].mxu0
          %v3887 = vadd.f32 0.0, %v3886
          %v3888 = vpop.f32.mrb[0].mxu0
          %3889 = vmatprep.mubr.bf16.mxu0 0
          %3890 = vmatmul.mubr.bf16.gmra.mrb[0].mxu0 %v3666
          %v3891 = vpop.f32.mrb[0].mxu0
          %v3892 = vadd.f32 0.0, %v3891
          %v3893 = vpop.f32.mrb[0].mxu0
          %v3894 = vpop.f32.mrb[0].mxu0
          %v3895 = vadd.f32 0.0, %v3894
          %v3896 = vpop.f32.mrb[0].mxu0
          %3897 = vmatprep.mubr.bf16.mxu0 0
          %3898 = vmatmul.mubr.bf16.gmra.mrb[0].mxu0 %v3668
          %v3899 = vpop.f32.mrb[0].mxu0
          %v3900 = vadd.f32 0.0, %v3899
          %v3901 = vpop.f32.mrb[0].mxu0
          %v3902 = vpop.f32.mrb[0].mxu0
          %v3903 = vadd.f32 0.0, %v3902
          %v3904 = vpop.f32.mrb[0].mxu0
          %3905 = vmatprep.mubr.bf16.mxu0 0
          %3906 = vmatmul.mubr.bf16.gmra.mrb[0].mxu0 %v3670
          %v3907 = vpop.f32.mrb[0].mxu0
          %v3908 = vadd.f32 0.0, %v3907
          %v3909 = vpop.f32.mrb[0].mxu0
          %v3910 = vpop.f32.mrb[0].mxu0
          %v3911 = vadd.f32 0.0, %v3910
          %v3912 = vpop.f32.mrb[0].mxu0
          %3913 = vdwg.mxu0
          %v3914 = vadd.f32 %v3451, %v3772
          %v3915 = vadd.f32 %v3452, %v3775
          %v3916 = vadd.f32 %v3453, %v3780
          %v3917 = vadd.f32 %v3454, %v3783
          %v3918 = vadd.f32 %v3455, %v3788
          %v3919 = vadd.f32 %v3456, %v3791
          %v3920 = vadd.f32 %v3457, %v3796
          %v3921 = vadd.f32 %v3458, %v3799
          %v3922 = vadd.f32 %v3459, %v3804
          %v3923 = vadd.f32 %v3460, %v3807
          %v3924 = vadd.f32 %v3461, %v3812
          %v3925 = vadd.f32 %v3462, %v3815
          %v3926 = vadd.f32 %v3463, %v3820
          %v3927 = vadd.f32 %v3464, %v3823
          %v3928 = vadd.f32 %v3465, %v3828
          %v3929 = vadd.f32 %v3466, %v3831
          %v3930 = vadd.f32 %v3467, %v3836
          %v3931 = vadd.f32 %v3468, %v3839
          %v3932 = vadd.f32 %v3469, %v3844
          %v3933 = vadd.f32 %v3470, %v3847
          %v3934 = vadd.f32 %v3471, %v3852
          %v3935 = vadd.f32 %v3472, %v3855
          %v3936 = vadd.f32 %v3473, %v3860
          %v3937 = vadd.f32 %v3474, %v3863
          %v3938 = vadd.f32 %v3475, %v3868
          %v3939 = vadd.f32 %v3476, %v3871
          %v3940 = vadd.f32 %v3477, %v3876
          %v3941 = vadd.f32 %v3478, %v3879
          %v3942 = vadd.f32 %v3479, %v3884
          %v3943 = vadd.f32 %v3480, %v3887
          %v3944 = vadd.f32 %v3481, %v3892
          %v3945 = vadd.f32 %v3482, %v3895
          %v3946 = vadd.f32 %v3483, %v3900
          %v3947 = vadd.f32 %v3484, %v3903
          %v3948 = vadd.f32 %v3485, %v3908
          %v3949 = vadd.f32 %v3486, %v3911
          %v3950 = vld [vmem:[#allocation2 + $0xa0] sm:$0x7]
          %s3951 = scalar_lea.vmem %s2, 448
          %v3952 = vld [vmem:[%s3951] sm:$0xf]
          %v3953 = vld [vmem:[%s3951 + $0x4] sm:$0xf]
          %v3954 = vld [vmem:[%s3951 + $0x8] sm:$0xf]
          %v3955 = vld [vmem:[%s3951 + $0xc] sm:$0xf]
          %v3956 = vld [vmem:[%s3951 + $0x10] sm:$0xf]
          %v3957 = vld [vmem:[%s3951 + $0x14] sm:$0xf]
          %v3958 = vld [vmem:[%s3951 + $0x18] sm:$0xf]
          %v3959 = vld [vmem:[%s3951 + $0x1c] sm:$0xf]
          %v3960 = vld [vmem:[%s3951 + $0x20] sm:$0xf]
          %v3961 = vld [vmem:[%s3951 + $0x24] sm:$0xf]
          %v3962 = vld [vmem:[%s3951 + $0x28] sm:$0xf]
          %v3963 = vld [vmem:[%s3951 + $0x2c] sm:$0xf]
          %v3964 = vld [vmem:[%s3951 + $0x30] sm:$0xf]
          %v3965 = vld [vmem:[%s3951 + $0x34] sm:$0xf]
          %v3966 = vld [vmem:[%s3951 + $0x38] sm:$0xf]
          %v3967 = vld [vmem:[%s3951 + $0x3c] sm:$0xf]
          %v3969 = vunpack.c.l.b16 %v3950
          %v3970 = vpack.c.b16 %v3969, %v3969
          %vm3971 = vsmask.f32 5376
          %v3973 = vshrl.u32 %v3615, 16
          %v3975 = vrot.slane %v3973, 2
          %v3976 = vshll.u32 %v3615, 16
          %v3978 = vrot.slane %v3976, 3
          %v3979 = vor.u32 %v3975, %v3978
          %v3981 = vshrl.u32 %v3616, 16
          %v3983 = vrot.slane %v3981, 2
          %v3984 = vshll.u32 %v3616, 16
          %v3986 = vrot.slane %v3984, 3
          %v3987 = vor.u32 %v3983, %v3986
          %v3988 = vsel %vm3971, %v3979, %v3987
          %v3990 = vshrl.u32 %v3617, 16
          %v3992 = vrot.slane %v3990, 2
          %v3993 = vshll.u32 %v3617, 16
          %v3995 = vrot.slane %v3993, 3
          %v3996 = vor.u32 %v3992, %v3995
          %v3997 = vsel %vm3971, %v3987, %v3996
          %v3999 = vshrl.u32 %v3618, 16
          %v4001 = vrot.slane %v3999, 2
          %v4002 = vshll.u32 %v3618, 16
          %v4004 = vrot.slane %v4002, 3
          %v4005 = vor.u32 %v4001, %v4004
          %v4006 = vsel %vm3971, %v3996, %v4005
          %v4008 = vshrl.u32 %v3619, 16
          %v4010 = vrot.slane %v4008, 2
          %v4011 = vshll.u32 %v3619, 16
          %v4013 = vrot.slane %v4011, 3
          %v4014 = vor.u32 %v4010, %v4013
          %v4015 = vsel %vm3971, %v4005, %v4014
          %v4017 = vshrl.u32 %v3620, 16
          %v4019 = vrot.slane %v4017, 2
          %v4020 = vshll.u32 %v3620, 16
          %v4022 = vrot.slane %v4020, 3
          %v4023 = vor.u32 %v4019, %v4022
          %v4024 = vsel %vm3971, %v4014, %v4023
          %v4026 = vshrl.u32 %v3621, 16
          %v4028 = vrot.slane %v4026, 2
          %v4029 = vshll.u32 %v3621, 16
          %v4031 = vrot.slane %v4029, 3
          %v4032 = vor.u32 %v4028, %v4031
          %v4033 = vsel %vm3971, %v4023, %v4032
          %v4035 = vshrl.u32 %v3622, 16
          %v4037 = vrot.slane %v4035, 2
          %v4038 = vshll.u32 %v3622, 16
          %v4040 = vrot.slane %v4038, 3
          %v4041 = vor.u32 %v4037, %v4040
          %v4042 = vsel %vm3971, %v4032, %v4041
          %v4044 = vshrl.u32 %v3623, 16
          %v4046 = vrot.slane %v4044, 2
          %v4047 = vshll.u32 %v3623, 16
          %v4049 = vrot.slane %v4047, 3
          %v4050 = vor.u32 %v4046, %v4049
          %v4051 = vsel %vm3971, %v4041, %v4050
          %v4053 = vshrl.u32 %v3624, 16
          %v4055 = vrot.slane %v4053, 2
          %v4056 = vshll.u32 %v3624, 16
          %v4058 = vrot.slane %v4056, 3
          %v4059 = vor.u32 %v4055, %v4058
          %v4060 = vsel %vm3971, %v4050, %v4059
          %v4062 = vshrl.u32 %v3625, 16
          %v4064 = vrot.slane %v4062, 2
          %v4065 = vshll.u32 %v3625, 16
          %v4067 = vrot.slane %v4065, 3
          %v4068 = vor.u32 %v4064, %v4067
          %v4069 = vsel %vm3971, %v4059, %v4068
          %v4071 = vshrl.u32 %v3626, 16
          %v4073 = vrot.slane %v4071, 2
          %v4074 = vshll.u32 %v3626, 16
          %v4076 = vrot.slane %v4074, 3
          %v4077 = vor.u32 %v4073, %v4076
          %v4078 = vsel %vm3971, %v4068, %v4077
          %v4080 = vshrl.u32 %v3627, 16
          %v4082 = vrot.slane %v4080, 2
          %v4083 = vshll.u32 %v3627, 16
          %v4085 = vrot.slane %v4083, 3
          %v4086 = vor.u32 %v4082, %v4085
          %v4087 = vsel %vm3971, %v4077, %v4086
          %v4089 = vshrl.u32 %v3628, 16
          %v4091 = vrot.slane %v4089, 2
          %v4092 = vshll.u32 %v3628, 16
          %v4094 = vrot.slane %v4092, 3
          %v4095 = vor.u32 %v4091, %v4094
          %v4096 = vsel %vm3971, %v4086, %v4095
          %v4098 = vshrl.u32 %v3629, 16
          %v4100 = vrot.slane %v4098, 2
          %v4101 = vshll.u32 %v3629, 16
          %v4103 = vrot.slane %v4101, 3
          %v4104 = vor.u32 %v4100, %v4103
          %v4105 = vsel %vm3971, %v4095, %v4104
          %v4107 = vshrl.u32 %v3630, 16
          %v4109 = vrot.slane %v4107, 2
          %v4110 = vshll.u32 %v3630, 16
          %v4112 = vrot.slane %v4110, 3
          %v4113 = vor.u32 %v4109, %v4112
          %v4114 = vsel %vm3971, %v4104, %v4113
          %v4116 = vshrl.u32 %v3631, 16
          %v4118 = vrot.slane %v4116, 2
          %v4119 = vshll.u32 %v3631, 16
          %v4121 = vrot.slane %v4119, 3
          %v4122 = vor.u32 %v4118, %v4121
          %v4123 = vsel %vm3971, %v4113, %v4122
          %v4125 = vshrl.u32 %v3632, 16
          %v4127 = vrot.slane %v4125, 2
          %v4128 = vshll.u32 %v3632, 16
          %v4130 = vrot.slane %v4128, 3
          %v4131 = vor.u32 %v4127, %v4130
          %v4132 = vsel %vm3971, %v4122, %v4131
          %v4134 = vshrl.u32 %v3970, 16
          %v4136 = vrot.slane %v4134, 2
          %v4137 = vshll.u32 %v3970, 16
          %v4139 = vrot.slane %v4137, 3
          %v4140 = vor.u32 %v4136, %v4139
          %v4141 = vsel %vm3971, %v4131, %v4140
          %v4176 = vunpack.c.l.b16 %v3952
          %v4177 = vunpack.c.l.b16 %v3953
          %v4178 = vunpack.c.l.b16 %v3954
          %v4179 = vunpack.c.l.b16 %v3955
          %v4180 = vunpack.c.l.b16 %v3956
          %v4181 = vunpack.c.l.b16 %v3957
          %v4182 = vunpack.c.l.b16 %v3958
          %v4183 = vunpack.c.l.b16 %v3959
          %v4184 = vunpack.c.l.b16 %v3960
          %v4185 = vunpack.c.l.b16 %v3961
          %v4186 = vunpack.c.l.b16 %v3962
          %v4187 = vunpack.c.l.b16 %v3963
          %v4188 = vunpack.c.l.b16 %v3964
          %v4189 = vunpack.c.l.b16 %v3965
          %v4190 = vunpack.c.l.b16 %v3966
          %v4191 = vunpack.c.l.b16 %v3967
          %v4192 = vpack.c.b16 %v4177, %v4176
          %v4193 = vpack.c.b16 %v4179, %v4178
          %v4194 = vpack.c.b16 %v4181, %v4180
          %v4195 = vpack.c.b16 %v4183, %v4182
          %v4196 = vpack.c.b16 %v4185, %v4184
          %v4197 = vpack.c.b16 %v4187, %v4186
          %v4198 = vpack.c.b16 %v4189, %v4188
          %v4199 = vpack.c.b16 %v4191, %v4190
          %4208 = vmatprep.subr.bf16.mxu0 0
          %4209 = vmatpush1.bf16.msra.mxu0 %v4192
          %4210 = vmatprep.subr.bf16.mxu0 0
          %4211 = vmatpush1.bf16.msra.mxu0 %v4193
          %4212 = vmatprep.subr.bf16.mxu0 0
          %4213 = vmatpush1.bf16.msra.mxu0 %v4194
          %4214 = vmatprep.subr.bf16.mxu0 0
          %4215 = vmatpush1.bf16.msra.mxu0 %v4195
          %4216 = vmatprep.subr.bf16.mxu0 0
          %4217 = vmatpush1.bf16.msra.mxu0 %v4196
          %4218 = vmatprep.subr.bf16.mxu0 0
          %4219 = vmatpush1.bf16.msra.mxu0 %v4197
          %4220 = vmatprep.subr.bf16.mxu0 0
          %4221 = vmatpush1.bf16.msra.mxu0 %v4198
          %4222 = vmatprep.subr.bf16.mxu0 0
          %4223 = vmatpush1.bf16.msra.mxu0 %v4199
          %4224 = vmatprep.subr.bf16.mxu0 0
          %4225 = vmatpush1.bf16.msra.mxu0 0
          %4226 = vmatprep.subr.bf16.mxu0 0
          %4227 = vmatpush1.bf16.msra.mxu0 0
          %4228 = vmatprep.subr.bf16.mxu0 0
          %4229 = vmatpush1.bf16.msra.mxu0 0
          %4230 = vmatprep.subr.bf16.mxu0 0
          %4231 = vmatpush1.bf16.msra.mxu0 0
          %4232 = vmatprep.subr.bf16.mxu0 0
          %4233 = vmatpush1.bf16.msra.mxu0 0
          %4234 = vmatprep.subr.bf16.mxu0 0
          %4235 = vmatpush1.bf16.msra.mxu0 0
          %4236 = vmatprep.subr.bf16.mxu0 0
          %4237 = vmatpush1.bf16.msra.mxu0 0
          %4238 = vmatprep.subr.bf16.mxu0 0
          %4239 = vmatpush1.bf16.msra.mxu0 0
          %4240 = vmatprep.mubr.bf16.mxu0 0
          %4241 = vmatmul.mubr.bf16.gmra.mrb[0].mxu0 %v3988
          %v4242 = vpop.f32.mrb[0].mxu0
          %v4243 = vadd.f32 0.0, %v4242
          %v4244 = vpop.f32.mrb[0].mxu0
          %v4245 = vpop.f32.mrb[0].mxu0
          %v4246 = vadd.f32 0.0, %v4245
          %v4247 = vpop.f32.mrb[0].mxu0
          %4248 = vmatprep.mubr.bf16.mxu0 0
          %4249 = vmatmul.mubr.bf16.gmra.mrb[0].mxu0 %v3997
          %v4250 = vpop.f32.mrb[0].mxu0
          %v4251 = vadd.f32 0.0, %v4250
          %v4252 = vpop.f32.mrb[0].mxu0
          %v4253 = vpop.f32.mrb[0].mxu0
          %v4254 = vadd.f32 0.0, %v4253
          %v4255 = vpop.f32.mrb[0].mxu0
          %4256 = vmatprep.mubr.bf16.mxu0 0
          %4257 = vmatmul.mubr.bf16.gmra.mrb[0].mxu0 %v4006
          %v4258 = vpop.f32.mrb[0].mxu0
          %v4259 = vadd.f32 0.0, %v4258
          %v4260 = vpop.f32.mrb[0].mxu0
          %v4261 = vpop.f32.mrb[0].mxu0
          %v4262 = vadd.f32 0.0, %v4261
          %v4263 = vpop.f32.mrb[0].mxu0
          %4264 = vmatprep.mubr.bf16.mxu0 0
          %4265 = vmatmul.mubr.bf16.gmra.mrb[0].mxu0 %v4015
          %v4266 = vpop.f32.mrb[0].mxu0
          %v4267 = vadd.f32 0.0, %v4266
          %v4268 = vpop.f32.mrb[0].mxu0
          %v4269 = vpop.f32.mrb[0].mxu0
          %v4270 = vadd.f32 0.0, %v4269
          %v4271 = vpop.f32.mrb[0].mxu0
          %4272 = vmatprep.mubr.bf16.mxu0 0
          %4273 = vmatmul.mubr.bf16.gmra.mrb[0].mxu0 %v4024
          %v4274 = vpop.f32.mrb[0].mxu0
          %v4275 = vadd.f32 0.0, %v4274
          %v4276 = vpop.f32.mrb[0].mxu0
          %v4277 = vpop.f32.mrb[0].mxu0
          %v4278 = vadd.f32 0.0, %v4277
          %v4279 = vpop.f32.mrb[0].mxu0
          %4280 = vmatprep.mubr.bf16.mxu0 0
          %4281 = vmatmul.mubr.bf16.gmra.mrb[0].mxu0 %v4033
          %v4282 = vpop.f32.mrb[0].mxu0
          %v4283 = vadd.f32 0.0, %v4282
          %v4284 = vpop.f32.mrb[0].mxu0
          %v4285 = vpop.f32.mrb[0].mxu0
          %v4286 = vadd.f32 0.0, %v4285
          %v4287 = vpop.f32.mrb[0].mxu0
          %4288 = vmatprep.mubr.bf16.mxu0 0
          %4289 = vmatmul.mubr.bf16.gmra.mrb[0].mxu0 %v4042
          %v4290 = vpop.f32.mrb[0].mxu0
          %v4291 = vadd.f32 0.0, %v4290
          %v4292 = vpop.f32.mrb[0].mxu0
          %v4293 = vpop.f32.mrb[0].mxu0
          %v4294 = vadd.f32 0.0, %v4293
          %v4295 = vpop.f32.mrb[0].mxu0
          %4296 = vmatprep.mubr.bf16.mxu0 0
          %4297 = vmatmul.mubr.bf16.gmra.mrb[0].mxu0 %v4051
          %v4298 = vpop.f32.mrb[0].mxu0
          %v4299 = vadd.f32 0.0, %v4298
          %v4300 = vpop.f32.mrb[0].mxu0
          %v4301 = vpop.f32.mrb[0].mxu0
          %v4302 = vadd.f32 0.0, %v4301
          %v4303 = vpop.f32.mrb[0].mxu0
          %4304 = vmatprep.mubr.bf16.mxu0 0
          %4305 = vmatmul.mubr.bf16.gmra.mrb[0].mxu0 %v4060
          %v4306 = vpop.f32.mrb[0].mxu0
          %v4307 = vadd.f32 0.0, %v4306
          %v4308 = vpop.f32.mrb[0].mxu0
          %v4309 = vpop.f32.mrb[0].mxu0
          %v4310 = vadd.f32 0.0, %v4309
          %v4311 = vpop.f32.mrb[0].mxu0
          %4312 = vmatprep.mubr.bf16.mxu0 0
          %4313 = vmatmul.mubr.bf16.gmra.mrb[0].mxu0 %v4069
          %v4314 = vpop.f32.mrb[0].mxu0
          %v4315 = vadd.f32 0.0, %v4314
          %v4316 = vpop.f32.mrb[0].mxu0
          %v4317 = vpop.f32.mrb[0].mxu0
          %v4318 = vadd.f32 0.0, %v4317
          %v4319 = vpop.f32.mrb[0].mxu0
          %4320 = vmatprep.mubr.bf16.mxu0 0
          %4321 = vmatmul.mubr.bf16.gmra.mrb[0].mxu0 %v4078
          %v4322 = vpop.f32.mrb[0].mxu0
          %v4323 = vadd.f32 0.0, %v4322
          %v4324 = vpop.f32.mrb[0].mxu0
          %v4325 = vpop.f32.mrb[0].mxu0
          %v4326 = vadd.f32 0.0, %v4325
          %v4327 = vpop.f32.mrb[0].mxu0
          %4328 = vmatprep.mubr.bf16.mxu0 0
          %4329 = vmatmul.mubr.bf16.gmra.mrb[0].mxu0 %v4087
          %v4330 = vpop.f32.mrb[0].mxu0
          %v4331 = vadd.f32 0.0, %v4330
          %v4332 = vpop.f32.mrb[0].mxu0
          %v4333 = vpop.f32.mrb[0].mxu0
          %v4334 = vadd.f32 0.0, %v4333
          %v4335 = vpop.f32.mrb[0].mxu0
          %4336 = vmatprep.mubr.bf16.mxu0 0
          %4337 = vmatmul.mubr.bf16.gmra.mrb[0].mxu0 %v4096
          %v4338 = vpop.f32.mrb[0].mxu0
          %v4339 = vadd.f32 0.0, %v4338
          %v4340 = vpop.f32.mrb[0].mxu0
          %v4341 = vpop.f32.mrb[0].mxu0
          %v4342 = vadd.f32 0.0, %v4341
          %v4343 = vpop.f32.mrb[0].mxu0
          %4344 = vmatprep.mubr.bf16.mxu0 0
          %4345 = vmatmul.mubr.bf16.gmra.mrb[0].mxu0 %v4105
          %v4346 = vpop.f32.mrb[0].mxu0
          %v4347 = vadd.f32 0.0, %v4346
          %v4348 = vpop.f32.mrb[0].mxu0
          %v4349 = vpop.f32.mrb[0].mxu0
          %v4350 = vadd.f32 0.0, %v4349
          %v4351 = vpop.f32.mrb[0].mxu0
          %4352 = vmatprep.mubr.bf16.mxu0 0
          %4353 = vmatmul.mubr.bf16.gmra.mrb[0].mxu0 %v4114
          %v4354 = vpop.f32.mrb[0].mxu0
          %v4355 = vadd.f32 0.0, %v4354
          %v4356 = vpop.f32.mrb[0].mxu0
          %v4357 = vpop.f32.mrb[0].mxu0
          %v4358 = vadd.f32 0.0, %v4357
          %v4359 = vpop.f32.mrb[0].mxu0
          %4360 = vmatprep.mubr.bf16.mxu0 0
          %4361 = vmatmul.mubr.bf16.gmra.mrb[0].mxu0 %v4123
          %v4362 = vpop.f32.mrb[0].mxu0
          %v4363 = vadd.f32 0.0, %v4362
          %v4364 = vpop.f32.mrb[0].mxu0
          %v4365 = vpop.f32.mrb[0].mxu0
          %v4366 = vadd.f32 0.0, %v4365
          %v4367 = vpop.f32.mrb[0].mxu0
          %4368 = vmatprep.mubr.bf16.mxu0 0
          %4369 = vmatmul.mubr.bf16.gmra.mrb[0].mxu0 %v4132
          %v4370 = vpop.f32.mrb[0].mxu0
          %v4371 = vadd.f32 0.0, %v4370
          %v4372 = vpop.f32.mrb[0].mxu0
          %v4373 = vpop.f32.mrb[0].mxu0
          %v4374 = vadd.f32 0.0, %v4373
          %v4375 = vpop.f32.mrb[0].mxu0
          %4376 = vmatprep.mubr.bf16.mxu0 0
          %4377 = vmatmul.mubr.bf16.gmra.mrb[0].mxu0 %v4141
          %v4378 = vpop.f32.mrb[0].mxu0
          %v4379 = vadd.f32 0.0, %v4378
          %v4380 = vpop.f32.mrb[0].mxu0
          %v4381 = vpop.f32.mrb[0].mxu0
          %v4382 = vadd.f32 0.0, %v4381
          %v4383 = vpop.f32.mrb[0].mxu0
          %4384 = vdwg.mxu0
          %v4385 = vadd.f32 %v3914, %v4243
          %v4386 = vadd.f32 %v3915, %v4246
          %v4387 = vadd.f32 %v3916, %v4251
          %v4388 = vadd.f32 %v3917, %v4254
          %v4389 = vadd.f32 %v3918, %v4259
          %v4390 = vadd.f32 %v3919, %v4262
          %v4391 = vadd.f32 %v3920, %v4267
          %v4392 = vadd.f32 %v3921, %v4270
          %v4393 = vadd.f32 %v3922, %v4275
          %v4394 = vadd.f32 %v3923, %v4278
          %v4395 = vadd.f32 %v3924, %v4283
          %v4396 = vadd.f32 %v3925, %v4286
          %v4397 = vadd.f32 %v3926, %v4291
          %v4398 = vadd.f32 %v3927, %v4294
          %v4399 = vadd.f32 %v3928, %v4299
          %v4400 = vadd.f32 %v3929, %v4302
          %v4401 = vadd.f32 %v3930, %v4307
          %v4402 = vadd.f32 %v3931, %v4310
          %v4403 = vadd.f32 %v3932, %v4315
          %v4404 = vadd.f32 %v3933, %v4318
          %v4405 = vadd.f32 %v3934, %v4323
          %v4406 = vadd.f32 %v3935, %v4326
          %v4407 = vadd.f32 %v3936, %v4331
          %v4408 = vadd.f32 %v3937, %v4334
          %v4409 = vadd.f32 %v3938, %v4339
          %v4410 = vadd.f32 %v3939, %v4342
          %v4411 = vadd.f32 %v3940, %v4347
          %v4412 = vadd.f32 %v3941, %v4350
          %v4413 = vadd.f32 %v3942, %v4355
          %v4414 = vadd.f32 %v3943, %v4358
          %v4415 = vadd.f32 %v3944, %v4363
          %v4416 = vadd.f32 %v3945, %v4366
          %v4417 = vadd.f32 %v3946, %v4371
          %v4418 = vadd.f32 %v3947, %v4374
          %v4419 = vadd.f32 %v3948, %v4379
          %v4420 = vadd.f32 %v3949, %v4382
          %v4421 = vld [vmem:[#allocation2 + $0x10] sm:$0x8]
          %s4422 = scalar_lea.vmem %s2, 512
          %v4423 = vld [vmem:[%s4422] sm:$0xf]
          %v4424 = vld [vmem:[%s4422 + $0x4] sm:$0xf]
          %v4425 = vld [vmem:[%s4422 + $0x8] sm:$0xf]
          %v4426 = vld [vmem:[%s4422 + $0xc] sm:$0xf]
          %v4427 = vld [vmem:[%s4422 + $0x10] sm:$0xf]
          %v4428 = vld [vmem:[%s4422 + $0x14] sm:$0xf]
          %v4429 = vld [vmem:[%s4422 + $0x18] sm:$0xf]
          %v4430 = vld [vmem:[%s4422 + $0x1c] sm:$0xf]
          %v4431 = vld [vmem:[%s4422 + $0x20] sm:$0xf]
          %v4432 = vld [vmem:[%s4422 + $0x24] sm:$0xf]
          %v4433 = vld [vmem:[%s4422 + $0x28] sm:$0xf]
          %v4434 = vld [vmem:[%s4422 + $0x2c] sm:$0xf]
          %v4435 = vld [vmem:[%s4422 + $0x30] sm:$0xf]
          %v4436 = vld [vmem:[%s4422 + $0x34] sm:$0xf]
          %v4437 = vld [vmem:[%s4422 + $0x38] sm:$0xf]
          %v4438 = vld [vmem:[%s4422 + $0x3c] sm:$0xf]
          %v4440 = vunpack.c.l.b16 %v4421
          %v4441 = vpack.c.b16 %v3579, %v4440
          %vm4442 = vcmask 1044480
          %v4443 = vrot.slane %v4441, 3
          %v4444 = vrot.slane %v3616, 3
          %v4445 = vsel %vm4442, %v4443, %v4444
          %v4446 = vrot.slane %v3617, 3
          %v4447 = vsel %vm4442, %v4444, %v4446
          %v4448 = vrot.slane %v3618, 3
          %v4449 = vsel %vm4442, %v4446, %v4448
          %v4450 = vrot.slane %v3619, 3
          %v4451 = vsel %vm4442, %v4448, %v4450
          %v4452 = vrot.slane %v3620, 3
          %v4453 = vsel %vm4442, %v4450, %v4452
          %v4454 = vrot.slane %v3621, 3
          %v4455 = vsel %vm4442, %v4452, %v4454
          %v4456 = vrot.slane %v3622, 3
          %v4457 = vsel %vm4442, %v4454, %v4456
          %v4458 = vrot.slane %v3623, 3
          %v4459 = vsel %vm4442, %v4456, %v4458
          %v4460 = vrot.slane %v3624, 3
          %v4461 = vsel %vm4442, %v4458, %v4460
          %v4462 = vrot.slane %v3625, 3
          %v4463 = vsel %vm4442, %v4460, %v4462
          %v4464 = vrot.slane %v3626, 3
          %v4465 = vsel %vm4442, %v4462, %v4464
          %v4466 = vrot.slane %v3627, 3
          %v4467 = vsel %vm4442, %v4464, %v4466
          %v4468 = vrot.slane %v3628, 3
          %v4469 = vsel %vm4442, %v4466, %v4468
          %v4470 = vrot.slane %v3629, 3
          %v4471 = vsel %vm4442, %v4468, %v4470
          %v4472 = vrot.slane %v3630, 3
          %v4473 = vsel %vm4442, %v4470, %v4472
          %v4474 = vrot.slane %v3631, 3
          %v4475 = vsel %vm4442, %v4472, %v4474
          %v4476 = vrot.slane %v3632, 3
          %v4477 = vsel %vm4442, %v4474, %v4476
          %v4478 = vrot.slane %v3970, 3
          %v4479 = vsel %vm4442, %v4476, %v4478
          %v4514 = vunpack.c.l.b16 %v4423
          %v4515 = vunpack.c.l.b16 %v4424
          %v4516 = vunpack.c.l.b16 %v4425
          %v4517 = vunpack.c.l.b16 %v4426
          %v4518 = vunpack.c.l.b16 %v4427
          %v4519 = vunpack.c.l.b16 %v4428
          %v4520 = vunpack.c.l.b16 %v4429
          %v4521 = vunpack.c.l.b16 %v4430
          %v4522 = vunpack.c.l.b16 %v4431
          %v4523 = vunpack.c.l.b16 %v4432
          %v4524 = vunpack.c.l.b16 %v4433
          %v4525 = vunpack.c.l.b16 %v4434
          %v4526 = vunpack.c.l.b16 %v4435
          %v4527 = vunpack.c.l.b16 %v4436
          %v4528 = vunpack.c.l.b16 %v4437
          %v4529 = vunpack.c.l.b16 %v4438
          %v4530 = vpack.c.b16 %v4515, %v4514
          %v4531 = vpack.c.b16 %v4517, %v4516
          %v4532 = vpack.c.b16 %v4519, %v4518
          %v4533 = vpack.c.b16 %v4521, %v4520
          %v4534 = vpack.c.b16 %v4523, %v4522
          %v4535 = vpack.c.b16 %v4525, %v4524
          %v4536 = vpack.c.b16 %v4527, %v4526
          %v4537 = vpack.c.b16 %v4529, %v4528
          %4546 = vmatprep.subr.bf16.mxu0 0
          %4547 = vmatpush1.bf16.msra.mxu0 %v4530
          %4548 = vmatprep.subr.bf16.mxu0 0
          %4549 = vmatpush1.bf16.msra.mxu0 %v4531
          %4550 = vmatprep.subr.bf16.mxu0 0
          %4551 = vmatpush1.bf16.msra.mxu0 %v4532
          %4552 = vmatprep.subr.bf16.mxu0 0
          %4553 = vmatpush1.bf16.msra.mxu0 %v4533
          %4554 = vmatprep.subr.bf16.mxu0 0
          %4555 = vmatpush1.bf16.msra.mxu0 %v4534
          %4556 = vmatprep.subr.bf16.mxu0 0
          %4557 = vmatpush1.bf16.msra.mxu0 %v4535
          %4558 = vmatprep.subr.bf16.mxu0 0
          %4559 = vmatpush1.bf16.msra.mxu0 %v4536
          %4560 = vmatprep.subr.bf16.mxu0 0
          %4561 = vmatpush1.bf16.msra.mxu0 %v4537
          %4562 = vmatprep.subr.bf16.mxu0 0
          %4563 = vmatpush1.bf16.msra.mxu0 0
          %4564 = vmatprep.subr.bf16.mxu0 0
          %4565 = vmatpush1.bf16.msra.mxu0 0
          %4566 = vmatprep.subr.bf16.mxu0 0
          %4567 = vmatpush1.bf16.msra.mxu0 0
          %4568 = vmatprep.subr.bf16.mxu0 0
          %4569 = vmatpush1.bf16.msra.mxu0 0
          %4570 = vmatprep.subr.bf16.mxu0 0
          %4571 = vmatpush1.bf16.msra.mxu0 0
          %4572 = vmatprep.subr.bf16.mxu0 0
          %4573 = vmatpush1.bf16.msra.mxu0 0
          %4574 = vmatprep.subr.bf16.mxu0 0
          %4575 = vmatpush1.bf16.msra.mxu0 0
          %4576 = vmatprep.subr.bf16.mxu0 0
          %4577 = vmatpush1.bf16.msra.mxu0 0
          %4578 = vmatprep.mubr.bf16.mxu0 0
          %4579 = vmatmul.mubr.bf16.gmra.mrb[0].mxu0 %v4445
          %v4580 = vpop.f32.mrb[0].mxu0
          %v4581 = vadd.f32 0.0, %v4580
          %v4582 = vpop.f32.mrb[0].mxu0
          %v4583 = vpop.f32.mrb[0].mxu0
          %v4584 = vadd.f32 0.0, %v4583
          %v4585 = vpop.f32.mrb[0].mxu0
          %4586 = vmatprep.mubr.bf16.mxu0 0
          %4587 = vmatmul.mubr.bf16.gmra.mrb[0].mxu0 %v4447
          %v4588 = vpop.f32.mrb[0].mxu0
          %v4589 = vadd.f32 0.0, %v4588
          %v4590 = vpop.f32.mrb[0].mxu0
          %v4591 = vpop.f32.mrb[0].mxu0
          %v4592 = vadd.f32 0.0, %v4591
          %v4593 = vpop.f32.mrb[0].mxu0
          %4594 = vmatprep.mubr.bf16.mxu0 0
          %4595 = vmatmul.mubr.bf16.gmra.mrb[0].mxu0 %v4449
          %v4596 = vpop.f32.mrb[0].mxu0
          %v4597 = vadd.f32 0.0, %v4596
          %v4598 = vpop.f32.mrb[0].mxu0
          %v4599 = vpop.f32.mrb[0].mxu0
          %v4600 = vadd.f32 0.0, %v4599
          %v4601 = vpop.f32.mrb[0].mxu0
          %4602 = vmatprep.mubr.bf16.mxu0 0
          %4603 = vmatmul.mubr.bf16.gmra.mrb[0].mxu0 %v4451
          %v4604 = vpop.f32.mrb[0].mxu0
          %v4605 = vadd.f32 0.0, %v4604
          %v4606 = vpop.f32.mrb[0].mxu0
          %v4607 = vpop.f32.mrb[0].mxu0
          %v4608 = vadd.f32 0.0, %v4607
          %v4609 = vpop.f32.mrb[0].mxu0
          %4610 = vmatprep.mubr.bf16.mxu0 0
          %4611 = vmatmul.mubr.bf16.gmra.mrb[0].mxu0 %v4453
          %v4612 = vpop.f32.mrb[0].mxu0
          %v4613 = vadd.f32 0.0, %v4612
          %v4614 = vpop.f32.mrb[0].mxu0
          %v4615 = vpop.f32.mrb[0].mxu0
          %v4616 = vadd.f32 0.0, %v4615
          %v4617 = vpop.f32.mrb[0].mxu0
          %4618 = vmatprep.mubr.bf16.mxu0 0
          %4619 = vmatmul.mubr.bf16.gmra.mrb[0].mxu0 %v4455
          %v4620 = vpop.f32.mrb[0].mxu0
          %v4621 = vadd.f32 0.0, %v4620
          %v4622 = vpop.f32.mrb[0].mxu0
          %v4623 = vpop.f32.mrb[0].mxu0
          %v4624 = vadd.f32 0.0, %v4623
          %v4625 = vpop.f32.mrb[0].mxu0
          %4626 = vmatprep.mubr.bf16.mxu0 0
          %4627 = vmatmul.mubr.bf16.gmra.mrb[0].mxu0 %v4457
          %v4628 = vpop.f32.mrb[0].mxu0
          %v4629 = vadd.f32 0.0, %v4628
          %v4630 = vpop.f32.mrb[0].mxu0
          %v4631 = vpop.f32.mrb[0].mxu0
          %v4632 = vadd.f32 0.0, %v4631
          %v4633 = vpop.f32.mrb[0].mxu0
          %4634 = vmatprep.mubr.bf16.mxu0 0
          %4635 = vmatmul.mubr.bf16.gmra.mrb[0].mxu0 %v4459
          %v4636 = vpop.f32.mrb[0].mxu0
          %v4637 = vadd.f32 0.0, %v4636
          %v4638 = vpop.f32.mrb[0].mxu0
          %v4639 = vpop.f32.mrb[0].mxu0
          %v4640 = vadd.f32 0.0, %v4639
          %v4641 = vpop.f32.mrb[0].mxu0
          %4642 = vmatprep.mubr.bf16.mxu0 0
          %4643 = vmatmul.mubr.bf16.gmra.mrb[0].mxu0 %v4461
          %v4644 = vpop.f32.mrb[0].mxu0
          %v4645 = vadd.f32 0.0, %v4644
          %v4646 = vpop.f32.mrb[0].mxu0
          %v4647 = vpop.f32.mrb[0].mxu0
          %v4648 = vadd.f32 0.0, %v4647
          %v4649 = vpop.f32.mrb[0].mxu0
          %4650 = vmatprep.mubr.bf16.mxu0 0
          %4651 = vmatmul.mubr.bf16.gmra.mrb[0].mxu0 %v4463
          %v4652 = vpop.f32.mrb[0].mxu0
          %v4653 = vadd.f32 0.0, %v4652
          %v4654 = vpop.f32.mrb[0].mxu0
          %v4655 = vpop.f32.mrb[0].mxu0
          %v4656 = vadd.f32 0.0, %v4655
          %v4657 = vpop.f32.mrb[0].mxu0
          %4658 = vmatprep.mubr.bf16.mxu0 0
          %4659 = vmatmul.mubr.bf16.gmra.mrb[0].mxu0 %v4465
          %v4660 = vpop.f32.mrb[0].mxu0
          %v4661 = vadd.f32 0.0, %v4660
          %v4662 = vpop.f32.mrb[0].mxu0
          %v4663 = vpop.f32.mrb[0].mxu0
          %v4664 = vadd.f32 0.0, %v4663
          %v4665 = vpop.f32.mrb[0].mxu0
          %4666 = vmatprep.mubr.bf16.mxu0 0
          %4667 = vmatmul.mubr.bf16.gmra.mrb[0].mxu0 %v4467
          %v4668 = vpop.f32.mrb[0].mxu0
          %v4669 = vadd.f32 0.0, %v4668
          %v4670 = vpop.f32.mrb[0].mxu0
          %v4671 = vpop.f32.mrb[0].mxu0
          %v4672 = vadd.f32 0.0, %v4671
          %v4673 = vpop.f32.mrb[0].mxu0
          %4674 = vmatprep.mubr.bf16.mxu0 0
          %4675 = vmatmul.mubr.bf16.gmra.mrb[0].mxu0 %v4469
          %v4676 = vpop.f32.mrb[0].mxu0
          %v4677 = vadd.f32 0.0, %v4676
          %v4678 = vpop.f32.mrb[0].mxu0
          %v4679 = vpop.f32.mrb[0].mxu0
          %v4680 = vadd.f32 0.0, %v4679
          %v4681 = vpop.f32.mrb[0].mxu0
          %4682 = vmatprep.mubr.bf16.mxu0 0
          %4683 = vmatmul.mubr.bf16.gmra.mrb[0].mxu0 %v4471
          %v4684 = vpop.f32.mrb[0].mxu0
          %v4685 = vadd.f32 0.0, %v4684
          %v4686 = vpop.f32.mrb[0].mxu0
          %v4687 = vpop.f32.mrb[0].mxu0
          %v4688 = vadd.f32 0.0, %v4687
          %v4689 = vpop.f32.mrb[0].mxu0
          %4690 = vmatprep.mubr.bf16.mxu0 0
          %4691 = vmatmul.mubr.bf16.gmra.mrb[0].mxu0 %v4473
          %v4692 = vpop.f32.mrb[0].mxu0
          %v4693 = vadd.f32 0.0, %v4692
          %v4694 = vpop.f32.mrb[0].mxu0
          %v4695 = vpop.f32.mrb[0].mxu0
          %v4696 = vadd.f32 0.0, %v4695
          %v4697 = vpop.f32.mrb[0].mxu0
          %4698 = vmatprep.mubr.bf16.mxu0 0
          %4699 = vmatmul.mubr.bf16.gmra.mrb[0].mxu0 %v4475
          %v4700 = vpop.f32.mrb[0].mxu0
          %v4701 = vadd.f32 0.0, %v4700
          %v4702 = vpop.f32.mrb[0].mxu0
          %v4703 = vpop.f32.mrb[0].mxu0
          %v4704 = vadd.f32 0.0, %v4703
          %v4705 = vpop.f32.mrb[0].mxu0
          %4706 = vmatprep.mubr.bf16.mxu0 0
          %4707 = vmatmul.mubr.bf16.gmra.mrb[0].mxu0 %v4477
          %v4708 = vpop.f32.mrb[0].mxu0
          %v4709 = vadd.f32 0.0, %v4708
          %v4710 = vpop.f32.mrb[0].mxu0
          %v4711 = vpop.f32.mrb[0].mxu0
          %v4712 = vadd.f32 0.0, %v4711
          %v4713 = vpop.f32.mrb[0].mxu0
          %4714 = vmatprep.mubr.bf16.mxu0 0
          %4715 = vmatmul.mubr.bf16.gmra.mrb[0].mxu0 %v4479
          %v4716 = vpop.f32.mrb[0].mxu0
          %v4717 = vadd.f32 0.0, %v4716
          %v4718 = vpop.f32.mrb[0].mxu0
          %v4719 = vpop.f32.mrb[0].mxu0
          %v4720 = vadd.f32 0.0, %v4719
          %v4721 = vpop.f32.mrb[0].mxu0
          %4722 = vdwg.mxu0
          %v4723 = vadd.f32 %v4385, %v4581
          %v4724 = vadd.f32 %v4386, %v4584
          %v4725 = vadd.f32 %v4387, %v4589
          %v4726 = vadd.f32 %v4388, %v4592
          %v4727 = vadd.f32 %v4389, %v4597
          %v4728 = vadd.f32 %v4390, %v4600
          %v4729 = vadd.f32 %v4391, %v4605
          %v4730 = vadd.f32 %v4392, %v4608
          %v4731 = vadd.f32 %v4393, %v4613
          %v4732 = vadd.f32 %v4394, %v4616
          %v4733 = vadd.f32 %v4395, %v4621
          %v4734 = vadd.f32 %v4396, %v4624
          %v4735 = vadd.f32 %v4397, %v4629
          %v4736 = vadd.f32 %v4398, %v4632
          %v4737 = vadd.f32 %v4399, %v4637
          %v4738 = vadd.f32 %v4400, %v4640
          %v4739 = vadd.f32 %v4401, %v4645
          %v4740 = vadd.f32 %v4402, %v4648
          %v4741 = vadd.f32 %v4403, %v4653
          %v4742 = vadd.f32 %v4404, %v4656
          %v4743 = vadd.f32 %v4405, %v4661
          %v4744 = vadd.f32 %v4406, %v4664
          %v4745 = vadd.f32 %v4407, %v4669
          %v4746 = vadd.f32 %v4408, %v4672
          %v4747 = vadd.f32 %v4409, %v4677
          %v4748 = vadd.f32 %v4410, %v4680
          %v4749 = vadd.f32 %v4411, %v4685
          %v4750 = vadd.f32 %v4412, %v4688
          %v4751 = vadd.f32 %v4413, %v4693
          %v4752 = vadd.f32 %v4414, %v4696
          %v4753 = vadd.f32 %v4415, %v4701
          %v4754 = vadd.f32 %v4416, %v4704
          %v4755 = vadd.f32 %v4417, %v4709
          %v4756 = vadd.f32 %v4418, %v4712
          %v4757 = vadd.f32 %v4419, %v4717
          %v4758 = vadd.f32 %v4420, %v4720
          %v4759 = vld [vmem:[%s3] sm:$0x1]
          %v4761 = vlaneseq
          %v4762 = vshrl.u32 %v4761, 7
          %v4763 = vsub.s32 0, %v4762
          %v4764 = vrot.slane %v4759, %v4763
          %v4766 = vadd.f32 %v4723, %v4764
          %v4767 = vadd.f32 %v4724, %v4764
          %v4768 = vadd.f32 %v4725, %v4764
          %v4769 = vadd.f32 %v4726, %v4764
          %v4770 = vadd.f32 %v4727, %v4764
          %v4771 = vadd.f32 %v4728, %v4764
          %v4772 = vadd.f32 %v4729, %v4764
          %v4773 = vadd.f32 %v4730, %v4764
          %v4774 = vadd.f32 %v4731, %v4764
          %v4775 = vadd.f32 %v4732, %v4764
          %v4776 = vadd.f32 %v4733, %v4764
          %v4777 = vadd.f32 %v4734, %v4764
          %v4778 = vadd.f32 %v4735, %v4764
          %v4779 = vadd.f32 %v4736, %v4764
          %v4780 = vadd.f32 %v4737, %v4764
          %v4781 = vadd.f32 %v4738, %v4764
          %v4782 = vadd.f32 %v4739, %v4764
          %v4783 = vadd.f32 %v4740, %v4764
          %v4784 = vadd.f32 %v4741, %v4764
          %v4785 = vadd.f32 %v4742, %v4764
          %v4786 = vadd.f32 %v4743, %v4764
          %v4787 = vadd.f32 %v4744, %v4764
          %v4788 = vadd.f32 %v4745, %v4764
          %v4789 = vadd.f32 %v4746, %v4764
          %v4790 = vadd.f32 %v4747, %v4764
          %v4791 = vadd.f32 %v4748, %v4764
          %v4792 = vadd.f32 %v4749, %v4764
          %v4793 = vadd.f32 %v4750, %v4764
          %v4794 = vadd.f32 %v4751, %v4764
          %v4795 = vadd.f32 %v4752, %v4764
          %v4796 = vadd.f32 %v4753, %v4764
          %v4797 = vadd.f32 %v4754, %v4764
          %v4798 = vadd.f32 %v4755, %v4764
          %v4799 = vadd.f32 %v4756, %v4764
          %v4800 = vadd.f32 %v4757, %v4764
          %v4801 = vadd.f32 %v4758, %v4764
          %v4802 = vmax.f32 %v4766, 0.0
          %v4803 = vmax.f32 %v4767, 0.0
          %v4804 = vmax.f32 %v4768, 0.0
          %v4805 = vmax.f32 %v4769, 0.0
          %v4806 = vmax.f32 %v4770, 0.0
          %v4807 = vmax.f32 %v4771, 0.0
          %v4808 = vmax.f32 %v4772, 0.0
          %v4809 = vmax.f32 %v4773, 0.0
          %v4810 = vmax.f32 %v4774, 0.0
          %v4811 = vmax.f32 %v4775, 0.0
          %v4812 = vmax.f32 %v4776, 0.0
          %v4813 = vmax.f32 %v4777, 0.0
          %v4814 = vmax.f32 %v4778, 0.0
          %v4815 = vmax.f32 %v4779, 0.0
          %v4816 = vmax.f32 %v4780, 0.0
          %v4817 = vmax.f32 %v4781, 0.0
          %v4818 = vmax.f32 %v4782, 0.0
          %v4819 = vmax.f32 %v4783, 0.0
          %v4820 = vmax.f32 %v4784, 0.0
          %v4821 = vmax.f32 %v4785, 0.0
          %v4822 = vmax.f32 %v4786, 0.0
          %v4823 = vmax.f32 %v4787, 0.0
          %v4824 = vmax.f32 %v4788, 0.0
          %v4825 = vmax.f32 %v4789, 0.0
          %v4826 = vmax.f32 %v4790, 0.0
          %v4827 = vmax.f32 %v4791, 0.0
          %v4828 = vmax.f32 %v4792, 0.0
          %v4829 = vmax.f32 %v4793, 0.0
          %v4830 = vmax.f32 %v4794, 0.0
          %v4831 = vmax.f32 %v4795, 0.0
          %v4832 = vmax.f32 %v4796, 0.0
          %v4833 = vmax.f32 %v4797, 0.0
          %v4834 = vmax.f32 %v4798, 0.0
          %v4835 = vmax.f32 %v4799, 0.0
          %v4836 = vmax.f32 %v4800, 0.0
          %v4837 = vmax.f32 %v4801, 0.0
          %v4838 = vpack.c.bf16 %v4803, %v4802
          %v4839 = vpack.c.bf16 %v4805, %v4804
          %v4840 = vpack.c.bf16 %v4807, %v4806
          %v4841 = vpack.c.bf16 %v4809, %v4808
          %v4842 = vpack.c.bf16 %v4811, %v4810
          %v4843 = vpack.c.bf16 %v4813, %v4812
          %v4844 = vpack.c.bf16 %v4815, %v4814
          %v4845 = vpack.c.bf16 %v4817, %v4816
          %v4846 = vpack.c.bf16 %v4819, %v4818
          %v4847 = vpack.c.bf16 %v4821, %v4820
          %v4848 = vpack.c.bf16 %v4823, %v4822
          %v4849 = vpack.c.bf16 %v4825, %v4824
          %v4850 = vpack.c.bf16 %v4827, %v4826
          %v4851 = vpack.c.bf16 %v4829, %v4828
          %v4852 = vpack.c.bf16 %v4831, %v4830
          %v4853 = vpack.c.bf16 %v4833, %v4832
          %v4854 = vpack.c.bf16 %v4835, %v4834
          %v4855 = vpack.c.bf16 %v4837, %v4836
          %4856 = vst [vmem:[#allocation3] sm:$0xff] %v4838
          %4857 = vst [vmem:[#allocation3 + $0x8] sm:$0xff] %v4839
          %4858 = vst [vmem:[#allocation3 + $0x10] sm:$0xff] %v4840
          %4859 = vst [vmem:[#allocation3 + $0x18] sm:$0xff] %v4841
          %4860 = vst [vmem:[#allocation3 + $0x20] sm:$0xff] %v4842
          %4861 = vst [vmem:[#allocation3 + $0x28] sm:$0xff] %v4843
          %4862 = vst [vmem:[#allocation3 + $0x30] sm:$0xff] %v4844
          %4863 = vst [vmem:[#allocation3 + $0x38] sm:$0xff] %v4845
          %4864 = vst [vmem:[#allocation3 + $0x40] sm:$0xff] %v4846
          %4865 = vst [vmem:[#allocation3 + $0x48] sm:$0xff] %v4847
          %4866 = vst [vmem:[#allocation3 + $0x50] sm:$0xff] %v4848
          %4867 = vst [vmem:[#allocation3 + $0x58] sm:$0xff] %v4849
          %4868 = vst [vmem:[#allocation3 + $0x60] sm:$0xff] %v4850
          %4869 = vst [vmem:[#allocation3 + $0x68] sm:$0xff] %v4851
          %4870 = vst [vmem:[#allocation3 + $0x70] sm:$0xff] %v4852
          %4871 = vst [vmem:[#allocation3 + $0x78] sm:$0xff] %v4853
          %4872 = vst [vmem:[#allocation3 + $0x80] sm:$0xff] %v4854
          %4873 = vst [vmem:[#allocation3 + $0x88] sm:$0xff] %v4855
        $region60: #{tpu_custom_call.1} parent=47 // pred_fallthru
          _
        %v4874 = vld [vmem:[#allocation3] sm:$0xff]
        %v4875 = vld [vmem:[#allocation3 + $0x8] sm:$0xff]
        %v4876 = vld [vmem:[#allocation3 + $0x10] sm:$0xff]
        %v4877 = vld [vmem:[#allocation3 + $0x18] sm:$0xff]
        %v4878 = vld [vmem:[#allocation3 + $0x20] sm:$0xff]
        %v4879 = vld [vmem:[#allocation3 + $0x28] sm:$0xff]
        %v4880 = vld [vmem:[#allocation3 + $0x30] sm:$0xff]
        %v4881 = vld [vmem:[#allocation3 + $0x38] sm:$0xff]
        %v4882 = vld [vmem:[#allocation3 + $0x40] sm:$0xff]
        %v4883 = vld [vmem:[#allocation3 + $0x48] sm:$0xff]
        %v4884 = vld [vmem:[#allocation3 + $0x50] sm:$0xff]
        %v4885 = vld [vmem:[#allocation3 + $0x58] sm:$0xff]
        %v4886 = vld [vmem:[#allocation3 + $0x60] sm:$0xff]
        %v4887 = vld [vmem:[#allocation3 + $0x68] sm:$0xff]
        %v4888 = vld [vmem:[#allocation3 + $0x70] sm:$0xff]
        %v4889 = vld [vmem:[#allocation3 + $0x78] sm:$0xff]
        %v4890 = vld [vmem:[#allocation3 + $0x80] sm:$0xff]
        %v4891 = vld [vmem:[#allocation3 + $0x88] sm:$0xff]
        %v4892 = vld [vmem:[#allocation4] sm:$0xf]
        %v4893 = vld [vmem:[#allocation4 + $0x4] sm:$0xf]
        %v4894 = vld [vmem:[#allocation4 + $0x8] sm:$0xf]
        %v4895 = vld [vmem:[#allocation4 + $0xc] sm:$0xf]
        %v4896 = vld [vmem:[#allocation4 + $0x10] sm:$0xf]
        %v4897 = vld [vmem:[#allocation4 + $0x14] sm:$0xf]
        %v4898 = vld [vmem:[#allocation4 + $0x18] sm:$0xf]
        %v4899 = vld [vmem:[#allocation4 + $0x1c] sm:$0xf]
        %v4900 = vld [vmem:[#allocation4 + $0x20] sm:$0xf]
        %v4901 = vld [vmem:[#allocation4 + $0x24] sm:$0xf]
        %v4902 = vld [vmem:[#allocation4 + $0x28] sm:$0xf]
        %v4903 = vld [vmem:[#allocation4 + $0x2c] sm:$0xf]
        %v4904 = vld [vmem:[#allocation4 + $0x30] sm:$0xf]
        %v4905 = vld [vmem:[#allocation4 + $0x34] sm:$0xf]
        %v4906 = vld [vmem:[#allocation4 + $0x38] sm:$0xf]
        %v4907 = vld [vmem:[#allocation4 + $0x3c] sm:$0xf]
        %v4908 = vld [vmem:[%s369] sm:$0x1]
        %v4910 = vlaneseq
        %v4911 = vshrl.u32 %v4910, 7
        %v4912 = vsub.s32 0, %v4911
        %v4913 = vrot.slane %v4908, %v4912
        %v4931 = vunpack.c.l.b16 %v4892
        %v4932 = vunpack.c.l.b16 %v4893
        %v4933 = vunpack.c.l.b16 %v4894
        %v4934 = vunpack.c.l.b16 %v4895
        %v4935 = vunpack.c.l.b16 %v4896
        %v4936 = vunpack.c.l.b16 %v4897
        %v4937 = vunpack.c.l.b16 %v4898
        %v4938 = vunpack.c.l.b16 %v4899
        %v4939 = vunpack.c.l.b16 %v4900
        %v4940 = vunpack.c.l.b16 %v4901
        %v4941 = vunpack.c.l.b16 %v4902
        %v4942 = vunpack.c.l.b16 %v4903
        %v4943 = vunpack.c.l.b16 %v4904
        %v4944 = vunpack.c.l.b16 %v4905
        %v4945 = vunpack.c.l.b16 %v4906
        %v4946 = vunpack.c.l.b16 %v4907
        %v4947 = vpack.c.b16 %v4932, %v4931
        %v4948 = vpack.c.b16 %v4934, %v4933
        %v4949 = vpack.c.b16 %v4936, %v4935
        %v4950 = vpack.c.b16 %v4938, %v4937
        %v4951 = vpack.c.b16 %v4940, %v4939
        %v4952 = vpack.c.b16 %v4942, %v4941
        %v4953 = vpack.c.b16 %v4944, %v4943
        %v4954 = vpack.c.b16 %v4946, %v4945
        %4963 = vmatprep.subr.bf16.mxu0 0
        %4964 = vmatpush1.bf16.msra.mxu0 %v4947
        %4965 = vmatprep.subr.bf16.mxu0 0
        %4966 = vmatpush1.bf16.msra.mxu0 %v4948
        %4967 = vmatprep.subr.bf16.mxu0 0
        %4968 = vmatpush1.bf16.msra.mxu0 %v4949
        %4969 = vmatprep.subr.bf16.mxu0 0
        %4970 = vmatpush1.bf16.msra.mxu0 %v4950
        %4971 = vmatprep.subr.bf16.mxu0 0
        %4972 = vmatpush1.bf16.msra.mxu0 %v4951
        %4973 = vmatprep.subr.bf16.mxu0 0
        %4974 = vmatpush1.bf16.msra.mxu0 %v4952
        %4975 = vmatprep.subr.bf16.mxu0 0
        %4976 = vmatpush1.bf16.msra.mxu0 %v4953
        %4977 = vmatprep.subr.bf16.mxu0 0
        %4978 = vmatpush1.bf16.msra.mxu0 %v4954
        %4979 = vmatprep.subr.bf16.mxu0 0
        %4980 = vmatpush1.bf16.msra.mxu0 0
        %4981 = vmatprep.subr.bf16.mxu0 0
        %4982 = vmatpush1.bf16.msra.mxu0 0
        %4983 = vmatprep.subr.bf16.mxu0 0
        %4984 = vmatpush1.bf16.msra.mxu0 0
        %4985 = vmatprep.subr.bf16.mxu0 0
        %4986 = vmatpush1.bf16.msra.mxu0 0
        %4987 = vmatprep.subr.bf16.mxu0 0
        %4988 = vmatpush1.bf16.msra.mxu0 0
        %4989 = vmatprep.subr.bf16.mxu0 0
        %4990 = vmatpush1.bf16.msra.mxu0 0
        %4991 = vmatprep.subr.bf16.mxu0 0
        %4992 = vmatpush1.bf16.msra.mxu0 0
        %4993 = vmatprep.subr.bf16.mxu0 0
        %4994 = vmatpush1.bf16.msra.mxu0 0
        %4995 = vmatprep.mubr.bf16.mxu0 0
        %4996 = vmatmul.mubr.bf16.gmra.mrb[0].mxu0 %v4874
        %v4997 = vpop.f32.mrb[0].mxu0
        %v4998 = vadd.f32 %v4913, %v4997
        %v4999 = vpop.f32.mrb[0].mxu0
        %v5000 = vpop.f32.mrb[0].mxu0
        %v5001 = vadd.f32 %v4913, %v5000
        %v5002 = vpop.f32.mrb[0].mxu0
        %5003 = vmatprep.mubr.bf16.mxu0 0
        %5004 = vmatmul.mubr.bf16.gmra.mrb[0].mxu0 %v4875
        %v5005 = vpop.f32.mrb[0].mxu0
        %v5006 = vadd.f32 %v4913, %v5005
        %v5007 = vpop.f32.mrb[0].mxu0
        %v5008 = vpop.f32.mrb[0].mxu0
        %v5009 = vadd.f32 %v4913, %v5008
        %v5010 = vpop.f32.mrb[0].mxu0
        %5011 = vmatprep.mubr.bf16.mxu0 0
        %5012 = vmatmul.mubr.bf16.gmra.mrb[0].mxu0 %v4876
        %v5013 = vpop.f32.mrb[0].mxu0
        %v5014 = vadd.f32 %v4913, %v5013
        %v5015 = vpop.f32.mrb[0].mxu0
        %v5016 = vpop.f32.mrb[0].mxu0
        %v5017 = vadd.f32 %v4913, %v5016
        %v5018 = vpop.f32.mrb[0].mxu0
        %5019 = vmatprep.mubr.bf16.mxu0 0
        %5020 = vmatmul.mubr.bf16.gmra.mrb[0].mxu0 %v4877
        %v5021 = vpop.f32.mrb[0].mxu0
        %v5022 = vadd.f32 %v4913, %v5021
        %v5023 = vpop.f32.mrb[0].mxu0
        %v5024 = vpop.f32.mrb[0].mxu0
        %v5025 = vadd.f32 %v4913, %v5024
        %v5026 = vpop.f32.mrb[0].mxu0
        %5027 = vmatprep.mubr.bf16.mxu0 0
        %5028 = vmatmul.mubr.bf16.gmra.mrb[0].mxu0 %v4878
        %v5029 = vpop.f32.mrb[0].mxu0
        %v5030 = vadd.f32 %v4913, %v5029
        %v5031 = vpop.f32.mrb[0].mxu0
        %v5032 = vpop.f32.mrb[0].mxu0
        %v5033 = vadd.f32 %v4913, %v5032
        %v5034 = vpop.f32.mrb[0].mxu0
        %5035 = vmatprep.mubr.bf16.mxu0 0
        %5036 = vmatmul.mubr.bf16.gmra.mrb[0].mxu0 %v4879
        %v5037 = vpop.f32.mrb[0].mxu0
        %v5038 = vadd.f32 %v4913, %v5037
        %v5039 = vpop.f32.mrb[0].mxu0
        %v5040 = vpop.f32.mrb[0].mxu0
        %v5041 = vadd.f32 %v4913, %v5040
        %v5042 = vpop.f32.mrb[0].mxu0
        %5043 = vmatprep.mubr.bf16.mxu0 0
        %5044 = vmatmul.mubr.bf16.gmra.mrb[0].mxu0 %v4880
        %v5045 = vpop.f32.mrb[0].mxu0
        %v5046 = vadd.f32 %v4913, %v5045
        %v5047 = vpop.f32.mrb[0].mxu0
        %v5048 = vpop.f32.mrb[0].mxu0
        %v5049 = vadd.f32 %v4913, %v5048
        %v5050 = vpop.f32.mrb[0].mxu0
        %5051 = vmatprep.mubr.bf16.mxu0 0
        %5052 = vmatmul.mubr.bf16.gmra.mrb[0].mxu0 %v4881
        %v5053 = vpop.f32.mrb[0].mxu0
        %v5054 = vadd.f32 %v4913, %v5053
        %v5055 = vpop.f32.mrb[0].mxu0
        %v5056 = vpop.f32.mrb[0].mxu0
        %v5057 = vadd.f32 %v4913, %v5056
        %v5058 = vpop.f32.mrb[0].mxu0
        %5059 = vmatprep.mubr.bf16.mxu0 0
        %5060 = vmatmul.mubr.bf16.gmra.mrb[0].mxu0 %v4882
        %v5061 = vpop.f32.mrb[0].mxu0
        %v5062 = vadd.f32 %v4913, %v5061
        %v5063 = vpop.f32.mrb[0].mxu0
        %v5064 = vpop.f32.mrb[0].mxu0
        %v5065 = vadd.f32 %v4913, %v5064
        %v5066 = vpop.f32.mrb[0].mxu0
        %5067 = vmatprep.mubr.bf16.mxu0 0
        %5068 = vmatmul.mubr.bf16.gmra.mrb[0].mxu0 %v4883
        %v5069 = vpop.f32.mrb[0].mxu0
        %v5070 = vadd.f32 %v4913, %v5069
        %v5071 = vpop.f32.mrb[0].mxu0
        %v5072 = vpop.f32.mrb[0].mxu0
        %v5073 = vadd.f32 %v4913, %v5072
        %v5074 = vpop.f32.mrb[0].mxu0
        %5075 = vmatprep.mubr.bf16.mxu0 0
        %5076 = vmatmul.mubr.bf16.gmra.mrb[0].mxu0 %v4884
        %v5077 = vpop.f32.mrb[0].mxu0
        %v5078 = vadd.f32 %v4913, %v5077
        %v5079 = vpop.f32.mrb[0].mxu0
        %v5080 = vpop.f32.mrb[0].mxu0
        %v5081 = vadd.f32 %v4913, %v5080
        %v5082 = vpop.f32.mrb[0].mxu0
        %5083 = vmatprep.mubr.bf16.mxu0 0
        %5084 = vmatmul.mubr.bf16.gmra.mrb[0].mxu0 %v4885
        %v5085 = vpop.f32.mrb[0].mxu0
        %v5086 = vadd.f32 %v4913, %v5085
        %v5087 = vpop.f32.mrb[0].mxu0
        %v5088 = vpop.f32.mrb[0].mxu0
        %v5089 = vadd.f32 %v4913, %v5088
        %v5090 = vpop.f32.mrb[0].mxu0
        %5091 = vmatprep.mubr.bf16.mxu0 0
        %5092 = vmatmul.mubr.bf16.gmra.mrb[0].mxu0 %v4886
        %v5093 = vpop.f32.mrb[0].mxu0
        %v5094 = vadd.f32 %v4913, %v5093
        %v5095 = vpop.f32.mrb[0].mxu0
        %v5096 = vpop.f32.mrb[0].mxu0
        %v5097 = vadd.f32 %v4913, %v5096
        %v5098 = vpop.f32.mrb[0].mxu0
        %5099 = vmatprep.mubr.bf16.mxu0 0
        %5100 = vmatmul.mubr.bf16.gmra.mrb[0].mxu0 %v4887
        %v5101 = vpop.f32.mrb[0].mxu0
        %v5102 = vadd.f32 %v4913, %v5101
        %v5103 = vpop.f32.mrb[0].mxu0
        %v5104 = vpop.f32.mrb[0].mxu0
        %v5105 = vadd.f32 %v4913, %v5104
        %v5106 = vpop.f32.mrb[0].mxu0
        %5107 = vmatprep.mubr.bf16.mxu0 0
        %5108 = vmatmul.mubr.bf16.gmra.mrb[0].mxu0 %v4888
        %v5109 = vpop.f32.mrb[0].mxu0
        %v5110 = vadd.f32 %v4913, %v5109
        %v5111 = vpop.f32.mrb[0].mxu0
        %v5112 = vpop.f32.mrb[0].mxu0
        %v5113 = vadd.f32 %v4913, %v5112
        %v5114 = vpop.f32.mrb[0].mxu0
        %5115 = vmatprep.mubr.bf16.mxu0 0
        %5116 = vmatmul.mubr.bf16.gmra.mrb[0].mxu0 %v4889
        %v5117 = vpop.f32.mrb[0].mxu0
        %v5118 = vadd.f32 %v4913, %v5117
        %v5119 = vpop.f32.mrb[0].mxu0
        %v5120 = vpop.f32.mrb[0].mxu0
        %v5121 = vadd.f32 %v4913, %v5120
        %v5122 = vpop.f32.mrb[0].mxu0
        %5123 = vmatprep.mubr.bf16.mxu0 0
        %5124 = vmatmul.mubr.bf16.gmra.mrb[0].mxu0 %v4890
        %v5125 = vpop.f32.mrb[0].mxu0
        %v5126 = vadd.f32 %v4913, %v5125
        %v5127 = vpop.f32.mrb[0].mxu0
        %v5128 = vpop.f32.mrb[0].mxu0
        %v5129 = vadd.f32 %v4913, %v5128
        %v5130 = vpop.f32.mrb[0].mxu0
        %5131 = vmatprep.mubr.bf16.mxu0 0
        %5132 = vmatmul.mubr.bf16.gmra.mrb[0].mxu0 %v4891
        %v5133 = vpop.f32.mrb[0].mxu0
        %v5134 = vadd.f32 %v4913, %v5133
        %v5135 = vpop.f32.mrb[0].mxu0
        %v5136 = vpop.f32.mrb[0].mxu0
        %v5137 = vadd.f32 %v4913, %v5136
        %v5138 = vpop.f32.mrb[0].mxu0
        %5139 = vdwg.mxu0
        %v5140 = vld [vmem:[%s323] sm:$0xff]
        %v5141 = vld [vmem:[%s323 + $0x8] sm:$0xff]
        %v5142 = vld [vmem:[%s323 + $0x10] sm:$0xff]
        %v5143 = vld [vmem:[%s323 + $0x18] sm:$0xff]
        %v5144 = vld [vmem:[%s323 + $0x20] sm:$0xff]
        %v5145 = vld [vmem:[%s323 + $0x28] sm:$0xff]
        %v5146 = vld [vmem:[%s323 + $0x30] sm:$0xff]
        %v5147 = vld [vmem:[%s323 + $0x38] sm:$0xff]
        %v5148 = vld [vmem:[%s323 + $0x40] sm:$0xff]
        %v5149 = vld [vmem:[%s323 + $0x48] sm:$0xff]
        %v5150 = vld [vmem:[%s323 + $0x50] sm:$0xff]
        %v5151 = vld [vmem:[%s323 + $0x58] sm:$0xff]
        %v5152 = vld [vmem:[%s323 + $0x60] sm:$0xff]
        %v5153 = vld [vmem:[%s323 + $0x68] sm:$0xff]
        %v5154 = vld [vmem:[%s323 + $0x70] sm:$0xff]
        %v5155 = vld [vmem:[%s323 + $0x78] sm:$0xff]
        %v5156 = vld [vmem:[%s323 + $0x80] sm:$0xff]
        %v5157 = vld [vmem:[%s323 + $0x88] sm:$0xff]
        %v5158 = vld [vmem:[%s323 + $0x90] sm:$0xff]
        %v5159 = vld [vmem:[%s323 + $0x98] sm:$0xff]
        %v5160 = vld [vmem:[%s323 + $0xa0] sm:$0xff]
        %v5161 = vld [vmem:[%s323 + $0xa8] sm:$0xff]
        %v5162 = vld [vmem:[%s323 + $0xb0] sm:$0xff]
        %v5163 = vld [vmem:[%s323 + $0xb8] sm:$0xff]
        %v5164 = vld [vmem:[%s323 + $0xc0] sm:$0xff]
        %v5165 = vld [vmem:[%s323 + $0xc8] sm:$0xff]
        %v5166 = vld [vmem:[%s323 + $0xd0] sm:$0xff]
        %v5167 = vld [vmem:[%s323 + $0xd8] sm:$0xff]
        %v5168 = vld [vmem:[%s323 + $0xe0] sm:$0xff]
        %v5169 = vld [vmem:[%s323 + $0xe8] sm:$0xff]
        %v5170 = vld [vmem:[%s323 + $0xf0] sm:$0xff]
        %v5171 = vld [vmem:[%s323 + $0xf8] sm:$0xff]
        %v5172 = vld [vmem:[%s323 + $0x100] sm:$0xff]
        %v5173 = vld [vmem:[%s323 + $0x108] sm:$0xff]
        %v5174 = vld [vmem:[%s323 + $0x110] sm:$0xff]
        %v5175 = vld [vmem:[%s323 + $0x118] sm:$0xff]
        %v5176 = vadd.f32 %v4998, %v5140
        %v5177 = vadd.f32 %v5001, %v5141
        %v5178 = vadd.f32 %v5006, %v5142
        %v5179 = vadd.f32 %v5009, %v5143
        %v5180 = vadd.f32 %v5014, %v5144
        %v5181 = vadd.f32 %v5017, %v5145
        %v5182 = vadd.f32 %v5022, %v5146
        %v5183 = vadd.f32 %v5025, %v5147
        %v5184 = vadd.f32 %v5030, %v5148
        %v5185 = vadd.f32 %v5033, %v5149
        %v5186 = vadd.f32 %v5038, %v5150
        %v5187 = vadd.f32 %v5041, %v5151
        %v5188 = vadd.f32 %v5046, %v5152
        %v5189 = vadd.f32 %v5049, %v5153
        %v5190 = vadd.f32 %v5054, %v5154
        %v5191 = vadd.f32 %v5057, %v5155
        %v5192 = vadd.f32 %v5062, %v5156
        %v5193 = vadd.f32 %v5065, %v5157
        %v5194 = vadd.f32 %v5070, %v5158
        %v5195 = vadd.f32 %v5073, %v5159
        %v5196 = vadd.f32 %v5078, %v5160
        %v5197 = vadd.f32 %v5081, %v5161
        %v5198 = vadd.f32 %v5086, %v5162
        %v5199 = vadd.f32 %v5089, %v5163
        %v5200 = vadd.f32 %v5094, %v5164
        %v5201 = vadd.f32 %v5097, %v5165
        %v5202 = vadd.f32 %v5102, %v5166
        %v5203 = vadd.f32 %v5105, %v5167
        %v5204 = vadd.f32 %v5110, %v5168
        %v5205 = vadd.f32 %v5113, %v5169
        %v5206 = vadd.f32 %v5118, %v5170
        %v5207 = vadd.f32 %v5121, %v5171
        %v5208 = vadd.f32 %v5126, %v5172
        %v5209 = vadd.f32 %v5129, %v5173
        %v5210 = vadd.f32 %v5134, %v5174
        %v5211 = vadd.f32 %v5137, %v5175
        %v5212 = vmax.f32 %v5176, 0.0
        %v5213 = vmax.f32 %v5177, 0.0
        %v5214 = vmax.f32 %v5178, 0.0
        %v5215 = vmax.f32 %v5179, 0.0
        %v5216 = vmax.f32 %v5180, 0.0
        %v5217 = vmax.f32 %v5181, 0.0
        %v5218 = vmax.f32 %v5182, 0.0
        %v5219 = vmax.f32 %v5183, 0.0
        %v5220 = vmax.f32 %v5184, 0.0
        %v5221 = vmax.f32 %v5185, 0.0
        %v5222 = vmax.f32 %v5186, 0.0
        %v5223 = vmax.f32 %v5187, 0.0
        %v5224 = vmax.f32 %v5188, 0.0
        %v5225 = vmax.f32 %v5189, 0.0
        %v5226 = vmax.f32 %v5190, 0.0
        %v5227 = vmax.f32 %v5191, 0.0
        %v5228 = vmax.f32 %v5192, 0.0
        %v5229 = vmax.f32 %v5193, 0.0
        %v5230 = vmax.f32 %v5194, 0.0
        %v5231 = vmax.f32 %v5195, 0.0
        %v5232 = vmax.f32 %v5196, 0.0
        %v5233 = vmax.f32 %v5197, 0.0
        %v5234 = vmax.f32 %v5198, 0.0
        %v5235 = vmax.f32 %v5199, 0.0
        %v5236 = vmax.f32 %v5200, 0.0
        %v5237 = vmax.f32 %v5201, 0.0
        %v5238 = vmax.f32 %v5202, 0.0
        %v5239 = vmax.f32 %v5203, 0.0
        %v5240 = vmax.f32 %v5204, 0.0
        %v5241 = vmax.f32 %v5205, 0.0
        %v5242 = vmax.f32 %v5206, 0.0
        %v5243 = vmax.f32 %v5207, 0.0
        %v5244 = vmax.f32 %v5208, 0.0
        %v5245 = vmax.f32 %v5209, 0.0
        %v5246 = vmax.f32 %v5210, 0.0
        %v5247 = vmax.f32 %v5211, 0.0
        %5248 = vst [vmem:[%s361] sm:$0xff] %v5212
        %5249 = vst [vmem:[%s361 + $0x8] sm:$0xff] %v5213
        %5250 = vst [vmem:[%s361 + $0x10] sm:$0xff] %v5214
        %5251 = vst [vmem:[%s361 + $0x18] sm:$0xff] %v5215
        %5252 = vst [vmem:[%s361 + $0x20] sm:$0xff] %v5216
        %5253 = vst [vmem:[%s361 + $0x28] sm:$0xff] %v5217
        %5254 = vst [vmem:[%s361 + $0x30] sm:$0xff] %v5218
        %5255 = vst [vmem:[%s361 + $0x38] sm:$0xff] %v5219
        %5256 = vst [vmem:[%s361 + $0x40] sm:$0xff] %v5220
        %5257 = vst [vmem:[%s361 + $0x48] sm:$0xff] %v5221
        %5258 = vst [vmem:[%s361 + $0x50] sm:$0xff] %v5222
        %5259 = vst [vmem:[%s361 + $0x58] sm:$0xff] %v5223
        %5260 = vst [vmem:[%s361 + $0x60] sm:$0xff] %v5224
        %5261 = vst [vmem:[%s361 + $0x68] sm:$0xff] %v5225
        %5262 = vst [vmem:[%s361 + $0x70] sm:$0xff] %v5226
        %5263 = vst [vmem:[%s361 + $0x78] sm:$0xff] %v5227
        %5264 = vst [vmem:[%s361 + $0x80] sm:$0xff] %v5228
        %5265 = vst [vmem:[%s361 + $0x88] sm:$0xff] %v5229
        %5266 = vst [vmem:[%s361 + $0x90] sm:$0xff] %v5230
        %5267 = vst [vmem:[%s361 + $0x98] sm:$0xff] %v5231
        %5268 = vst [vmem:[%s361 + $0xa0] sm:$0xff] %v5232
        %5269 = vst [vmem:[%s361 + $0xa8] sm:$0xff] %v5233
        %5270 = vst [vmem:[%s361 + $0xb0] sm:$0xff] %v5234
        %5271 = vst [vmem:[%s361 + $0xb8] sm:$0xff] %v5235
        %5272 = vst [vmem:[%s361 + $0xc0] sm:$0xff] %v5236
        %5273 = vst [vmem:[%s361 + $0xc8] sm:$0xff] %v5237
        %5274 = vst [vmem:[%s361 + $0xd0] sm:$0xff] %v5238
        %5275 = vst [vmem:[%s361 + $0xd8] sm:$0xff] %v5239
        %5276 = vst [vmem:[%s361 + $0xe0] sm:$0xff] %v5240
        %5277 = vst [vmem:[%s361 + $0xe8] sm:$0xff] %v5241
        %5278 = vst [vmem:[%s361 + $0xf0] sm:$0xff] %v5242
        %5279 = vst [vmem:[%s361 + $0xf8] sm:$0xff] %v5243
        %5280 = vst [vmem:[%s361 + $0x100] sm:$0xff] %v5244
        %5281 = vst [vmem:[%s361 + $0x108] sm:$0xff] %v5245
        %5282 = vst [vmem:[%s361 + $0x110] sm:$0xff] %v5246
        %5283 = vst [vmem:[%s361 + $0x118] sm:$0xff] %v5247
        %s5284 = sand.u32 %s216, 1
        %s5285 = scalar_lea.sflag [#allocation6], %s5284
        %s5286 = sand.u32 %s216, 1
        %s5287 = smul.addr %s5286, 288
        %s5288 = scalar_lea.vmem [#allocation9], %s5287
        // Predicated region
        $region61: #{tpu_custom_call.1} parent=47 // pred_check
          %p5289 = pneg %p226
        $region62: #{tpu_custom_call.1} parent=47 // pred_check_branch
          %5291 = sbr.rel (%p5289) target = $region64
        $region63: #{tpu_custom_call.1} parent=47 // pred_region
          %s5293 = ssub.s32 4608, 4608
          %5294 = vsyncadd %s5285, %s5293
          %s5295 = smul.addr %s29, 36
          %s5296 = sadd.s32 %s30, %s5295
          %s5297 = smul.addr %s5296, 128
          %s5298 = scalar_lea.hbm %s7, %s5297
          %s5299 = sshll.u32 %s5288, 4
          %s5300 = int_to_ptr.vmem [resolvable:$true] %s5299
          %5305 = dma.vmem_to_hbm [thread:$0]  %s5300, 4608, %s5298, %s5285, 128, 128, 8
        $region64: #{tpu_custom_call.1} parent=47 // pred_fallthru
          _
      $region48: #{tpu_custom_call.1} parent=5 // pred_fallthru
        _
      %p5306 = scmp.le.s32.totalorder 2, %s20
      // Predicated region
      $region65: #{tpu_custom_call.1} parent=5 // pred_check
        %p5307 = pneg %p5306
      $region66: #{tpu_custom_call.1} parent=5 // pred_check_branch
        %5309 = sbr.rel (%p5307) target = $region68
      $region67: #{tpu_custom_call.1} parent=5 // pred_region
        %s5310 = ssub.s32 %s20, 2
        // Predicated region
        $region69: #{tpu_custom_call.1} parent=67 // pred_check
          %p5311 = pneg %p232
        $region70: #{tpu_custom_call.1} parent=67 // pred_check_branch
          %5313 = sbr.rel (%p5311) target = $region72
        $region71: #{tpu_custom_call.1} parent=67 // pred_region
          %s5314 = sand.u32 %s217, 1
          %s5315 = scalar_lea.sflag [#allocation6], %s5314
          %s5316 = sand.u32 %s217, 1
          %s5317 = smul.addr %s5316, 288
          %s5318 = scalar_lea.vmem [#allocation9], %s5317
          %5319 = dma.done %s5315, 4608
        $region72: #{tpu_custom_call.1} parent=67 // pred_fallthru
          _
      $region68: #{tpu_custom_call.1} parent=5 // pred_fallthru
        _
    $region6: #{tpu_custom_call.1} parent=1 // loop_footer
      %s24 = sadd.s32 1, %s20
    $region7: #{tpu_custom_call.1} parent=1 // loop_footer_branch
      %19 = sbr.rel target = $region3
    $region8: #{tpu_custom_call.1} parent=1 // loop_exit
      _
    %5320 = vsyncpa [#allocation5], 1
    %s5321 = scalar_lea.sflag [#allocation5], 1
    %5322 = vsyncpa %s5321, 1
    %5323 = vsyncpa [#allocation8], 1
    %s5324 = scalar_lea.sflag [#allocation8], 1
    %5325 = vsyncpa %s5324, 1
    %5326 = vsyncpa [#allocation6], 1
    %s5327 = scalar_lea.sflag [#allocation6], 1
    %5328 = vsyncpa %s5327, 1

</llo_original>
